<compile_context>
chip_gen: v5e
topology: v5e:2x2
jax: 0.10.0
libtpu: 0.0.40
codegen_flags: <defaults>
</compile_context>

<pallas_src>
import functools

import jax
import jax.numpy as jnp
from jax.experimental import pallas as pl
from jax.experimental.pallas import tpu as pltpu

LANE = 128
BN_EPS = 1e-5


def _round_up(x, m):
    return ((x + m - 1) // m) * m


def _conv_step_bytes(b, L, cin_p, cout_p, ksize=8):
    """Rough per-grid-step VMEM footprint of one fused conv step."""
    act = b * L * (cin_p + 2 * cout_p) * 2 * 2    # bf16 in + out(+res), double-buffered
    acc = b * L * cout_p * 4                      # f32 accumulator scratch
    wgt = (ksize + 1) * cin_p * cout_p * 2 * 2    # conv + 1x1 weights, double-buffered
    return act + acc + wgt


def _pick_batch_tile(n, L, cin_p, cout_p):
    """Samples per grid step: big enough that the MXU M dim (b*L) reaches ~256
    rows when L is short, small enough to stay inside a conservative per-step
    VMEM budget (v7x only has 64 MiB physical VMEM), and leaving >= 2 grid
    steps when possible so both v7x TensorCores get work."""
    budget = 12 << 20
    target_rows = 256
    divisors = [b for b in range(1, n + 1)
                if n % b == 0 and _conv_step_bytes(b, L, cin_p, cout_p) <= budget]
    if not divisors:
        return 1  # TODO(synk): add an L-tiling grid axis (with K-1 halo) for huge L*C
    reaching = [b for b in divisors if b * L >= target_rows]
    best = min(reaching) if reaching else max(divisors)
    if n // best == 1 and n > 1:               # keep both v7x TensorCores busy
        best = max([b for b in divisors if b < best] or [1])
    return best


def _vmem_limit_bytes(b, L, cin_p, cout_p):
    est = _conv_step_bytes(b, L, cin_p, cout_p) + (4 << 20)
    return int(min(48 << 20, max(32 << 20, 2 * est)))


def _pick_row_tile(rows):
    # Largest lane-dense row tile that divides the row count (bigger tiles get
    # closer to the HBM roofline for the purely memory-bound epilogue).
    for t in (2048, 1024, 512, 256, 128, 64, 32, 16, 8):
        if rows % t == 0:
            return t
    return rows  # full-extent block is always legal


# ----------------------------- Pallas kernels ------------------------------


def _conv_same_into(acc_ref, b, xb, w_ref, pad_left):
    """Conv1d('same') for sample `b`.

    K full (L, Cin) @ (Cin, Cout) bf16 MXU matmuls with f32 accumulation; the
    'same' zero padding is realized on the *result* side by accumulating each
    matmul into the shifted row range of the f32 accumulator ref (no host-side
    jnp.pad, no unaligned bf16 slicing -- all shifted slices are f32).
    """
    L = xb.shape[0]
    ksize = w_ref.shape[0]
    # Center tap first: its full-range plain store doubles as the acc init.
    acc_ref[b] = jnp.dot(xb, w_ref[pad_left], preferred_element_type=jnp.float32)
    for j in range(ksize):
        if j == pad_left:
            continue
        s = j - pad_left                       # y[l] += x[l + s] @ w[j]
        lo_dst, hi_dst = max(0, -s), L - max(0, s)
        lo_src, hi_src = max(0, s), L - max(0, -s)
        if hi_dst <= lo_dst:
            continue
        r = jnp.dot(xb, w_ref[j], preferred_element_type=jnp.float32)
        acc_ref[b, lo_dst:hi_dst, :] += r[lo_src:hi_src, :]
    return acc_ref[b]


def _conv_bnin_kernel(x_ref, sc_ref, sh_ref, w_ref,
                      y_ref, ssum_ref, ssq_ref, acc_ref, *, pad_left):
    """ConvBlocks 2/3: previous layer's BatchNorm+ReLU fused onto the load
    path, Conv1d('same'), raw bf16 output + per-step BN statistics (f32)."""
    bt = x_ref.shape[0]
    cout = y_ref.shape[-1]
    sc = sc_ref[...]
    sh = sh_ref[...]
    tsum = jnp.zeros((1, cout), jnp.float32)
    tsq = jnp.zeros((1, cout), jnp.float32)
    for b in range(bt):
        z = jnp.maximum(x_ref[b].astype(jnp.float32) * sc + sh, 0.0)
        # bf16 cast hoisted: cast once per sample, reused by all K matmuls.
        acc = _conv_same_into(acc_ref, b, z.astype(jnp.bfloat16), w_ref, pad_left)
        y_ref[b] = acc.astype(y_ref.dtype)
        tsum = tsum + jnp.sum(acc, axis=0, keepdims=True)
        tsq = tsq + jnp.sum(acc * acc, axis=0, keepdims=True)
    ssum_ref[0] = tsum
    ssq_ref[0] = tsq


def _conv_first_kernel(x_ref, w_ref, y_ref, ssum_ref, ssq_ref, acc_ref, *, pad_left):
    """ConvBlock 1 (no residual): raw bf16 input, no input affine/ReLU."""
    bt = x_ref.shape[0]
    cout = y_ref.shape[-1]
    tsum = jnp.zeros((1, cout), jnp.float32)
    tsq = jnp.zeros((1, cout), jnp.float32)
    for b in range(bt):
        acc = _conv_same_into(acc_ref, b, x_ref[b], w_ref, pad_left)
        y_ref[b] = acc.astype(y_ref.dtype)
        tsum = tsum + jnp.sum(acc, axis=0, keepdims=True)
        tsq = tsq + jnp.sum(acc * acc, axis=0, keepdims=True)
    ssum_ref[0] = tsum
    ssq_ref[0] = tsq


def _conv_first_res_kernel(x_ref, w_ref, wr_ref,
                           y_ref, ssum_ref, ssq_ref,
                           yr_ref, rsum_ref, rsq_ref, acc_ref, *, pad_left):
    """ConvBlock 1 fused with the residual 1x1 conv: the input activations are
    read from HBM exactly once and feed both branches (+ both BN statistics)."""
    bt = x_ref.shape[0]
    cout = y_ref.shape[-1]
    wr = wr_ref[...]
    tsum = jnp.zeros((1, cout), jnp.float32)
    tsq = jnp.zeros((1, cout), jnp.float32)
    rsum = jnp.zeros((1, cout), jnp.float32)
    rsq = jnp.zeros((1, cout), jnp.float32)
    for b in range(bt):
        xb = x_ref[b]
        acc = _conv_same_into(acc_ref, b, xb, w_ref, pad_left)
        y_ref[b] = acc.astype(y_ref.dtype)
        tsum = tsum + jnp.sum(acc, axis=0, keepdims=True)
        tsq = tsq + jnp.sum(acc * acc, axis=0, keepdims=True)
        racc = jnp.dot(xb, wr, preferred_element_type=jnp.float32)  # 1x1 conv
        yr_ref[b] = racc.astype(yr_ref.dtype)
        rsum = rsum + jnp.sum(racc, axis=0, keepdims=True)
        rsq = rsq + jnp.sum(racc * racc, axis=0, keepdims=True)
    ssum_ref[0] = tsum
    ssq_ref[0] = tsq
    rsum_ref[0] = rsum
    rsq_ref[0] = rsq


def _bn_relu_kernel(y_ref, sc_ref, sh_ref, o_ref):
    o_ref[...] = jnp.maximum(
        y_ref[...].astype(jnp.float32) * sc_ref[...] + sh_ref[...], 0.0)


def _bn_relu_residual_kernel(y_ref, sc_ref, sh_ref, r_ref, rsc_ref, rsh_ref, o_ref):
    main = jnp.maximum(
        y_ref[...].astype(jnp.float32) * sc_ref[...] + sh_ref[...], 0.0)
    o_ref[...] = main + (r_ref[...].astype(jnp.float32) * rsc_ref[...] + rsh_ref[...])


# ------------------------------ JAX glue ------------------------------------


def _conv_block(x, wmat, *, in_scale=None, in_shift=None, res_w=None,
                b_tile, vmem_limit):
    """One fused ConvBlock pallas_call: [prev BN+ReLU] -> Conv1d('same') ->
    raw bf16 output + per-grid-step BN sum / sum-of-squares."""
    n, L, cin_p = x.shape
    ksize, _, cout_p = wmat.shape
    pad_left = (ksize - 1) // 2              # PyTorch Conv1d padding='same'
    n_tiles = n // b_tile
    grid = (n_tiles,)

    x_spec = pl.BlockSpec((b_tile, L, cin_p), lambda i: (i, 0, 0))
    # NOTE: weight / scale / shift index maps are constant, so Pallas already
    # skips re-copying them between grid steps; single-buffering them would
    # only trim a few hundred KiB of VMEM here, so they keep default buffering.
    w_spec = pl.BlockSpec((ksize, cin_p, cout_p), lambda i: (0, 0, 0))
    vec_spec = pl.BlockSpec((1, cin_p), lambda i: (0, 0))
    y_spec = pl.BlockSpec((b_tile, L, cout_p), lambda i: (i, 0, 0))
    stat_spec = pl.BlockSpec((1, 1, cout_p), lambda i: (i, 0, 0))

    y_shape = jax.ShapeDtypeStruct((n, L, cout_p), jnp.bfloat16)
    stat_shape = jax.ShapeDtypeStruct((n_tiles, 1, cout_p), jnp.float32)

    scratch = [pltpu.VMEM((b_tile, L, cout_p), jnp.float32)]
    cp = pltpu.CompilerParams(dimension_semantics=("parallel",),
                              vmem_limit_bytes=vmem_limit)

    if res_w is not None:
        kern = functools.partial(_conv_first_res_kernel, pad_left=pad_left)
        wr_spec = pl.BlockSpec(res_w.shape, lambda i: (0, 0))
        y, ssum, ssq, yr, rsum, rsq = pl.pallas_call(
            kern,
            grid=grid,
            out_shape=(y_shape, stat_shape, stat_shape,
                       y_shape, stat_shape, stat_shape),
            in_specs=[x_spec, w_spec, wr_spec],
            out_specs=(y_spec, stat_spec, stat_spec,
                       y_spec, stat_spec, stat_spec),
            scratch_shapes=scratch,
            compiler_params=cp,
        )(x, wmat, res_w)
        return (y, ssum, ssq), (yr, rsum, rsq)

    if in_scale is None:
        kern = functools.partial(_conv_first_kernel, pad_left=pad_left)
        y, ssum, ssq = pl.pallas_call(
            kern,
            grid=grid,
            out_shape=(y_shape, stat_shape, stat_shape),
            in_specs=[x_spec, w_spec],
            out_specs=(y_spec, stat_spec, stat_spec),
            scratch_shapes=scratch,
            compiler_params=cp,
        )(x, wmat)
        return (y, ssum, ssq), None

    kern = functools.partial(_conv_bnin_kernel, pad_left=pad_left)
    y, ssum, ssq = pl.pallas_call(
        kern,
        grid=grid,
        out_shape=(y_shape, stat_shape, stat_shape),
        in_specs=[x_spec, vec_spec, vec_spec, w_spec],
        out_specs=(y_spec, stat_spec, stat_spec),
        scratch_shapes=scratch,
        compiler_params=cp,
    )(x, in_scale, in_shift, wmat)
    return (y, ssum, ssq), None


def _bn_scale_shift(ssum, ssq, gamma, beta, count):
    """Tiny per-channel reduction: train-mode batch stats folded to scale/shift."""
    s = jnp.sum(ssum[:, 0, :], axis=0)
    q = jnp.sum(ssq[:, 0, :], axis=0)
    mean = s / count
    # TODO(synk): E[x^2]-E[x]^2 in f32 can cancel for |mean| >> std; use a
    #             mean-shifted two-pass variant if BN-stat precision matters.
    var = jnp.maximum(q / count - mean * mean, 0.0)   # biased var (train mode)
    scale = gamma * jax.lax.rsqrt(var + BN_EPS)
    shift = beta - mean * scale
    return scale.reshape(1, -1), shift.reshape(1, -1)


def _bn_relu_apply(y_flat, scale, shift, res_flat=None, res_scale=None,
                   res_shift=None, *, vmem_limit):
    """Row-tiled, lane-dense final BN+ReLU (optionally fused residual BN + add)."""
    rows, c = y_flat.shape
    tile_r = _pick_row_tile(rows)
    grid = (rows // tile_r,)
    row_spec = pl.BlockSpec((tile_r, c), lambda i: (i, 0))
    vec_spec = pl.BlockSpec((1, c), lambda i: (0, 0))
    cp = pltpu.CompilerParams(dimension_semantics=("parallel",),
                              vmem_limit_bytes=vmem_limit)
    if res_flat is None:
        return pl.pallas_call(
            _bn_relu_kernel,
            grid=grid,
            out_shape=jax.ShapeDtypeStruct((rows, c), jnp.float32),
            in_specs=[row_spec, vec_spec, vec_spec],
            out_specs=row_spec,
            compiler_params=cp,
        )(y_flat, scale, shift)
    return pl.pallas_call(
        _bn_relu_residual_kernel,
        grid=grid,
        out_shape=jax.ShapeDtypeStruct((rows, c), jnp.float32),
        in_specs=[row_spec, vec_spec, vec_spec, row_spec, vec_spec, vec_spec],
        out_specs=row_spec,
        compiler_params=cp,
    )(y_flat, scale, shift, res_flat, res_scale, res_shift)


# ------------------------------ Parameters ----------------------------------


def init_params(key, in_channels, out_channels):
    """PyTorch-style synthetic params (Conv1d uniform init, BN gamma=1/beta=0)."""
    layers = []
    c_in = in_channels
    for k in (8, 5, 3):
        key, k1, k2 = jax.random.split(key, 3)
        bound = 1.0 / float(jnp.sqrt(float(c_in * k)))
        w = jax.random.uniform(k1, (out_channels, c_in, k), jnp.float32, -bound, bound)
        b = jax.random.uniform(k2, (out_channels,), jnp.float32, -bound, bound)
        layers.append((w, b, jnp.ones((out_channels,), jnp.float32),
                       jnp.zeros((out_channels,), jnp.float32)))
        c_in = out_channels

    residual = None
    if in_channels != out_channels:
        key, k1, k2 = jax.random.split(key, 3)
        bound = 1.0 / float(jnp.sqrt(float(in_channels)))
        w = jax.random.uniform(k1, (out_channels, in_channels, 1), jnp.float32,
                               -bound, bound)
        b = jax.random.uniform(k2, (out_channels,), jnp.float32, -bound, bound)
        residual = (w, b, jnp.ones((out_channels,), jnp.float32),
                    jnp.zeros((out_channels,), jnp.float32))
    return {"layers": layers, "residual": residual}


def prepare_params(params, in_channels, out_channels):
    """One-time layout prep: weights -> (K, Cin, Cout) bf16, channels padded to
    128 lanes.  Conv biases are dropped (cancelled exactly by the train-mode
    BatchNorm that immediately follows each conv)."""
    cin_pad = _round_up(in_channels, LANE)
    cout_pad = _round_up(out_channels, LANE)

    def _prep(w, gamma, beta, cin, cinp):
        wm = jnp.transpose(w, (2, 1, 0))                       # (K, Cin, Cout)
        wm = jnp.pad(wm, ((0, 0), (0, cinp - cin), (0, cout_pad - out_channels)))
        g = jnp.pad(gamma, (0, cout_pad - out_channels)).astype(jnp.float32)
        bt = jnp.pad(beta, (0, cout_pad - out_channels)).astype(jnp.float32)
        return wm.astype(jnp.bfloat16), g, bt

    cins = (in_channels, out_channels, out_channels)
    cinps = (cin_pad, cout_pad, cout_pad)
    layers = [
        _prep(w, g, bt, cin, cinp)
        for (w, _b, g, bt), cin, cinp in zip(params["layers"], cins, cinps)
    ]

    residual = None
    if params["residual"] is not None:
        w, _b, g, bt = params["residual"]
        wm, g, bt = _prep(w, g, bt, in_channels, cin_pad)
        residual = (wm[0], g, bt)                              # (Cin_pad, Cout_pad)

    return {"layers": layers, "residual": residual, "cin_pad": cin_pad,
            "cout_pad": cout_pad, "in_channels": in_channels,
            "out_channels": out_channels}


# ------------------------------ Forward pass ---------------------------------


def resnet_block(x_ncl, prep):
    """Forward pass of ResNetBlock. x_ncl: (N, C_in, L) -> (N, C_out, L)."""
    n, c_in, L = x_ncl.shape
    cin_pad = prep["cin_pad"]
    cout_pad = prep["cout_pad"]
    c_out = prep["out_channels"]
    count = float(n * L)

    # One-time input layout prep: NCL -> NLC, channel pad to 128 lanes, bf16
    # (the conv kernels accumulate in f32; intermediates travel in bf16).
    x_nlc = jnp.transpose(x_ncl, (0, 2, 1))
    x_p = jnp.pad(x_nlc, ((0, 0), (0, 0), (0, cin_pad - c_in))).astype(jnp.bfloat16)

    b_tile = _pick_batch_tile(n, L, max(cin_pad, cout_pad), cout_pad)
    vmem_limit = _vmem_limit_bytes(b_tile, L, max(cin_pad, cout_pad), cout_pad)

    (w1, g1, bt1), (w2, g2, bt2), (w3, g3, bt3) = prep["layers"]
    res = prep["residual"]

    # ConvBlock 1 (k=8), with the residual 1x1 conv fused in when channels
    # differ; its BN+ReLU is fused into ConvBlock 2's load path.
    if res is not None:
        wr, gr, br = res
        (y1, s1, q1), (yr, sr, qr) = _conv_block(
            x_p, w1, res_w=wr, b_tile=b_tile, vmem_limit=vmem_limit)
    else:
        (y1, s1, q1), _ = _conv_block(x_p, w1, b_tile=b_tile, vmem_limit=vmem_limit)
    sc1, sh1 = _bn_scale_shift(s1, q1, g1, bt1, count)

    # ConvBlock 2 (k=5)
    (y2, s2, q2), _ = _conv_block(y1, w2, in_scale=sc1, in_shift=sh1,
                                  b_tile=b_tile, vmem_limit=vmem_limit)
    sc2, sh2 = _bn_scale_shift(s2, q2, g2, bt2, count)

    # ConvBlock 3 (k=3)
    (y3, s3, q3), _ = _conv_block(y2, w3, in_scale=sc2, in_shift=sh2,
                                  b_tile=b_tile, vmem_limit=vmem_limit)
    sc3, sh3 = _bn_scale_shift(s3, q3, g3, bt3, count)

    y3_flat = y3.reshape(n * L, cout_pad)
    if res is not None:
        scr, shr = _bn_scale_shift(sr, qr, gr, br, count)
        out_flat = _bn_relu_apply(y3_flat, sc3, sh3,
                                  yr.reshape(n * L, cout_pad), scr, shr,
                                  vmem_limit=vmem_limit)
    else:
        # Matches the reference module: when in_channels == out_channels the
        # forward returns self.layers(x) with no skip connection.
        out_flat = _bn_relu_apply(y3_flat, sc3, sh3, vmem_limit=vmem_limit)

    # Channel crop + NLC -> NCL layout restore stays in XLA (writing the NCL
    # layout from the kernel would make L the lane dim -> masked partial stores).
    out = out_flat.reshape(n, L, cout_pad)[:, :, :c_out]
    return jnp.transpose(out, (0, 2, 1))


if __name__ == "__main__":
    key = jax.random.PRNGKey(0)
    kx, kp = jax.random.split(key)

    N, C_IN, C_OUT, L = 2, 4, 8, 16
    x = jax.random.normal(kx, (N, C_IN, L), jnp.float32)   # NCL, like PyTorch Conv1d
    params = init_params(kp, C_IN, C_OUT)
    prep = prepare_params(params, C_IN, C_OUT)

    fwd = jax.jit(lambda xx: resnet_block(xx, prep))
    out = fwd(x)
    jax.block_until_ready(out)
    assert out.shape == (N, C_OUT, L), out.shape
    print("KERNEL_OK")
</pallas_src>

<mosaic_0001>
module attributes {stable_mosaic.version = 11 : i64} {
  func.func @_conv_first_res_kernel(%arg0: i32, %arg1: memref<1x16x128xbf16, #tpu.memory_space<vmem>>, %arg2: memref<8x128x128xbf16, #tpu.memory_space<vmem>>, %arg3: memref<128x128xbf16, #tpu.memory_space<vmem>>, %arg4: memref<1x16x128xbf16, #tpu.memory_space<vmem>>, %arg5: memref<1x1x128xf32, #tpu.memory_space<vmem>>, %arg6: memref<1x1x128xf32, #tpu.memory_space<vmem>>, %arg7: memref<1x16x128xbf16, #tpu.memory_space<vmem>>, %arg8: memref<1x1x128xf32, #tpu.memory_space<vmem>>, %arg9: memref<1x1x128xf32, #tpu.memory_space<vmem>>, %arg10: memref<1x16x128xf32, #tpu.memory_space<vmem>>) attributes {dimension_semantics = [#tpu.dimension_semantics<parallel>], iteration_bounds = array<i64: 2>, scalar_prefetch = 0 : i64, scratch_operands = 1 : i64, tpu.core_type = #tpu.core_type<tc>, window_params = [{transform_indices = @transform_0, window_bounds = array<i64: 1, 16, 128>}, {pipeline_mode = #tpu.pipeline_mode<synchronous>, transform_indices = @transform_1, window_bounds = array<i64: 8, 128, 128>}, {pipeline_mode = #tpu.pipeline_mode<synchronous>, transform_indices = @transform_2, window_bounds = array<i64: 128, 128>}, {transform_indices = @transform_3, window_bounds = array<i64: 1, 16, 128>}, {transform_indices = @transform_4, window_bounds = array<i64: 1, 1, 128>}, {transform_indices = @transform_5, window_bounds = array<i64: 1, 1, 128>}, {transform_indices = @transform_6, window_bounds = array<i64: 1, 16, 128>}, {transform_indices = @transform_7, window_bounds = array<i64: 1, 1, 128>}, {transform_indices = @transform_8, window_bounds = array<i64: 1, 1, 128>}]} {
    %c0 = arith.constant 0 : index
    %c0_0 = arith.constant 0 : index
    %0 = vector.load %arg3[%c0, %c0_0] : memref<128x128xbf16, #tpu.memory_space<vmem>>, vector<128x128xbf16>
    %cst = arith.constant 0.000000e+00 : f32
    %1 = vector.broadcast %cst : f32 to vector<1x128xf32>
    %cst_1 = arith.constant 0.000000e+00 : f32
    %2 = vector.broadcast %cst_1 : f32 to vector<1x128xf32>
    %cst_2 = arith.constant 0.000000e+00 : f32
    %3 = vector.broadcast %cst_2 : f32 to vector<1x128xf32>
    %cst_3 = arith.constant 0.000000e+00 : f32
    %4 = vector.broadcast %cst_3 : f32 to vector<1x128xf32>
    %c0_4 = arith.constant 0 : index
    %c0_5 = arith.constant 0 : index
    %c0_6 = arith.constant 0 : index
    %5 = vector.load %arg1[%c0_4, %c0_5, %c0_6] : memref<1x16x128xbf16, #tpu.memory_space<vmem>>, vector<1x16x128xbf16>
    %6 = vector.shape_cast %5 : vector<1x16x128xbf16> to vector<16x128xbf16>
    %c3 = arith.constant 3 : index
    %c0_7 = arith.constant 0 : index
    %c0_8 = arith.constant 0 : index
    %7 = vector.load %arg2[%c3, %c0_7, %c0_8] : memref<8x128x128xbf16, #tpu.memory_space<vmem>>, vector<1x128x128xbf16>
    %8 = vector.shape_cast %7 : vector<1x128x128xbf16> to vector<128x128xbf16>
    %cst_9 = arith.constant dense<0.000000e+00> : vector<16x128xf32>
    %9 = tpu.matmul %6, %8, %cst_9 {dimension_numbers = #tpu.dot_dimension_numbers<[1], [0], [0], [1], [0, 0, 1, 1], [], []>} : vector<16x128xbf16>, vector<128x128xbf16>, vector<16x128xf32> -> vector<16x128xf32>
    %c0_10 = arith.constant 0 : index
    %c0_11 = arith.constant 0 : index
    %c0_12 = arith.constant 0 : index
    %10 = vector.load %arg10[%c0_10, %c0_11, %c0_12] : memref<1x16x128xf32, #tpu.memory_space<vmem>>, vector<1x16x128xf32>
    %11 = vector.shape_cast %10 : vector<1x16x128xf32> to vector<16x128xf32>
    %12 = vector.shape_cast %9 : vector<16x128xf32> to vector<1x16x128xf32>
    tpu.vector_store %arg10[%c0_10, %c0_11, %c0_12], %12 {strides = array<i32>} : memref<1x16x128xf32, #tpu.memory_space<vmem>>, vector<1x16x128xf32>,
    %c0_13 = arith.constant 0 : index
    %c0_14 = arith.constant 0 : index
    %c0_15 = arith.constant 0 : index
    %13 = vector.load %arg2[%c0_13, %c0_14, %c0_15] : memref<8x128x128xbf16, #tpu.memory_space<vmem>>, vector<1x128x128xbf16>
    %14 = vector.shape_cast %13 : vector<1x128x128xbf16> to vector<128x128xbf16>
    %cst_16 = arith.constant dense<0.000000e+00> : vector<16x128xf32>
    %15 = tpu.matmul %6, %14, %cst_16 {dimension_numbers = #tpu.dot_dimension_numbers<[1], [0], [0], [1], [0, 0, 1, 1], [], []>} : vector<16x128xbf16>, vector<128x128xbf16>, vector<16x128xf32> -> vector<16x128xf32>
    %c0_17 = arith.constant 0 : index
    %c3_18 = arith.constant 3 : index
    %c0_19 = arith.constant 0 : index
    %16 = vector.load %arg10[%c0_17, %c3_18, %c0_19] : memref<1x16x128xf32, #tpu.memory_space<vmem>>, vector<1x13x128xf32>
    %17 = vector.shape_cast %16 : vector<1x13x128xf32> to vector<13x128xf32>
    %18 = vector.extract_strided_slice %15 {offsets = [0, 0], sizes = [13, 128], strides = [1, 1]} : vector<16x128xf32> to vector<13x128xf32>
    %19 = arith.addf %17, %18 : vector<13x128xf32>
    %c0_20 = arith.constant 0 : index
    %c3_21 = arith.constant 3 : index
    %c0_22 = arith.constant 0 : index
    %20 = vector.load %arg10[%c0_20, %c3_21, %c0_22] : memref<1x16x128xf32, #tpu.memory_space<vmem>>, vector<1x13x128xf32>
    %21 = vector.shape_cast %20 : vector<1x13x128xf32> to vector<13x128xf32>
    %22 = vector.shape_cast %19 : vector<13x128xf32> to vector<1x13x128xf32>
    tpu.vector_store %arg10[%c0_20, %c3_21, %c0_22], %22 {strides = array<i32>} : memref<1x16x128xf32, #tpu.memory_space<vmem>>, vector<1x13x128xf32>,
    %c1 = arith.constant 1 : index
    %c0_23 = arith.constant 0 : index
    %c0_24 = arith.constant 0 : index
    %23 = vector.load %arg2[%c1, %c0_23, %c0_24] : memref<8x128x128xbf16, #tpu.memory_space<vmem>>, vector<1x128x128xbf16>
    %24 = vector.shape_cast %23 : vector<1x128x128xbf16> to vector<128x128xbf16>
    %cst_25 = arith.constant dense<0.000000e+00> : vector<16x128xf32>
    %25 = tpu.matmul %6, %24, %cst_25 {dimension_numbers = #tpu.dot_dimension_numbers<[1], [0], [0], [1], [0, 0, 1, 1], [], []>} : vector<16x128xbf16>, vector<128x128xbf16>, vector<16x128xf32> -> vector<16x128xf32>
    %c0_26 = arith.constant 0 : index
    %c2 = arith.constant 2 : index
    %c0_27 = arith.constant 0 : index
    %26 = vector.load %arg10[%c0_26, %c2, %c0_27] : memref<1x16x128xf32, #tpu.memory_space<vmem>>, vector<1x14x128xf32>
    %27 = vector.shape_cast %26 : vector<1x14x128xf32> to vector<14x128xf32>
    %28 = vector.extract_strided_slice %25 {offsets = [0, 0], sizes = [14, 128], strides = [1, 1]} : vector<16x128xf32> to vector<14x128xf32>
    %29 = arith.addf %27, %28 : vector<14x128xf32>
    %c0_28 = arith.constant 0 : index
    %c2_29 = arith.constant 2 : index
    %c0_30 = arith.constant 0 : index
    %30 = vector.load %arg10[%c0_28, %c2_29, %c0_30] : memref<1x16x128xf32, #tpu.memory_space<vmem>>, vector<1x14x128xf32>
    %31 = vector.shape_cast %30 : vector<1x14x128xf32> to vector<14x128xf32>
    %32 = vector.shape_cast %29 : vector<14x128xf32> to vector<1x14x128xf32>
    tpu.vector_store %arg10[%c0_28, %c2_29, %c0_30], %32 {strides = array<i32>} : memref<1x16x128xf32, #tpu.memory_space<vmem>>, vector<1x14x128xf32>,
    %c2_31 = arith.constant 2 : index
    %c0_32 = arith.constant 0 : index
    %c0_33 = arith.constant 0 : index
    %33 = vector.load %arg2[%c2_31, %c0_32, %c0_33] : memref<8x128x128xbf16, #tpu.memory_space<vmem>>, vector<1x128x128xbf16>
    %34 = vector.shape_cast %33 : vector<1x128x128xbf16> to vector<128x128xbf16>
    %cst_34 = arith.constant dense<0.000000e+00> : vector<16x128xf32>
    %35 = tpu.matmul %6, %34, %cst_34 {dimension_numbers = #tpu.dot_dimension_numbers<[1], [0], [0], [1], [0, 0, 1, 1], [], []>} : vector<16x128xbf16>, vector<128x128xbf16>, vector<16x128xf32> -> vector<16x128xf32>
    %c0_35 = arith.constant 0 : index
    %c1_36 = arith.constant 1 : index
    %c0_37 = arith.constant 0 : index
    %36 = vector.load %arg10[%c0_35, %c1_36, %c0_37] : memref<1x16x128xf32, #tpu.memory_space<vmem>>, vector<1x15x128xf32>
    %37 = vector.shape_cast %36 : vector<1x15x128xf32> to vector<15x128xf32>
    %38 = vector.extract_strided_slice %35 {offsets = [0, 0], sizes = [15, 128], strides = [1, 1]} : vector<16x128xf32> to vector<15x128xf32>
    %39 = arith.addf %37, %38 : vector<15x128xf32>
    %c0_38 = arith.constant 0 : index
    %c1_39 = arith.constant 1 : index
    %c0_40 = arith.constant 0 : index
    %40 = vector.load %arg10[%c0_38, %c1_39, %c0_40] : memref<1x16x128xf32, #tpu.memory_space<vmem>>, vector<1x15x128xf32>
    %41 = vector.shape_cast %40 : vector<1x15x128xf32> to vector<15x128xf32>
    %42 = vector.shape_cast %39 : vector<15x128xf32> to vector<1x15x128xf32>
    tpu.vector_store %arg10[%c0_38, %c1_39, %c0_40], %42 {strides = array<i32>} : memref<1x16x128xf32, #tpu.memory_space<vmem>>, vector<1x15x128xf32>,
    %c4 = arith.constant 4 : index
    %c0_41 = arith.constant 0 : index
    %c0_42 = arith.constant 0 : index
    %43 = vector.load %arg2[%c4, %c0_41, %c0_42] : memref<8x128x128xbf16, #tpu.memory_space<vmem>>, vector<1x128x128xbf16>
    %44 = vector.shape_cast %43 : vector<1x128x128xbf16> to vector<128x128xbf16>
    %cst_43 = arith.constant dense<0.000000e+00> : vector<16x128xf32>
    %45 = tpu.matmul %6, %44, %cst_43 {dimension_numbers = #tpu.dot_dimension_numbers<[1], [0], [0], [1], [0, 0, 1, 1], [], []>} : vector<16x128xbf16>, vector<128x128xbf16>, vector<16x128xf32> -> vector<16x128xf32>
    %c0_44 = arith.constant 0 : index
    %c0_45 = arith.constant 0 : index
    %c0_46 = arith.constant 0 : index
    %46 = vector.load %arg10[%c0_44, %c0_45, %c0_46] : memref<1x16x128xf32, #tpu.memory_space<vmem>>, vector<1x15x128xf32>
    %47 = vector.shape_cast %46 : vector<1x15x128xf32> to vector<15x128xf32>
    %48 = vector.extract_strided_slice %45 {offsets = [1, 0], sizes = [15, 128], strides = [1, 1]} : vector<16x128xf32> to vector<15x128xf32>
    %49 = arith.addf %47, %48 : vector<15x128xf32>
    %c0_47 = arith.constant 0 : index
    %c0_48 = arith.constant 0 : index
    %c0_49 = arith.constant 0 : index
    %50 = vector.load %arg10[%c0_47, %c0_48, %c0_49] : memref<1x16x128xf32, #tpu.memory_space<vmem>>, vector<1x15x128xf32>
    %51 = vector.shape_cast %50 : vector<1x15x128xf32> to vector<15x128xf32>
    %52 = vector.shape_cast %49 : vector<15x128xf32> to vector<1x15x128xf32>
    tpu.vector_store %arg10[%c0_47, %c0_48, %c0_49], %52 {strides = array<i32>} : memref<1x16x128xf32, #tpu.memory_space<vmem>>, vector<1x15x128xf32>,
    %c5 = arith.constant 5 : index
    %c0_50 = arith.constant 0 : index
    %c0_51 = arith.constant 0 : index
    %53 = vector.load %arg2[%c5, %c0_50, %c0_51] : memref<8x128x128xbf16, #tpu.memory_space<vmem>>, vector<1x128x128xbf16>
    %54 = vector.shape_cast %53 : vector<1x128x128xbf16> to vector<128x128xbf16>
    %cst_52 = arith.constant dense<0.000000e+00> : vector<16x128xf32>
    %55 = tpu.matmul %6, %54, %cst_52 {dimension_numbers = #tpu.dot_dimension_numbers<[1], [0], [0], [1], [0, 0, 1, 1], [], []>} : vector<16x128xbf16>, vector<128x128xbf16>, vector<16x128xf32> -> vector<16x128xf32>
    %c0_53 = arith.constant 0 : index
    %c0_54 = arith.constant 0 : index
    %c0_55 = arith.constant 0 : index
    %56 = vector.load %arg10[%c0_53, %c0_54, %c0_55] : memref<1x16x128xf32, #tpu.memory_space<vmem>>, vector<1x14x128xf32>
    %57 = vector.shape_cast %56 : vector<1x14x128xf32> to vector<14x128xf32>
    %58 = vector.extract_strided_slice %55 {offsets = [2, 0], sizes = [14, 128], strides = [1, 1]} : vector<16x128xf32> to vector<14x128xf32>
    %59 = arith.addf %57, %58 : vector<14x128xf32>
    %c0_56 = arith.constant 0 : index
    %c0_57 = arith.constant 0 : index
    %c0_58 = arith.constant 0 : index
    %60 = vector.load %arg10[%c0_56, %c0_57, %c0_58] : memref<1x16x128xf32, #tpu.memory_space<vmem>>, vector<1x14x128xf32>
    %61 = vector.shape_cast %60 : vector<1x14x128xf32> to vector<14x128xf32>
    %62 = vector.shape_cast %59 : vector<14x128xf32> to vector<1x14x128xf32>
    tpu.vector_store %arg10[%c0_56, %c0_57, %c0_58], %62 {strides = array<i32>} : memref<1x16x128xf32, #tpu.memory_space<vmem>>, vector<1x14x128xf32>,
    %c6 = arith.constant 6 : index
    %c0_59 = arith.constant 0 : index
    %c0_60 = arith.constant 0 : index
    %63 = vector.load %arg2[%c6, %c0_59, %c0_60] : memref<8x128x128xbf16, #tpu.memory_space<vmem>>, vector<1x128x128xbf16>
    %64 = vector.shape_cast %63 : vector<1x128x128xbf16> to vector<128x128xbf16>
    %cst_61 = arith.constant dense<0.000000e+00> : vector<16x128xf32>
    %65 = tpu.matmul %6, %64, %cst_61 {dimension_numbers = #tpu.dot_dimension_numbers<[1], [0], [0], [1], [0, 0, 1, 1], [], []>} : vector<16x128xbf16>, vector<128x128xbf16>, vector<16x128xf32> -> vector<16x128xf32>
    %c0_62 = arith.constant 0 : index
    %c0_63 = arith.constant 0 : index
    %c0_64 = arith.constant 0 : index
    %66 = vector.load %arg10[%c0_62, %c0_63, %c0_64] : memref<1x16x128xf32, #tpu.memory_space<vmem>>, vector<1x13x128xf32>
    %67 = vector.shape_cast %66 : vector<1x13x128xf32> to vector<13x128xf32>
    %68 = vector.extract_strided_slice %65 {offsets = [3, 0], sizes = [13, 128], strides = [1, 1]} : vector<16x128xf32> to vector<13x128xf32>
    %69 = arith.addf %67, %68 : vector<13x128xf32>
    %c0_65 = arith.constant 0 : index
    %c0_66 = arith.constant 0 : index
    %c0_67 = arith.constant 0 : index
    %70 = vector.load %arg10[%c0_65, %c0_66, %c0_67] : memref<1x16x128xf32, #tpu.memory_space<vmem>>, vector<1x13x128xf32>
    %71 = vector.shape_cast %70 : vector<1x13x128xf32> to vector<13x128xf32>
    %72 = vector.shape_cast %69 : vector<13x128xf32> to vector<1x13x128xf32>
    tpu.vector_store %arg10[%c0_65, %c0_66, %c0_67], %72 {strides = array<i32>} : memref<1x16x128xf32, #tpu.memory_space<vmem>>, vector<1x13x128xf32>,
    %c7 = arith.constant 7 : index
    %c0_68 = arith.constant 0 : index
    %c0_69 = arith.constant 0 : index
    %73 = vector.load %arg2[%c7, %c0_68, %c0_69] : memref<8x128x128xbf16, #tpu.memory_space<vmem>>, vector<1x128x128xbf16>
    %74 = vector.shape_cast %73 : vector<1x128x128xbf16> to vector<128x128xbf16>
    %cst_70 = arith.constant dense<0.000000e+00> : vector<16x128xf32>
    %75 = tpu.matmul %6, %74, %cst_70 {dimension_numbers = #tpu.dot_dimension_numbers<[1], [0], [0], [1], [0, 0, 1, 1], [], []>} : vector<16x128xbf16>, vector<128x128xbf16>, vector<16x128xf32> -> vector<16x128xf32>
    %c0_71 = arith.constant 0 : index
    %c0_72 = arith.constant 0 : index
    %c0_73 = arith.constant 0 : index
    %76 = vector.load %arg10[%c0_71, %c0_72, %c0_73] : memref<1x16x128xf32, #tpu.memory_space<vmem>>, vector<1x12x128xf32>
    %77 = vector.shape_cast %76 : vector<1x12x128xf32> to vector<12x128xf32>
    %78 = vector.extract_strided_slice %75 {offsets = [4, 0], sizes = [12, 128], strides = [1, 1]} : vector<16x128xf32> to vector<12x128xf32>
    %79 = arith.addf %77, %78 : vector<12x128xf32>
    %c0_74 = arith.constant 0 : index
    %c0_75 = arith.constant 0 : index
    %c0_76 = arith.constant 0 : index
    %80 = vector.load %arg10[%c0_74, %c0_75, %c0_76] : memref<1x16x128xf32, #tpu.memory_space<vmem>>, vector<1x12x128xf32>
    %81 = vector.shape_cast %80 : vector<1x12x128xf32> to vector<12x128xf32>
    %82 = vector.shape_cast %79 : vector<12x128xf32> to vector<1x12x128xf32>
    tpu.vector_store %arg10[%c0_74, %c0_75, %c0_76], %82 {strides = array<i32>} : memref<1x16x128xf32, #tpu.memory_space<vmem>>, vector<1x12x128xf32>,
    %c0_77 = arith.constant 0 : index
    %c0_78 = arith.constant 0 : index
    %c0_79 = arith.constant 0 : index
    %83 = vector.load %arg10[%c0_77, %c0_78, %c0_79] : memref<1x16x128xf32, #tpu.memory_space<vmem>>, vector<1x16x128xf32>
    %84 = vector.shape_cast %83 : vector<1x16x128xf32> to vector<16x128xf32>
    %85 = arith.truncf %84 : vector<16x128xf32> to vector<16x128xbf16>
    %c0_80 = arith.constant 0 : index
    %c0_81 = arith.constant 0 : index
    %c0_82 = arith.constant 0 : index
    %86 = vector.load %arg4[%c0_80, %c0_81, %c0_82] : memref<1x16x128xbf16, #tpu.memory_space<vmem>>, vector<1x16x128xbf16>
    %87 = vector.shape_cast %86 : vector<1x16x128xbf16> to vector<16x128xbf16>
    %88 = vector.shape_cast %85 : vector<16x128xbf16> to vector<1x16x128xbf16>
    tpu.vector_store %arg4[%c0_80, %c0_81, %c0_82], %88 {strides = array<i32>} : memref<1x16x128xbf16, #tpu.memory_space<vmem>>, vector<1x16x128xbf16>,
    %cst_83 = arith.constant dense<0.000000e+00> : vector<128xf32>
    %89 = vector.multi_reduction <add>, %84, %cst_83 [0] : vector<16x128xf32> to vector<128xf32>
    %90 = vector.shape_cast %89 : vector<128xf32> to vector<1x128xf32>
    %91 = arith.addf %1, %90 : vector<1x128xf32>
    %92 = arith.mulf %84, %84 : vector<16x128xf32>
    %cst_84 = arith.constant dense<0.000000e+00> : vector<128xf32>
    %93 = vector.multi_reduction <add>, %92, %cst_84 [0] : vector<16x128xf32> to vector<128xf32>
    %94 = vector.shape_cast %93 : vector<128xf32> to vector<1x128xf32>
    %95 = arith.addf %2, %94 : vector<1x128xf32>
    %cst_85 = arith.constant dense<0.000000e+00> : vector<16x128xf32>
    %96 = tpu.matmul %6, %0, %cst_85 {dimension_numbers = #tpu.dot_dimension_numbers<[1], [0], [0], [1], [0, 0, 1, 1], [], []>} : vector<16x128xbf16>, vector<128x128xbf16>, vector<16x128xf32> -> vector<16x128xf32>
    %97 = arith.truncf %96 : vector<16x128xf32> to vector<16x128xbf16>
    %c0_86 = arith.constant 0 : index
    %c0_87 = arith.constant 0 : index
    %c0_88 = arith.constant 0 : index
    %98 = vector.load %arg7[%c0_86, %c0_87, %c0_88] : memref<1x16x128xbf16, #tpu.memory_space<vmem>>, vector<1x16x128xbf16>
    %99 = vector.shape_cast %98 : vector<1x16x128xbf16> to vector<16x128xbf16>
    %100 = vector.shape_cast %97 : vector<16x128xbf16> to vector<1x16x128xbf16>
    tpu.vector_store %arg7[%c0_86, %c0_87, %c0_88], %100 {strides = array<i32>} : memref<1x16x128xbf16, #tpu.memory_space<vmem>>, vector<1x16x128xbf16>,
    %cst_89 = arith.constant dense<0.000000e+00> : vector<128xf32>
    %101 = vector.multi_reduction <add>, %96, %cst_89 [0] : vector<16x128xf32> to vector<128xf32>
    %102 = vector.shape_cast %101 : vector<128xf32> to vector<1x128xf32>
    %103 = arith.addf %3, %102 : vector<1x128xf32>
    %104 = arith.mulf %96, %96 : vector<16x128xf32>
    %cst_90 = arith.constant dense<0.000000e+00> : vector<128xf32>
    %105 = vector.multi_reduction <add>, %104, %cst_90 [0] : vector<16x128xf32> to vector<128xf32>
    %106 = vector.shape_cast %105 : vector<128xf32> to vector<1x128xf32>
    %107 = arith.addf %4, %106 : vector<1x128xf32>
    %c0_91 = arith.constant 0 : index
    %c0_92 = arith.constant 0 : index
    %c0_93 = arith.constant 0 : index
    %108 = vector.load %arg5[%c0_91, %c0_92, %c0_93] : memref<1x1x128xf32, #tpu.memory_space<vmem>>, vector<1x1x128xf32>
    %109 = vector.shape_cast %108 : vector<1x1x128xf32> to vector<1x128xf32>
    %110 = vector.shape_cast %91 : vector<1x128xf32> to vector<1x1x128xf32>
    tpu.vector_store %arg5[%c0_91, %c0_92, %c0_93], %110 {strides = array<i32>} : memref<1x1x128xf32, #tpu.memory_space<vmem>>, vector<1x1x128xf32>,
    %c0_94 = arith.constant 0 : index
    %c0_95 = arith.constant 0 : index
    %c0_96 = arith.constant 0 : index
    %111 = vector.load %arg6[%c0_94, %c0_95, %c0_96] : memref<1x1x128xf32, #tpu.memory_space<vmem>>, vector<1x1x128xf32>
    %112 = vector.shape_cast %111 : vector<1x1x128xf32> to vector<1x128xf32>
    %113 = vector.shape_cast %95 : vector<1x128xf32> to vector<1x1x128xf32>
    tpu.vector_store %arg6[%c0_94, %c0_95, %c0_96], %113 {strides = array<i32>} : memref<1x1x128xf32, #tpu.memory_space<vmem>>, vector<1x1x128xf32>,
    %c0_97 = arith.constant 0 : index
    %c0_98 = arith.constant 0 : index
    %c0_99 = arith.constant 0 : index
    %114 = vector.load %arg8[%c0_97, %c0_98, %c0_99] : memref<1x1x128xf32, #tpu.memory_space<vmem>>, vector<1x1x128xf32>
    %115 = vector.shape_cast %114 : vector<1x1x128xf32> to vector<1x128xf32>
    %116 = vector.shape_cast %103 : vector<1x128xf32> to vector<1x1x128xf32>
    tpu.vector_store %arg8[%c0_97, %c0_98, %c0_99], %116 {strides = array<i32>} : memref<1x1x128xf32, #tpu.memory_space<vmem>>, vector<1x1x128xf32>,
    %c0_100 = arith.constant 0 : index
    %c0_101 = arith.constant 0 : index
    %c0_102 = arith.constant 0 : index
    %117 = vector.load %arg9[%c0_100, %c0_101, %c0_102] : memref<1x1x128xf32, #tpu.memory_space<vmem>>, vector<1x1x128xf32>
    %118 = vector.shape_cast %117 : vector<1x1x128xf32> to vector<1x128xf32>
    %119 = vector.shape_cast %107 : vector<1x128xf32> to vector<1x1x128xf32>
    tpu.vector_store %arg9[%c0_100, %c0_101, %c0_102], %119 {strides = array<i32>} : memref<1x1x128xf32, #tpu.memory_space<vmem>>, vector<1x1x128xf32>,
    return
  }
  func.func @transform_0(%arg0: i32) -> (i32, i32, i32) {
    %c0_i32 = arith.constant 0 : i32
    %c0_i32_0 = arith.constant 0 : i32
    %c0_i32_1 = arith.constant 0 : i32
    return %arg0, %c0_i32, %c0_i32_0 : i32, i32, i32
  }
  func.func @transform_1(%arg0: i32) -> (i32, i32, i32) {
    %c0_i32 = arith.constant 0 : i32
    %c0_i32_0 = arith.constant 0 : i32
    %c0_i32_1 = arith.constant 0 : i32
    %c0_i32_2 = arith.constant 0 : i32
    return %c0_i32, %c0_i32_0, %c0_i32_1 : i32, i32, i32
  }
  func.func @transform_2(%arg0: i32) -> (i32, i32) {
    %c0_i32 = arith.constant 0 : i32
    %c0_i32_0 = arith.constant 0 : i32
    %c0_i32_1 = arith.constant 0 : i32
    return %c0_i32, %c0_i32_0 : i32, i32
  }
  func.func @transform_3(%arg0: i32) -> (i32, i32, i32) {
    %c0_i32 = arith.constant 0 : i32
    %c0_i32_0 = arith.constant 0 : i32
    %c0_i32_1 = arith.constant 0 : i32
    return %arg0, %c0_i32, %c0_i32_0 : i32, i32, i32
  }
  func.func @transform_4(%arg0: i32) -> (i32, i32, i32) {
    %c0_i32 = arith.constant 0 : i32
    %c0_i32_0 = arith.constant 0 : i32
    %c0_i32_1 = arith.constant 0 : i32
    return %arg0, %c0_i32, %c0_i32_0 : i32, i32, i32
  }
  func.func @transform_5(%arg0: i32) -> (i32, i32, i32) {
    %c0_i32 = arith.constant 0 : i32
    %c0_i32_0 = arith.constant 0 : i32
    %c0_i32_1 = arith.constant 0 : i32
    return %arg0, %c0_i32, %c0_i32_0 : i32, i32, i32
  }
  func.func @transform_6(%arg0: i32) -> (i32, i32, i32) {
    %c0_i32 = arith.constant 0 : i32
    %c0_i32_0 = arith.constant 0 : i32
    %c0_i32_1 = arith.constant 0 : i32
    return %arg0, %c0_i32, %c0_i32_0 : i32, i32, i32
  }
  func.func @transform_7(%arg0: i32) -> (i32, i32, i32) {
    %c0_i32 = arith.constant 0 : i32
    %c0_i32_0 = arith.constant 0 : i32
    %c0_i32_1 = arith.constant 0 : i32
    return %arg0, %c0_i32, %c0_i32_0 : i32, i32, i32
  }
  func.func @transform_8(%arg0: i32) -> (i32, i32, i32) {
    %c0_i32 = arith.constant 0 : i32
    %c0_i32_0 = arith.constant 0 : i32
    %c0_i32_1 = arith.constant 0 : i32
    return %arg0, %c0_i32, %c0_i32_0 : i32, i32, i32
  }
}

module attributes {stable_mosaic.version = 11 : i64} {
  func.func @_conv_bnin_kernel(%arg0: i32, %arg1: memref<1x16x128xbf16, #tpu.memory_space<vmem>>, %arg2: memref<1x128xf32, #tpu.memory_space<vmem>>, %arg3: memref<1x128xf32, #tpu.memory_space<vmem>>, %arg4: memref<5x128x128xbf16, #tpu.memory_space<vmem>>, %arg5: memref<1x16x128xbf16, #tpu.memory_space<vmem>>, %arg6: memref<1x1x128xf32, #tpu.memory_space<vmem>>, %arg7: memref<1x1x128xf32, #tpu.memory_space<vmem>>, %arg8: memref<1x16x128xf32, #tpu.memory_space<vmem>>) attributes {dimension_semantics = [#tpu.dimension_semantics<parallel>], iteration_bounds = array<i64: 2>, scalar_prefetch = 0 : i64, scratch_operands = 1 : i64, tpu.core_type = #tpu.core_type<tc>, window_params = [{transform_indices = @transform_0, window_bounds = array<i64: 1, 16, 128>}, {pipeline_mode = #tpu.pipeline_mode<synchronous>, transform_indices = @transform_1, window_bounds = array<i64: 1, 128>}, {pipeline_mode = #tpu.pipeline_mode<synchronous>, transform_indices = @transform_2, window_bounds = array<i64: 1, 128>}, {pipeline_mode = #tpu.pipeline_mode<synchronous>, transform_indices = @transform_3, window_bounds = array<i64: 5, 128, 128>}, {transform_indices = @transform_4, window_bounds = array<i64: 1, 16, 128>}, {transform_indices = @transform_5, window_bounds = array<i64: 1, 1, 128>}, {transform_indices = @transform_6, window_bounds = array<i64: 1, 1, 128>}]} {
    %c0 = arith.constant 0 : index
    %c0_0 = arith.constant 0 : index
    %0 = vector.load %arg2[%c0, %c0_0] : memref<1x128xf32, #tpu.memory_space<vmem>>, vector<1x128xf32>
    %c0_1 = arith.constant 0 : index
    %c0_2 = arith.constant 0 : index
    %1 = vector.load %arg3[%c0_1, %c0_2] : memref<1x128xf32, #tpu.memory_space<vmem>>, vector<1x128xf32>
    %cst = arith.constant 0.000000e+00 : f32
    %2 = vector.broadcast %cst : f32 to vector<1x128xf32>
    %cst_3 = arith.constant 0.000000e+00 : f32
    %3 = vector.broadcast %cst_3 : f32 to vector<1x128xf32>
    %c0_4 = arith.constant 0 : index
    %c0_5 = arith.constant 0 : index
    %c0_6 = arith.constant 0 : index
    %4 = vector.load %arg1[%c0_4, %c0_5, %c0_6] : memref<1x16x128xbf16, #tpu.memory_space<vmem>>, vector<1x16x128xbf16>
    %5 = vector.shape_cast %4 : vector<1x16x128xbf16> to vector<16x128xbf16>
    %6 = arith.extf %5 : vector<16x128xbf16> to vector<16x128xf32>
    %7 = vector.broadcast %0 : vector<1x128xf32> to vector<16x128xf32>
    %8 = arith.mulf %6, %7 : vector<16x128xf32>
    %9 = vector.broadcast %1 : vector<1x128xf32> to vector<16x128xf32>
    %10 = arith.addf %8, %9 : vector<16x128xf32>
    %cst_7 = arith.constant 0.000000e+00 : f32
    %11 = vector.broadcast %cst_7 : f32 to vector<16x128xf32>
    %12 = arith.maximumf %10, %11 : vector<16x128xf32>
    %13 = arith.truncf %12 : vector<16x128xf32> to vector<16x128xbf16>
    %c2 = arith.constant 2 : index
    %c0_8 = arith.constant 0 : index
    %c0_9 = arith.constant 0 : index
    %14 = vector.load %arg4[%c2, %c0_8, %c0_9] : memref<5x128x128xbf16, #tpu.memory_space<vmem>>, vector<1x128x128xbf16>
    %15 = vector.shape_cast %14 : vector<1x128x128xbf16> to vector<128x128xbf16>
    %cst_10 = arith.constant dense<0.000000e+00> : vector<16x128xf32>
    %16 = tpu.matmul %13, %15, %cst_10 {dimension_numbers = #tpu.dot_dimension_numbers<[1], [0], [0], [1], [0, 0, 1, 1], [], []>} : vector<16x128xbf16>, vector<128x128xbf16>, vector<16x128xf32> -> vector<16x128xf32>
    %c0_11 = arith.constant 0 : index
    %c0_12 = arith.constant 0 : index
    %c0_13 = arith.constant 0 : index
    %17 = vector.load %arg8[%c0_11, %c0_12, %c0_13] : memref<1x16x128xf32, #tpu.memory_space<vmem>>, vector<1x16x128xf32>
    %18 = vector.shape_cast %17 : vector<1x16x128xf32> to vector<16x128xf32>
    %19 = vector.shape_cast %16 : vector<16x128xf32> to vector<1x16x128xf32>
    tpu.vector_store %arg8[%c0_11, %c0_12, %c0_13], %19 {strides = array<i32>} : memref<1x16x128xf32, #tpu.memory_space<vmem>>, vector<1x16x128xf32>,
    %c0_14 = arith.constant 0 : index
    %c0_15 = arith.constant 0 : index
    %c0_16 = arith.constant 0 : index
    %20 = vector.load %arg4[%c0_14, %c0_15, %c0_16] : memref<5x128x128xbf16, #tpu.memory_space<vmem>>, vector<1x128x128xbf16>
    %21 = vector.shape_cast %20 : vector<1x128x128xbf16> to vector<128x128xbf16>
    %cst_17 = arith.constant dense<0.000000e+00> : vector<16x128xf32>
    %22 = tpu.matmul %13, %21, %cst_17 {dimension_numbers = #tpu.dot_dimension_numbers<[1], [0], [0], [1], [0, 0, 1, 1], [], []>} : vector<16x128xbf16>, vector<128x128xbf16>, vector<16x128xf32> -> vector<16x128xf32>
    %c0_18 = arith.constant 0 : index
    %c2_19 = arith.constant 2 : index
    %c0_20 = arith.constant 0 : index
    %23 = vector.load %arg8[%c0_18, %c2_19, %c0_20] : memref<1x16x128xf32, #tpu.memory_space<vmem>>, vector<1x14x128xf32>
    %24 = vector.shape_cast %23 : vector<1x14x128xf32> to vector<14x128xf32>
    %25 = vector.extract_strided_slice %22 {offsets = [0, 0], sizes = [14, 128], strides = [1, 1]} : vector<16x128xf32> to vector<14x128xf32>
    %26 = arith.addf %24, %25 : vector<14x128xf32>
    %c0_21 = arith.constant 0 : index
    %c2_22 = arith.constant 2 : index
    %c0_23 = arith.constant 0 : index
    %27 = vector.load %arg8[%c0_21, %c2_22, %c0_23] : memref<1x16x128xf32, #tpu.memory_space<vmem>>, vector<1x14x128xf32>
    %28 = vector.shape_cast %27 : vector<1x14x128xf32> to vector<14x128xf32>
    %29 = vector.shape_cast %26 : vector<14x128xf32> to vector<1x14x128xf32>
    tpu.vector_store %arg8[%c0_21, %c2_22, %c0_23], %29 {strides = array<i32>} : memref<1x16x128xf32, #tpu.memory_space<vmem>>, vector<1x14x128xf32>,
    %c1 = arith.constant 1 : index
    %c0_24 = arith.constant 0 : index
    %c0_25 = arith.constant 0 : index
    %30 = vector.load %arg4[%c1, %c0_24, %c0_25] : memref<5x128x128xbf16, #tpu.memory_space<vmem>>, vector<1x128x128xbf16>
    %31 = vector.shape_cast %30 : vector<1x128x128xbf16> to vector<128x128xbf16>
    %cst_26 = arith.constant dense<0.000000e+00> : vector<16x128xf32>
    %32 = tpu.matmul %13, %31, %cst_26 {dimension_numbers = #tpu.dot_dimension_numbers<[1], [0], [0], [1], [0, 0, 1, 1], [], []>} : vector<16x128xbf16>, vector<128x128xbf16>, vector<16x128xf32> -> vector<16x128xf32>
    %c0_27 = arith.constant 0 : index
    %c1_28 = arith.constant 1 : index
    %c0_29 = arith.constant 0 : index
    %33 = vector.load %arg8[%c0_27, %c1_28, %c0_29] : memref<1x16x128xf32, #tpu.memory_space<vmem>>, vector<1x15x128xf32>
    %34 = vector.shape_cast %33 : vector<1x15x128xf32> to vector<15x128xf32>
    %35 = vector.extract_strided_slice %32 {offsets = [0, 0], sizes = [15, 128], strides = [1, 1]} : vector<16x128xf32> to vector<15x128xf32>
    %36 = arith.addf %34, %35 : vector<15x128xf32>
    %c0_30 = arith.constant 0 : index
    %c1_31 = arith.constant 1 : index
    %c0_32 = arith.constant 0 : index
    %37 = vector.load %arg8[%c0_30, %c1_31, %c0_32] : memref<1x16x128xf32, #tpu.memory_space<vmem>>, vector<1x15x128xf32>
    %38 = vector.shape_cast %37 : vector<1x15x128xf32> to vector<15x128xf32>
    %39 = vector.shape_cast %36 : vector<15x128xf32> to vector<1x15x128xf32>
    tpu.vector_store %arg8[%c0_30, %c1_31, %c0_32], %39 {strides = array<i32>} : memref<1x16x128xf32, #tpu.memory_space<vmem>>, vector<1x15x128xf32>,
    %c3 = arith.constant 3 : index
    %c0_33 = arith.constant 0 : index
    %c0_34 = arith.constant 0 : index
    %40 = vector.load %arg4[%c3, %c0_33, %c0_34] : memref<5x128x128xbf16, #tpu.memory_space<vmem>>, vector<1x128x128xbf16>
    %41 = vector.shape_cast %40 : vector<1x128x128xbf16> to vector<128x128xbf16>
    %cst_35 = arith.constant dense<0.000000e+00> : vector<16x128xf32>
    %42 = tpu.matmul %13, %41, %cst_35 {dimension_numbers = #tpu.dot_dimension_numbers<[1], [0], [0], [1], [0, 0, 1, 1], [], []>} : vector<16x128xbf16>, vector<128x128xbf16>, vector<16x128xf32> -> vector<16x128xf32>
    %c0_36 = arith.constant 0 : index
    %c0_37 = arith.constant 0 : index
    %c0_38 = arith.constant 0 : index
    %43 = vector.load %arg8[%c0_36, %c0_37, %c0_38] : memref<1x16x128xf32, #tpu.memory_space<vmem>>, vector<1x15x128xf32>
    %44 = vector.shape_cast %43 : vector<1x15x128xf32> to vector<15x128xf32>
    %45 = vector.extract_strided_slice %42 {offsets = [1, 0], sizes = [15, 128], strides = [1, 1]} : vector<16x128xf32> to vector<15x128xf32>
    %46 = arith.addf %44, %45 : vector<15x128xf32>
    %c0_39 = arith.constant 0 : index
    %c0_40 = arith.constant 0 : index
    %c0_41 = arith.constant 0 : index
    %47 = vector.load %arg8[%c0_39, %c0_40, %c0_41] : memref<1x16x128xf32, #tpu.memory_space<vmem>>, vector<1x15x128xf32>
    %48 = vector.shape_cast %47 : vector<1x15x128xf32> to vector<15x128xf32>
    %49 = vector.shape_cast %46 : vector<15x128xf32> to vector<1x15x128xf32>
    tpu.vector_store %arg8[%c0_39, %c0_40, %c0_41], %49 {strides = array<i32>} : memref<1x16x128xf32, #tpu.memory_space<vmem>>, vector<1x15x128xf32>,
    %c4 = arith.constant 4 : index
    %c0_42 = arith.constant 0 : index
    %c0_43 = arith.constant 0 : index
    %50 = vector.load %arg4[%c4, %c0_42, %c0_43] : memref<5x128x128xbf16, #tpu.memory_space<vmem>>, vector<1x128x128xbf16>
    %51 = vector.shape_cast %50 : vector<1x128x128xbf16> to vector<128x128xbf16>
    %cst_44 = arith.constant dense<0.000000e+00> : vector<16x128xf32>
    %52 = tpu.matmul %13, %51, %cst_44 {dimension_numbers = #tpu.dot_dimension_numbers<[1], [0], [0], [1], [0, 0, 1, 1], [], []>} : vector<16x128xbf16>, vector<128x128xbf16>, vector<16x128xf32> -> vector<16x128xf32>
    %c0_45 = arith.constant 0 : index
    %c0_46 = arith.constant 0 : index
    %c0_47 = arith.constant 0 : index
    %53 = vector.load %arg8[%c0_45, %c0_46, %c0_47] : memref<1x16x128xf32, #tpu.memory_space<vmem>>, vector<1x14x128xf32>
    %54 = vector.shape_cast %53 : vector<1x14x128xf32> to vector<14x128xf32>
    %55 = vector.extract_strided_slice %52 {offsets = [2, 0], sizes = [14, 128], strides = [1, 1]} : vector<16x128xf32> to vector<14x128xf32>
    %56 = arith.addf %54, %55 : vector<14x128xf32>
    %c0_48 = arith.constant 0 : index
    %c0_49 = arith.constant 0 : index
    %c0_50 = arith.constant 0 : index
    %57 = vector.load %arg8[%c0_48, %c0_49, %c0_50] : memref<1x16x128xf32, #tpu.memory_space<vmem>>, vector<1x14x128xf32>
    %58 = vector.shape_cast %57 : vector<1x14x128xf32> to vector<14x128xf32>
    %59 = vector.shape_cast %56 : vector<14x128xf32> to vector<1x14x128xf32>
    tpu.vector_store %arg8[%c0_48, %c0_49, %c0_50], %59 {strides = array<i32>} : memref<1x16x128xf32, #tpu.memory_space<vmem>>, vector<1x14x128xf32>,
    %c0_51 = arith.constant 0 : index
    %c0_52 = arith.constant 0 : index
    %c0_53 = arith.constant 0 : index
    %60 = vector.load %arg8[%c0_51, %c0_52, %c0_53] : memref<1x16x128xf32, #tpu.memory_space<vmem>>, vector<1x16x128xf32>
    %61 = vector.shape_cast %60 : vector<1x16x128xf32> to vector<16x128xf32>
    %62 = arith.truncf %61 : vector<16x128xf32> to vector<16x128xbf16>
    %c0_54 = arith.constant 0 : index
    %c0_55 = arith.constant 0 : index
    %c0_56 = arith.constant 0 : index
    %63 = vector.load %arg5[%c0_54, %c0_55, %c0_56] : memref<1x16x128xbf16, #tpu.memory_space<vmem>>, vector<1x16x128xbf16>
    %64 = vector.shape_cast %63 : vector<1x16x128xbf16> to vector<16x128xbf16>
    %65 = vector.shape_cast %62 : vector<16x128xbf16> to vector<1x16x128xbf16>
    tpu.vector_store %arg5[%c0_54, %c0_55, %c0_56], %65 {strides = array<i32>} : memref<1x16x128xbf16, #tpu.memory_space<vmem>>, vector<1x16x128xbf16>,
    %cst_57 = arith.constant dense<0.000000e+00> : vector<128xf32>
    %66 = vector.multi_reduction <add>, %61, %cst_57 [0] : vector<16x128xf32> to vector<128xf32>
    %67 = vector.shape_cast %66 : vector<128xf32> to vector<1x128xf32>
    %68 = arith.addf %2, %67 : vector<1x128xf32>
    %69 = arith.mulf %61, %61 : vector<16x128xf32>
    %cst_58 = arith.constant dense<0.000000e+00> : vector<128xf32>
    %70 = vector.multi_reduction <add>, %69, %cst_58 [0] : vector<16x128xf32> to vector<128xf32>
    %71 = vector.shape_cast %70 : vector<128xf32> to vector<1x128xf32>
    %72 = arith.addf %3, %71 : vector<1x128xf32>
    %c0_59 = arith.constant 0 : index
    %c0_60 = arith.constant 0 : index
    %c0_61 = arith.constant 0 : index
    %73 = vector.load %arg6[%c0_59, %c0_60, %c0_61] : memref<1x1x128xf32, #tpu.memory_space<vmem>>, vector<1x1x128xf32>
    %74 = vector.shape_cast %73 : vector<1x1x128xf32> to vector<1x128xf32>
    %75 = vector.shape_cast %68 : vector<1x128xf32> to vector<1x1x128xf32>
    tpu.vector_store %arg6[%c0_59, %c0_60, %c0_61], %75 {strides = array<i32>} : memref<1x1x128xf32, #tpu.memory_space<vmem>>, vector<1x1x128xf32>,
    %c0_62 = arith.constant 0 : index
    %c0_63 = arith.constant 0 : index
    %c0_64 = arith.constant 0 : index
    %76 = vector.load %arg7[%c0_62, %c0_63, %c0_64] : memref<1x1x128xf32, #tpu.memory_space<vmem>>, vector<1x1x128xf32>
    %77 = vector.shape_cast %76 : vector<1x1x128xf32> to vector<1x128xf32>
    %78 = vector.shape_cast %72 : vector<1x128xf32> to vector<1x1x128xf32>
    tpu.vector_store %arg7[%c0_62, %c0_63, %c0_64], %78 {strides = array<i32>} : memref<1x1x128xf32, #tpu.memory_space<vmem>>, vector<1x1x128xf32>,
    return
  }
  func.func @transform_0(%arg0: i32) -> (i32, i32, i32) {
    %c0_i32 = arith.constant 0 : i32
    %c0_i32_0 = arith.constant 0 : i32
    %c0_i32_1 = arith.constant 0 : i32
    return %arg0, %c0_i32, %c0_i32_0 : i32, i32, i32
  }
  func.func @transform_1(%arg0: i32) -> (i32, i32) {
    %c0_i32 = arith.constant 0 : i32
    %c0_i32_0 = arith.constant 0 : i32
    %c0_i32_1 = arith.constant 0 : i32
    return %c0_i32, %c0_i32_0 : i32, i32
  }
  func.func @transform_2(%arg0: i32) -> (i32, i32) {
    %c0_i32 = arith.constant 0 : i32
    %c0_i32_0 = arith.constant 0 : i32
    %c0_i32_1 = arith.constant 0 : i32
    return %c0_i32, %c0_i32_0 : i32, i32
  }
  func.func @transform_3(%arg0: i32) -> (i32, i32, i32) {
    %c0_i32 = arith.constant 0 : i32
    %c0_i32_0 = arith.constant 0 : i32
    %c0_i32_1 = arith.constant 0 : i32
    %c0_i32_2 = arith.constant 0 : i32
    return %c0_i32, %c0_i32_0, %c0_i32_1 : i32, i32, i32
  }
  func.func @transform_4(%arg0: i32) -> (i32, i32, i32) {
    %c0_i32 = arith.constant 0 : i32
    %c0_i32_0 = arith.constant 0 : i32
    %c0_i32_1 = arith.constant 0 : i32
    return %arg0, %c0_i32, %c0_i32_0 : i32, i32, i32
  }
  func.func @transform_5(%arg0: i32) -> (i32, i32, i32) {
    %c0_i32 = arith.constant 0 : i32
    %c0_i32_0 = arith.constant 0 : i32
    %c0_i32_1 = arith.constant 0 : i32
    return %arg0, %c0_i32, %c0_i32_0 : i32, i32, i32
  }
  func.func @transform_6(%arg0: i32) -> (i32, i32, i32) {
    %c0_i32 = arith.constant 0 : i32
    %c0_i32_0 = arith.constant 0 : i32
    %c0_i32_1 = arith.constant 0 : i32
    return %arg0, %c0_i32, %c0_i32_0 : i32, i32, i32
  }
}

module attributes {stable_mosaic.version = 11 : i64} {
  func.func @_conv_bnin_kernel(%arg0: i32, %arg1: memref<1x16x128xbf16, #tpu.memory_space<vmem>>, %arg2: memref<1x128xf32, #tpu.memory_space<vmem>>, %arg3: memref<1x128xf32, #tpu.memory_space<vmem>>, %arg4: memref<3x128x128xbf16, #tpu.memory_space<vmem>>, %arg5: memref<1x16x128xbf16, #tpu.memory_space<vmem>>, %arg6: memref<1x1x128xf32, #tpu.memory_space<vmem>>, %arg7: memref<1x1x128xf32, #tpu.memory_space<vmem>>, %arg8: memref<1x16x128xf32, #tpu.memory_space<vmem>>) attributes {dimension_semantics = [#tpu.dimension_semantics<parallel>], iteration_bounds = array<i64: 2>, scalar_prefetch = 0 : i64, scratch_operands = 1 : i64, tpu.core_type = #tpu.core_type<tc>, window_params = [{transform_indices = @transform_0, window_bounds = array<i64: 1, 16, 128>}, {pipeline_mode = #tpu.pipeline_mode<synchronous>, transform_indices = @transform_1, window_bounds = array<i64: 1, 128>}, {pipeline_mode = #tpu.pipeline_mode<synchronous>, transform_indices = @transform_2, window_bounds = array<i64: 1, 128>}, {pipeline_mode = #tpu.pipeline_mode<synchronous>, transform_indices = @transform_3, window_bounds = array<i64: 3, 128, 128>}, {transform_indices = @transform_4, window_bounds = array<i64: 1, 16, 128>}, {transform_indices = @transform_5, window_bounds = array<i64: 1, 1, 128>}, {transform_indices = @transform_6, window_bounds = array<i64: 1, 1, 128>}]} {
    %c0 = arith.constant 0 : index
    %c0_0 = arith.constant 0 : index
    %0 = vector.load %arg2[%c0, %c0_0] : memref<1x128xf32, #tpu.memory_space<vmem>>, vector<1x128xf32>
    %c0_1 = arith.constant 0 : index
    %c0_2 = arith.constant 0 : index
    %1 = vector.load %arg3[%c0_1, %c0_2] : memref<1x128xf32, #tpu.memory_space<vmem>>, vector<1x128xf32>
    %cst = arith.constant 0.000000e+00 : f32
    %2 = vector.broadcast %cst : f32 to vector<1x128xf32>
    %cst_3 = arith.constant 0.000000e+00 : f32
    %3 = vector.broadcast %cst_3 : f32 to vector<1x128xf32>
    %c0_4 = arith.constant 0 : index
    %c0_5 = arith.constant 0 : index
    %c0_6 = arith.constant 0 : index
    %4 = vector.load %arg1[%c0_4, %c0_5, %c0_6] : memref<1x16x128xbf16, #tpu.memory_space<vmem>>, vector<1x16x128xbf16>
    %5 = vector.shape_cast %4 : vector<1x16x128xbf16> to vector<16x128xbf16>
    %6 = arith.extf %5 : vector<16x128xbf16> to vector<16x128xf32>
    %7 = vector.broadcast %0 : vector<1x128xf32> to vector<16x128xf32>
    %8 = arith.mulf %6, %7 : vector<16x128xf32>
    %9 = vector.broadcast %1 : vector<1x128xf32> to vector<16x128xf32>
    %10 = arith.addf %8, %9 : vector<16x128xf32>
    %cst_7 = arith.constant 0.000000e+00 : f32
    %11 = vector.broadcast %cst_7 : f32 to vector<16x128xf32>
    %12 = arith.maximumf %10, %11 : vector<16x128xf32>
    %13 = arith.truncf %12 : vector<16x128xf32> to vector<16x128xbf16>
    %c1 = arith.constant 1 : index
    %c0_8 = arith.constant 0 : index
    %c0_9 = arith.constant 0 : index
    %14 = vector.load %arg4[%c1, %c0_8, %c0_9] : memref<3x128x128xbf16, #tpu.memory_space<vmem>>, vector<1x128x128xbf16>
    %15 = vector.shape_cast %14 : vector<1x128x128xbf16> to vector<128x128xbf16>
    %cst_10 = arith.constant dense<0.000000e+00> : vector<16x128xf32>
    %16 = tpu.matmul %13, %15, %cst_10 {dimension_numbers = #tpu.dot_dimension_numbers<[1], [0], [0], [1], [0, 0, 1, 1], [], []>} : vector<16x128xbf16>, vector<128x128xbf16>, vector<16x128xf32> -> vector<16x128xf32>
    %c0_11 = arith.constant 0 : index
    %c0_12 = arith.constant 0 : index
    %c0_13 = arith.constant 0 : index
    %17 = vector.load %arg8[%c0_11, %c0_12, %c0_13] : memref<1x16x128xf32, #tpu.memory_space<vmem>>, vector<1x16x128xf32>
    %18 = vector.shape_cast %17 : vector<1x16x128xf32> to vector<16x128xf32>
    %19 = vector.shape_cast %16 : vector<16x128xf32> to vector<1x16x128xf32>
    tpu.vector_store %arg8[%c0_11, %c0_12, %c0_13], %19 {strides = array<i32>} : memref<1x16x128xf32, #tpu.memory_space<vmem>>, vector<1x16x128xf32>,
    %c0_14 = arith.constant 0 : index
    %c0_15 = arith.constant 0 : index
    %c0_16 = arith.constant 0 : index
    %20 = vector.load %arg4[%c0_14, %c0_15, %c0_16] : memref<3x128x128xbf16, #tpu.memory_space<vmem>>, vector<1x128x128xbf16>
    %21 = vector.shape_cast %20 : vector<1x128x128xbf16> to vector<128x128xbf16>
    %cst_17 = arith.constant dense<0.000000e+00> : vector<16x128xf32>
    %22 = tpu.matmul %13, %21, %cst_17 {dimension_numbers = #tpu.dot_dimension_numbers<[1], [0], [0], [1], [0, 0, 1, 1], [], []>} : vector<16x128xbf16>, vector<128x128xbf16>, vector<16x128xf32> -> vector<16x128xf32>
    %c0_18 = arith.constant 0 : index
    %c1_19 = arith.constant 1 : index
    %c0_20 = arith.constant 0 : index
    %23 = vector.load %arg8[%c0_18, %c1_19, %c0_20] : memref<1x16x128xf32, #tpu.memory_space<vmem>>, vector<1x15x128xf32>
    %24 = vector.shape_cast %23 : vector<1x15x128xf32> to vector<15x128xf32>
    %25 = vector.extract_strided_slice %22 {offsets = [0, 0], sizes = [15, 128], strides = [1, 1]} : vector<16x128xf32> to vector<15x128xf32>
    %26 = arith.addf %24, %25 : vector<15x128xf32>
    %c0_21 = arith.constant 0 : index
    %c1_22 = arith.constant 1 : index
    %c0_23 = arith.constant 0 : index
    %27 = vector.load %arg8[%c0_21, %c1_22, %c0_23] : memref<1x16x128xf32, #tpu.memory_space<vmem>>, vector<1x15x128xf32>
    %28 = vector.shape_cast %27 : vector<1x15x128xf32> to vector<15x128xf32>
    %29 = vector.shape_cast %26 : vector<15x128xf32> to vector<1x15x128xf32>
    tpu.vector_store %arg8[%c0_21, %c1_22, %c0_23], %29 {strides = array<i32>} : memref<1x16x128xf32, #tpu.memory_space<vmem>>, vector<1x15x128xf32>,
    %c2 = arith.constant 2 : index
    %c0_24 = arith.constant 0 : index
    %c0_25 = arith.constant 0 : index
    %30 = vector.load %arg4[%c2, %c0_24, %c0_25] : memref<3x128x128xbf16, #tpu.memory_space<vmem>>, vector<1x128x128xbf16>
    %31 = vector.shape_cast %30 : vector<1x128x128xbf16> to vector<128x128xbf16>
    %cst_26 = arith.constant dense<0.000000e+00> : vector<16x128xf32>
    %32 = tpu.matmul %13, %31, %cst_26 {dimension_numbers = #tpu.dot_dimension_numbers<[1], [0], [0], [1], [0, 0, 1, 1], [], []>} : vector<16x128xbf16>, vector<128x128xbf16>, vector<16x128xf32> -> vector<16x128xf32>
    %c0_27 = arith.constant 0 : index
    %c0_28 = arith.constant 0 : index
    %c0_29 = arith.constant 0 : index
    %33 = vector.load %arg8[%c0_27, %c0_28, %c0_29] : memref<1x16x128xf32, #tpu.memory_space<vmem>>, vector<1x15x128xf32>
    %34 = vector.shape_cast %33 : vector<1x15x128xf32> to vector<15x128xf32>
    %35 = vector.extract_strided_slice %32 {offsets = [1, 0], sizes = [15, 128], strides = [1, 1]} : vector<16x128xf32> to vector<15x128xf32>
    %36 = arith.addf %34, %35 : vector<15x128xf32>
    %c0_30 = arith.constant 0 : index
    %c0_31 = arith.constant 0 : index
    %c0_32 = arith.constant 0 : index
    %37 = vector.load %arg8[%c0_30, %c0_31, %c0_32] : memref<1x16x128xf32, #tpu.memory_space<vmem>>, vector<1x15x128xf32>
    %38 = vector.shape_cast %37 : vector<1x15x128xf32> to vector<15x128xf32>
    %39 = vector.shape_cast %36 : vector<15x128xf32> to vector<1x15x128xf32>
    tpu.vector_store %arg8[%c0_30, %c0_31, %c0_32], %39 {strides = array<i32>} : memref<1x16x128xf32, #tpu.memory_space<vmem>>, vector<1x15x128xf32>,
    %c0_33 = arith.constant 0 : index
    %c0_34 = arith.constant 0 : index
    %c0_35 = arith.constant 0 : index
    %40 = vector.load %arg8[%c0_33, %c0_34, %c0_35] : memref<1x16x128xf32, #tpu.memory_space<vmem>>, vector<1x16x128xf32>
    %41 = vector.shape_cast %40 : vector<1x16x128xf32> to vector<16x128xf32>
    %42 = arith.truncf %41 : vector<16x128xf32> to vector<16x128xbf16>
    %c0_36 = arith.constant 0 : index
    %c0_37 = arith.constant 0 : index
    %c0_38 = arith.constant 0 : index
    %43 = vector.load %arg5[%c0_36, %c0_37, %c0_38] : memref<1x16x128xbf16, #tpu.memory_space<vmem>>, vector<1x16x128xbf16>
    %44 = vector.shape_cast %43 : vector<1x16x128xbf16> to vector<16x128xbf16>
    %45 = vector.shape_cast %42 : vector<16x128xbf16> to vector<1x16x128xbf16>
    tpu.vector_store %arg5[%c0_36, %c0_37, %c0_38], %45 {strides = array<i32>} : memref<1x16x128xbf16, #tpu.memory_space<vmem>>, vector<1x16x128xbf16>,
    %cst_39 = arith.constant dense<0.000000e+00> : vector<128xf32>
    %46 = vector.multi_reduction <add>, %41, %cst_39 [0] : vector<16x128xf32> to vector<128xf32>
    %47 = vector.shape_cast %46 : vector<128xf32> to vector<1x128xf32>
    %48 = arith.addf %2, %47 : vector<1x128xf32>
    %49 = arith.mulf %41, %41 : vector<16x128xf32>
    %cst_40 = arith.constant dense<0.000000e+00> : vector<128xf32>
    %50 = vector.multi_reduction <add>, %49, %cst_40 [0] : vector<16x128xf32> to vector<128xf32>
    %51 = vector.shape_cast %50 : vector<128xf32> to vector<1x128xf32>
    %52 = arith.addf %3, %51 : vector<1x128xf32>
    %c0_41 = arith.constant 0 : index
    %c0_42 = arith.constant 0 : index
    %c0_43 = arith.constant 0 : index
    %53 = vector.load %arg6[%c0_41, %c0_42, %c0_43] : memref<1x1x128xf32, #tpu.memory_space<vmem>>, vector<1x1x128xf32>
    %54 = vector.shape_cast %53 : vector<1x1x128xf32> to vector<1x128xf32>
    %55 = vector.shape_cast %48 : vector<1x128xf32> to vector<1x1x128xf32>
    tpu.vector_store %arg6[%c0_41, %c0_42, %c0_43], %55 {strides = array<i32>} : memref<1x1x128xf32, #tpu.memory_space<vmem>>, vector<1x1x128xf32>,
    %c0_44 = arith.constant 0 : index
    %c0_45 = arith.constant 0 : index
    %c0_46 = arith.constant 0 : index
    %56 = vector.load %arg7[%c0_44, %c0_45, %c0_46] : memref<1x1x128xf32, #tpu.memory_space<vmem>>, vector<1x1x128xf32>
    %57 = vector.shape_cast %56 : vector<1x1x128xf32> to vector<1x128xf32>
    %58 = vector.shape_cast %52 : vector<1x128xf32> to vector<1x1x128xf32>
    tpu.vector_store %arg7[%c0_44, %c0_45, %c0_46], %58 {strides = array<i32>} : memref<1x1x128xf32, #tpu.memory_space<vmem>>, vector<1x1x128xf32>,
    return
  }
  func.func @transform_0(%arg0: i32) -> (i32, i32, i32) {
    %c0_i32 = arith.constant 0 : i32
    %c0_i32_0 = arith.constant 0 : i32
    %c0_i32_1 = arith.constant 0 : i32
    return %arg0, %c0_i32, %c0_i32_0 : i32, i32, i32
  }
  func.func @transform_1(%arg0: i32) -> (i32, i32) {
    %c0_i32 = arith.constant 0 : i32
    %c0_i32_0 = arith.constant 0 : i32
    %c0_i32_1 = arith.constant 0 : i32
    return %c0_i32, %c0_i32_0 : i32, i32
  }
  func.func @transform_2(%arg0: i32) -> (i32, i32) {
    %c0_i32 = arith.constant 0 : i32
    %c0_i32_0 = arith.constant 0 : i32
    %c0_i32_1 = arith.constant 0 : i32
    return %c0_i32, %c0_i32_0 : i32, i32
  }
  func.func @transform_3(%arg0: i32) -> (i32, i32, i32) {
    %c0_i32 = arith.constant 0 : i32
    %c0_i32_0 = arith.constant 0 : i32
    %c0_i32_1 = arith.constant 0 : i32
    %c0_i32_2 = arith.constant 0 : i32
    return %c0_i32, %c0_i32_0, %c0_i32_1 : i32, i32, i32
  }
  func.func @transform_4(%arg0: i32) -> (i32, i32, i32) {
    %c0_i32 = arith.constant 0 : i32
    %c0_i32_0 = arith.constant 0 : i32
    %c0_i32_1 = arith.constant 0 : i32
    return %arg0, %c0_i32, %c0_i32_0 : i32, i32, i32
  }
  func.func @transform_5(%arg0: i32) -> (i32, i32, i32) {
    %c0_i32 = arith.constant 0 : i32
    %c0_i32_0 = arith.constant 0 : i32
    %c0_i32_1 = arith.constant 0 : i32
    return %arg0, %c0_i32, %c0_i32_0 : i32, i32, i32
  }
  func.func @transform_6(%arg0: i32) -> (i32, i32, i32) {
    %c0_i32 = arith.constant 0 : i32
    %c0_i32_0 = arith.constant 0 : i32
    %c0_i32_1 = arith.constant 0 : i32
    return %arg0, %c0_i32, %c0_i32_0 : i32, i32, i32
  }
}

module attributes {stable_mosaic.version = 11 : i64} {
  func.func @_bn_relu_residual_kernel(%arg0: i32, %arg1: memref<32x128xbf16, #tpu.memory_space<vmem>>, %arg2: memref<1x128xf32, #tpu.memory_space<vmem>>, %arg3: memref<1x128xf32, #tpu.memory_space<vmem>>, %arg4: memref<32x128xbf16, #tpu.memory_space<vmem>>, %arg5: memref<1x128xf32, #tpu.memory_space<vmem>>, %arg6: memref<1x128xf32, #tpu.memory_space<vmem>>, %arg7: memref<32x128xf32, #tpu.memory_space<vmem>>) attributes {dimension_semantics = [#tpu.dimension_semantics<parallel>], iteration_bounds = array<i64: 1>, scalar_prefetch = 0 : i64, scratch_operands = 0 : i64, tpu.core_type = #tpu.core_type<tc>, window_params = [{transform_indices = @transform_0, window_bounds = array<i64: 32, 128>}, {pipeline_mode = #tpu.pipeline_mode<synchronous>, transform_indices = @transform_1, window_bounds = array<i64: 1, 128>}, {pipeline_mode = #tpu.pipeline_mode<synchronous>, transform_indices = @transform_2, window_bounds = array<i64: 1, 128>}, {transform_indices = @transform_3, window_bounds = array<i64: 32, 128>}, {pipeline_mode = #tpu.pipeline_mode<synchronous>, transform_indices = @transform_4, window_bounds = array<i64: 1, 128>}, {pipeline_mode = #tpu.pipeline_mode<synchronous>, transform_indices = @transform_5, window_bounds = array<i64: 1, 128>}, {transform_indices = @transform_6, window_bounds = array<i64: 32, 128>}]} {
    %c0 = arith.constant 0 : index
    %c0_0 = arith.constant 0 : index
    %0 = vector.load %arg1[%c0, %c0_0] : memref<32x128xbf16, #tpu.memory_space<vmem>>, vector<32x128xbf16>
    %1 = arith.extf %0 : vector<32x128xbf16> to vector<32x128xf32>
    %c0_1 = arith.constant 0 : index
    %c0_2 = arith.constant 0 : index
    %2 = vector.load %arg2[%c0_1, %c0_2] : memref<1x128xf32, #tpu.memory_space<vmem>>, vector<1x128xf32>
    %3 = vector.broadcast %2 : vector<1x128xf32> to vector<32x128xf32>
    %4 = arith.mulf %1, %3 : vector<32x128xf32>
    %c0_3 = arith.constant 0 : index
    %c0_4 = arith.constant 0 : index
    %5 = vector.load %arg3[%c0_3, %c0_4] : memref<1x128xf32, #tpu.memory_space<vmem>>, vector<1x128xf32>
    %6 = vector.broadcast %5 : vector<1x128xf32> to vector<32x128xf32>
    %7 = arith.addf %4, %6 : vector<32x128xf32>
    %cst = arith.constant 0.000000e+00 : f32
    %8 = vector.broadcast %cst : f32 to vector<32x128xf32>
    %9 = arith.maximumf %7, %8 : vector<32x128xf32>
    %c0_5 = arith.constant 0 : index
    %c0_6 = arith.constant 0 : index
    %10 = vector.load %arg4[%c0_5, %c0_6] : memref<32x128xbf16, #tpu.memory_space<vmem>>, vector<32x128xbf16>
    %11 = arith.extf %10 : vector<32x128xbf16> to vector<32x128xf32>
    %c0_7 = arith.constant 0 : index
    %c0_8 = arith.constant 0 : index
    %12 = vector.load %arg5[%c0_7, %c0_8] : memref<1x128xf32, #tpu.memory_space<vmem>>, vector<1x128xf32>
    %13 = vector.broadcast %12 : vector<1x128xf32> to vector<32x128xf32>
    %14 = arith.mulf %11, %13 : vector<32x128xf32>
    %c0_9 = arith.constant 0 : index
    %c0_10 = arith.constant 0 : index
    %15 = vector.load %arg6[%c0_9, %c0_10] : memref<1x128xf32, #tpu.memory_space<vmem>>, vector<1x128xf32>
    %16 = vector.broadcast %15 : vector<1x128xf32> to vector<32x128xf32>
    %17 = arith.addf %14, %16 : vector<32x128xf32>
    %18 = arith.addf %9, %17 : vector<32x128xf32>
    %c0_11 = arith.constant 0 : index
    %c0_12 = arith.constant 0 : index
    %19 = vector.load %arg7[%c0_11, %c0_12] : memref<32x128xf32, #tpu.memory_space<vmem>>, vector<32x128xf32>
    tpu.vector_store %arg7[%c0_11, %c0_12], %18 {strides = array<i32>} : memref<32x128xf32, #tpu.memory_space<vmem>>, vector<32x128xf32>,
    return
  }
  func.func @transform_0(%arg0: i32) -> (i32, i32) {
    %c0_i32 = arith.constant 0 : i32
    %c0_i32_0 = arith.constant 0 : i32
    return %arg0, %c0_i32 : i32, i32
  }
  func.func @transform_1(%arg0: i32) -> (i32, i32) {
    %c0_i32 = arith.constant 0 : i32
    %c0_i32_0 = arith.constant 0 : i32
    %c0_i32_1 = arith.constant 0 : i32
    return %c0_i32, %c0_i32_0 : i32, i32
  }
  func.func @transform_2(%arg0: i32) -> (i32, i32) {
    %c0_i32 = arith.constant 0 : i32
    %c0_i32_0 = arith.constant 0 : i32
    %c0_i32_1 = arith.constant 0 : i32
    return %c0_i32, %c0_i32_0 : i32, i32
  }
  func.func @transform_3(%arg0: i32) -> (i32, i32) {
    %c0_i32 = arith.constant 0 : i32
    %c0_i32_0 = arith.constant 0 : i32
    return %arg0, %c0_i32 : i32, i32
  }
  func.func @transform_4(%arg0: i32) -> (i32, i32) {
    %c0_i32 = arith.constant 0 : i32
    %c0_i32_0 = arith.constant 0 : i32
    %c0_i32_1 = arith.constant 0 : i32
    return %c0_i32, %c0_i32_0 : i32, i32
  }
  func.func @transform_5(%arg0: i32) -> (i32, i32) {
    %c0_i32 = arith.constant 0 : i32
    %c0_i32_0 = arith.constant 0 : i32
    %c0_i32_1 = arith.constant 0 : i32
    return %c0_i32, %c0_i32_0 : i32, i32
  }
  func.func @transform_6(%arg0: i32) -> (i32, i32) {
    %c0_i32 = arith.constant 0 : i32
    %c0_i32_0 = arith.constant 0 : i32
    return %arg0, %c0_i32 : i32, i32
  }
}

</mosaic_0001>

<llo_original>
// kernel: _lambda_.7
$region0: #{_lambda_.7}
  #allocation0 [shape = 'u32[]', space=smem, size = 0x4, offset = 0x4, fixed_abs, tag = 'smem constant byte address 0x4 - core index']
  #allocation1 [shape = 'u32[72,128]{1,0:T(1,128)}', space=vmem, size = 0x9000, scoped, tag = 'internal scratch']
  %s0 = inlined_call_operand.vmem [shape: bf16[32,128], index: 0, kind: input, shape index: {}]
  %s1 = inlined_call_operand.vmem [shape: f32[1,128], index: 1, kind: input, shape index: {}]
  %s2 = inlined_call_operand.vmem [shape: f32[1,128], index: 2, kind: input, shape index: {}]
  %s3 = inlined_call_operand.vmem [shape: bf16[32,128], index: 3, kind: input, shape index: {}]
  %s4 = inlined_call_operand.vmem [shape: f32[1,128], index: 4, kind: input, shape index: {}]
  %s5 = inlined_call_operand.vmem [shape: f32[1,128], index: 5, kind: input, shape index: {}]
  %s6 = inlined_call_operand.vmem [shape: f32[32,128], index: 6, kind: output, shape index: {}]
  %s7 = sld [smem:[#allocation0]]
  $region34: #{_lambda_.7} parent=0
    _
  %s9 = ssub.s32 1, %s7
  %s10 = scalar_select 0, %s9, %s7
  // Predicated region
  $region2: #{_lambda_.7} parent=0 // pred_check
    _
  $region3: #{_lambda_.7} parent=0 // pred_check_branch
    %12 = sbr.rel (0) target = $region5
  $region4: #{_lambda_.7} parent=0 // pred_region
    _
  $region5: #{_lambda_.7} parent=0 // pred_fallthru
    _
  // Predicated region
  $region6: #{_lambda_.7} parent=0 // pred_check
    _
  $region7: #{_lambda_.7} parent=0 // pred_check_branch
    %14 = sbr.rel (0) target = $region9
  $region8: #{_lambda_.7} parent=0 // pred_region
    _
  $region9: #{_lambda_.7} parent=0 // pred_fallthru
    _
  // Predicated region
  $region10: #{_lambda_.7} parent=0 // pred_check
    _
  $region11: #{_lambda_.7} parent=0 // pred_check_branch
    %16 = sbr.rel (0) target = $region13
  $region12: #{_lambda_.7} parent=0 // pred_region
    _
  $region13: #{_lambda_.7} parent=0 // pred_fallthru
    _
  // Predicated region
  $region14: #{_lambda_.7} parent=0 // pred_check
    _
  $region15: #{_lambda_.7} parent=0 // pred_check_branch
    %18 = sbr.rel (0) target = $region17
  $region16: #{_lambda_.7} parent=0 // pred_region
    _
  $region17: #{_lambda_.7} parent=0 // pred_fallthru
    _
  // Predicated region
  $region18: #{_lambda_.7} parent=0 // pred_check
    _
  $region19: #{_lambda_.7} parent=0 // pred_check_branch
    %20 = sbr.rel (0) target = $region21
  $region20: #{_lambda_.7} parent=0 // pred_region
    _
  $region21: #{_lambda_.7} parent=0 // pred_fallthru
    _
  // Predicated region
  $region22: #{_lambda_.7} parent=0 // pred_check
    _
  $region23: #{_lambda_.7} parent=0 // pred_check_branch
    %22 = sbr.rel (0) target = $region25
  $region24: #{_lambda_.7} parent=0 // pred_region
    _
  $region25: #{_lambda_.7} parent=0 // pred_fallthru
    _
  %v23 = vld [vmem:[%s0] sm:$0xf]
  %v24 = vld [vmem:[%s0 + $0x4] sm:$0xf]
  %v25 = vld [vmem:[%s0 + $0x8] sm:$0xf]
  %v26 = vld [vmem:[%s0 + $0xc] sm:$0xf]
  %v27 = vunpack.c.l.bf16 %v23
  %v28 = vunpack.c.l.bf16 %v24
  %v29 = vunpack.c.l.bf16 %v25
  %v30 = vunpack.c.l.bf16 %v26
  %v31 = vld [vmem:[%s1] sm:$0x1]
  %v33 = vperm.slane %v31, 0
  %v35 = vmul.f32 %v27, %v33
  %v36 = vmul.f32 %v28, %v33
  %v37 = vmul.f32 %v29, %v33
  %v38 = vmul.f32 %v30, %v33
  %v39 = vld [vmem:[%s2] sm:$0x1]
  %v41 = vperm.slane %v39, 0
  %v43 = vadd.f32 %v35, %v41
  %v44 = vadd.f32 %v36, %v41
  %v45 = vadd.f32 %v37, %v41
  %v46 = vadd.f32 %v38, %v41
  %v47 = vmax.f32 %v43, 0.0
  %v48 = vmax.f32 %v44, 0.0
  %v49 = vmax.f32 %v45, 0.0
  %v50 = vmax.f32 %v46, 0.0
  %v51 = vld [vmem:[%s3] sm:$0xf]
  %v52 = vld [vmem:[%s3 + $0x4] sm:$0xf]
  %v53 = vld [vmem:[%s3 + $0x8] sm:$0xf]
  %v54 = vld [vmem:[%s3 + $0xc] sm:$0xf]
  %v55 = vunpack.c.l.bf16 %v51
  %v56 = vunpack.c.l.bf16 %v52
  %v57 = vunpack.c.l.bf16 %v53
  %v58 = vunpack.c.l.bf16 %v54
  %v59 = vld [vmem:[%s4] sm:$0x1]
  %v61 = vperm.slane %v59, 0
  %v63 = vmul.f32 %v55, %v61
  %v64 = vmul.f32 %v56, %v61
  %v65 = vmul.f32 %v57, %v61
  %v66 = vmul.f32 %v58, %v61
  %v67 = vld [vmem:[%s5] sm:$0x1]
  %v69 = vperm.slane %v67, 0
  %v71 = vadd.f32 %v63, %v69
  %v72 = vadd.f32 %v64, %v69
  %v73 = vadd.f32 %v65, %v69
  %v74 = vadd.f32 %v66, %v69
  %v75 = vadd.f32 %v47, %v71
  %v76 = vadd.f32 %v48, %v72
  %v77 = vadd.f32 %v49, %v73
  %v78 = vadd.f32 %v50, %v74
  %79 = vst [vmem:[%s6] sm:$0xff] %v75
  %80 = vst [vmem:[%s6 + $0x8] sm:$0xff] %v76
  %81 = vst [vmem:[%s6 + $0x10] sm:$0xff] %v77
  %82 = vst [vmem:[%s6 + $0x18] sm:$0xff] %v78
  // Predicated region
  $region26: #{_lambda_.7} parent=0 // pred_check
    _
  $region27: #{_lambda_.7} parent=0 // pred_check_branch
    %84 = sbr.rel (0) target = $region29
  $region28: #{_lambda_.7} parent=0 // pred_region
    _
  $region29: #{_lambda_.7} parent=0 // pred_fallthru
    _
  // Predicated region
  $region30: #{_lambda_.7} parent=0 // pred_check
    _
  $region31: #{_lambda_.7} parent=0 // pred_check_branch
    %86 = sbr.rel (0) target = $region33
  $region32: #{_lambda_.7} parent=0 // pred_region
    _
  $region33: #{_lambda_.7} parent=0 // pred_fallthru
    _

// kernel: _lambda_.6
$region0: #{_lambda_.6}
  #allocation0 [shape = 'u32[]', space=smem, size = 0x4, offset = 0x4, fixed_abs, tag = 'smem constant byte address 0x4 - core index']
  #allocation1 [shape = 'u32[72,128]{1,0:T(1,128)}', space=vmem, size = 0x9000, scoped, tag = 'internal scratch']
  #allocation2 [shape = 'f32[1,16,128]{2,1,0:T(8,128)}', space=vmem, size = 0x2000, scoped, tag = 'scratch operand']
  %s0 = inlined_call_operand.vmem [shape: bf16[2,16,128], index: 0, kind: input, shape index: {}]
  %s1 = inlined_call_operand.vmem [shape: f32[1,128], index: 1, kind: input, shape index: {}]
  %s2 = inlined_call_operand.vmem [shape: f32[1,128], index: 2, kind: input, shape index: {}]
  %s3 = inlined_call_operand.hbm [shape: bf16[3,128,128], index: 3, kind: input, shape index: {}]
  %s4 = inlined_call_operand.vmem [shape: bf16[2,16,128], index: 4, kind: output, shape index: {0}]
  %s5 = inlined_call_operand.vmem [shape: f32[2,1,128], index: 5, kind: output, shape index: {1}]
  %s6 = inlined_call_operand.vmem [shape: f32[2,1,128], index: 6, kind: output, shape index: {2}]
  %7 = xla_tuple %s4, %s5, %s6
  %s8 = sld [smem:[#allocation0]]
  $region69: #{_lambda_.6} parent=0
    _
  %s10 = ssub.s32 1, %s8
  %s11 = scalar_select 0, %s10, %s8
  $region1: #{_lambda_.6} parent=0
    #allocation3 [shape = 'u8[98304]{0}', space=vmem, size = 0x18000, scoped, tag = 'input window, operand 3, single buffered']
    #allocation4 [shape = 's32[2]{0}', space=sflag, size = 0x8, scoped, tag = 'scoped memory for _lambda_.6']
    %12 = vsyncpa [#allocation4], 0
    loop: start=0, step=1, limit=4
    $region2: #{_lambda_.6} parent=1 // loop_pre_header
      _
    $region3: #{_lambda_.6} parent=1 // loop_header
      %s14 = sphi 0, %s18
      %p15 = scmp.ge.s32.totalorder %s14, 4
      %s24 = sphi 0, %s26
      %s27 = sphi 0, %s24
      %s28 = sphi 0, %s27
      %s44 = sphi 0, %s28
      %s48 = sphi 0, %s48
      %s50 = sphi 0, %s48
      %s51 = sphi 0, %s50
      %s65 = sphi 0, %s51
      %s69 = sphi 0, %s69
      %s71 = sphi 0, %s69
      %s72 = sphi 0, %s71
      %s86 = sphi 0, %s72
      %s90 = sphi 0, %s90
      %s92 = sphi 0, %s90
      %s93 = sphi 0, %s92
      %s107 = sphi 0, %s93
      %s113 = sphi 0, %s115
      %s116 = sphi 0, %s113
      %s117 = sphi 0, %s116
      %s133 = sphi 0, %s117
      %s139 = sphi 0, %s141
      %s142 = sphi 0, %s139
      %s143 = sphi 0, %s142
      %s159 = sphi 0, %s143
      %s165 = sphi 0, %s167
      %s168 = sphi 0, %s165
      %s169 = sphi 0, %s168
      %s185 = sphi 0, %s169
    $region4: #{_lambda_.6} parent=1 // loop_header_branch
      %17 = sbr.rel (%p15) target = $region8
    $region5: #{_lambda_.6} parent=1 // loop_body
      %s19 = ssub.s32 %s14, 1
      %s20 = ssub.s32 %s14, 2
      %s21 = sadd.s32 %s14, 1
      %s22 = ssub.s32 %s14, %s21
      %p23 = scmp.eq.s32.totalorder %s22, 0
      %s25 = sadd.s32 %s24, 1
      %s26 = scalar_select %p23, %s24, %s25
      %p29 = pneg %p23
      %p30 = scmp.eq.s32.totalorder %s14, 1
      %p31 = por %p29, %p30
      %p32 = scmp.ne.s32.totalorder %s24, %s27
      %p33 = scmp.eq.s32.totalorder %s14, 0
      %p34 = por %p32, %p33
      %p35 = scmp.ne.s32.totalorder %s24, %s27
      %p36 = scmp.eq.s32.totalorder %s19, 1
      %p37 = por %p35, %p36
      %p38 = scmp.ne.s32.totalorder %s27, %s28
      %p39 = scmp.eq.s32.totalorder %s19, 0
      %p40 = por %p38, %p39
      %p41 = scmp.ne.s32.totalorder %s27, %s28
      %p42 = scmp.eq.s32.totalorder %s20, 1
      %p43 = por %p41, %p42
      %p45 = scmp.ne.s32.totalorder %s28, %s44
      %p46 = scmp.eq.s32.totalorder %s20, 0
      %p47 = por %p45, %p46
      %s49 = sadd.s32 %s48, 1
      %p52 = scmp.eq.s32.totalorder %s14, 1
      %p53 = scmp.ne.s32.totalorder %s48, %s50
      %p54 = scmp.eq.s32.totalorder %s14, 0
      %p55 = por %p53, %p54
      %p56 = scmp.ne.s32.totalorder %s48, %s50
      %p57 = scmp.eq.s32.totalorder %s19, 1
      %p58 = por %p56, %p57
      %p59 = scmp.ne.s32.totalorder %s50, %s51
      %p60 = scmp.eq.s32.totalorder %s19, 0
      %p61 = por %p59, %p60
      %p62 = scmp.ne.s32.totalorder %s50, %s51
      %p63 = scmp.eq.s32.totalorder %s20, 1
      %p64 = por %p62, %p63
      %p66 = scmp.ne.s32.totalorder %s51, %s65
      %p67 = scmp.eq.s32.totalorder %s20, 0
      %p68 = por %p66, %p67
      %s70 = sadd.s32 %s69, 1
      %p73 = scmp.eq.s32.totalorder %s14, 1
      %p74 = scmp.ne.s32.totalorder %s69, %s71
      %p75 = scmp.eq.s32.totalorder %s14, 0
      %p76 = por %p74, %p75
      %p77 = scmp.ne.s32.totalorder %s69, %s71
      %p78 = scmp.eq.s32.totalorder %s19, 1
      %p79 = por %p77, %p78
      %p80 = scmp.ne.s32.totalorder %s71, %s72
      %p81 = scmp.eq.s32.totalorder %s19, 0
      %p82 = por %p80, %p81
      %p83 = scmp.ne.s32.totalorder %s71, %s72
      %p84 = scmp.eq.s32.totalorder %s20, 1
      %p85 = por %p83, %p84
      %p87 = scmp.ne.s32.totalorder %s72, %s86
      %p88 = scmp.eq.s32.totalorder %s20, 0
      %p89 = por %p87, %p88
      %s91 = sadd.s32 %s90, 1
      %p94 = scmp.eq.s32.totalorder %s14, 1
      %p95 = scmp.ne.s32.totalorder %s90, %s92
      %p96 = scmp.eq.s32.totalorder %s14, 0
      %p97 = por %p95, %p96
      %p98 = scmp.ne.s32.totalorder %s90, %s92
      %p99 = scmp.eq.s32.totalorder %s19, 1
      %p100 = por %p98, %p99
      %p101 = scmp.ne.s32.totalorder %s92, %s93
      %p102 = scmp.eq.s32.totalorder %s19, 0
      %p103 = por %p101, %p102
      %p104 = scmp.ne.s32.totalorder %s92, %s93
      %p105 = scmp.eq.s32.totalorder %s20, 1
      %p106 = por %p104, %p105
      %p108 = scmp.ne.s32.totalorder %s93, %s107
      %p109 = scmp.eq.s32.totalorder %s20, 0
      %p110 = por %p108, %p109
      %s111 = ssub.s32 %s14, %s21
      %p112 = scmp.eq.s32.totalorder %s111, 0
      %s114 = sadd.s32 %s113, 1
      %s115 = scalar_select %p112, %s113, %s114
      %p118 = pneg %p112
      %p119 = scmp.eq.s32.totalorder %s14, 1
      %p120 = por %p118, %p119
      %p121 = scmp.ne.s32.totalorder %s113, %s116
      %p122 = scmp.eq.s32.totalorder %s14, 0
      %p123 = por %p121, %p122
      %p124 = scmp.ne.s32.totalorder %s113, %s116
      %p125 = scmp.eq.s32.totalorder %s19, 1
      %p126 = por %p124, %p125
      %p127 = scmp.ne.s32.totalorder %s116, %s117
      %p128 = scmp.eq.s32.totalorder %s19, 0
      %p129 = por %p127, %p128
      %p130 = scmp.ne.s32.totalorder %s116, %s117
      %p131 = scmp.eq.s32.totalorder %s20, 1
      %p132 = por %p130, %p131
      %p134 = scmp.ne.s32.totalorder %s117, %s133
      %p135 = scmp.eq.s32.totalorder %s20, 0
      %p136 = por %p134, %p135
      %s137 = ssub.s32 %s14, %s21
      %p138 = scmp.eq.s32.totalorder %s137, 0
      %s140 = sadd.s32 %s139, 1
      %s141 = scalar_select %p138, %s139, %s140
      %p144 = pneg %p138
      %p145 = scmp.eq.s32.totalorder %s14, 1
      %p146 = por %p144, %p145
      %p147 = scmp.ne.s32.totalorder %s139, %s142
      %p148 = scmp.eq.s32.totalorder %s14, 0
      %p149 = por %p147, %p148
      %p150 = scmp.ne.s32.totalorder %s139, %s142
      %p151 = scmp.eq.s32.totalorder %s19, 1
      %p152 = por %p150, %p151
      %p153 = scmp.ne.s32.totalorder %s142, %s143
      %p154 = scmp.eq.s32.totalorder %s19, 0
      %p155 = por %p153, %p154
      %p156 = scmp.ne.s32.totalorder %s142, %s143
      %p157 = scmp.eq.s32.totalorder %s20, 1
      %p158 = por %p156, %p157
      %p160 = scmp.ne.s32.totalorder %s143, %s159
      %p161 = scmp.eq.s32.totalorder %s20, 0
      %p162 = por %p160, %p161
      %s163 = ssub.s32 %s14, %s21
      %p164 = scmp.eq.s32.totalorder %s163, 0
      %s166 = sadd.s32 %s165, 1
      %s167 = scalar_select %p164, %s165, %s166
      %p170 = pneg %p164
      %p171 = scmp.eq.s32.totalorder %s14, 1
      %p172 = por %p170, %p171
      %p173 = scmp.ne.s32.totalorder %s165, %s168
      %p174 = scmp.eq.s32.totalorder %s14, 0
      %p175 = por %p173, %p174
      %p176 = scmp.ne.s32.totalorder %s165, %s168
      %p177 = scmp.eq.s32.totalorder %s19, 1
      %p178 = por %p176, %p177
      %p179 = scmp.ne.s32.totalorder %s168, %s169
      %p180 = scmp.eq.s32.totalorder %s19, 0
      %p181 = por %p179, %p180
      %p182 = scmp.ne.s32.totalorder %s168, %s169
      %p183 = scmp.eq.s32.totalorder %s20, 1
      %p184 = por %p182, %p183
      %p186 = scmp.ne.s32.totalorder %s169, %s185
      %p187 = scmp.eq.s32.totalorder %s20, 0
      %p188 = por %p186, %p187
      %p189 = scmp.le.s32.totalorder 1, %s14
      %p190 = scmp.lt.s32.totalorder %s14, 3
      %p191 = pnand %p189, %p190
      %p192 = pneg %p191
      // Predicated region
      $region9: #{_lambda_.6} parent=5 // pred_check
        _
      $region10: #{_lambda_.6} parent=5 // pred_check_branch
        %194 = sbr.rel (%p191) target = $region12
      $region11: #{_lambda_.6} parent=5 // pred_region
        %s195 = ssub.s32 %s14, 1
        // Predicated region
        $region13: #{_lambda_.6} parent=11 // pred_check
          %p196 = pneg %p61
        $region14: #{_lambda_.6} parent=11 // pred_check_branch
          %198 = sbr.rel (%p196) target = $region16
        $region15: #{_lambda_.6} parent=11 // pred_region
          _
        $region16: #{_lambda_.6} parent=11 // pred_fallthru
          _
        // Predicated region
        $region17: #{_lambda_.6} parent=11 // pred_check
          %p199 = pneg %p82
        $region18: #{_lambda_.6} parent=11 // pred_check_branch
          %201 = sbr.rel (%p199) target = $region20
        $region19: #{_lambda_.6} parent=11 // pred_region
          _
        $region20: #{_lambda_.6} parent=11 // pred_fallthru
          _
        // Predicated region
        $region21: #{_lambda_.6} parent=11 // pred_check
          %p202 = pneg %p103
        $region22: #{_lambda_.6} parent=11 // pred_check_branch
          %204 = sbr.rel (%p202) target = $region24
        $region23: #{_lambda_.6} parent=11 // pred_region
          %206 = vsyncadd [#allocation4], 0
          %s207 = sshll.u32 %s3, 4
          %s208 = int_to_ptr.hbm [resolvable:$true] %s207
          %s209 = sshll.u32 [#allocation3], 4
          %s210 = int_to_ptr.vmem [resolvable:$true] %s209
          %215 = dma.hbm_to_vmem [thread:$0]  %s208, 3072, %s210, [#allocation4], 64, 64, 4
        $region24: #{_lambda_.6} parent=11 // pred_fallthru
          _
      $region12: #{_lambda_.6} parent=5 // pred_fallthru
        _
      %p216 = scmp.lt.s32.totalorder %s14, 2
      // Predicated region
      $region25: #{_lambda_.6} parent=5 // pred_check
        %p217 = pneg %p216
      $region26: #{_lambda_.6} parent=5 // pred_check_branch
        %219 = sbr.rel (%p217) target = $region28
      $region27: #{_lambda_.6} parent=5 // pred_region
        // Predicated region
        $region29: #{_lambda_.6} parent=27 // pred_check
          %p220 = pneg %p34
        $region30: #{_lambda_.6} parent=27 // pred_check_branch
          %222 = sbr.rel (%p220) target = $region32
        $region31: #{_lambda_.6} parent=27 // pred_region
          %p223 = scmp.lt.s32.totalorder %s14, 1
          %s224 = scalar_select %p223, %s14, 1
          %s225 = smul.addr %s224, 2
          %s226 = smul.addr %s225, 4
          %s227 = scalar_lea.vmem %s0, %s226
        $region32: #{_lambda_.6} parent=27 // pred_fallthru
          _
      $region28: #{_lambda_.6} parent=5 // pred_fallthru
        _
      %p228 = scmp.le.s32.totalorder 1, %s14
      %p229 = scmp.lt.s32.totalorder %s14, 3
      %p230 = pnand %p228, %p229
      %p231 = pneg %p230
      // Predicated region
      $region33: #{_lambda_.6} parent=5 // pred_check
        _
      $region34: #{_lambda_.6} parent=5 // pred_check_branch
        %233 = sbr.rel (%p230) target = $region36
      $region35: #{_lambda_.6} parent=5 // pred_region
        %s234 = ssub.s32 %s14, 1
        // Predicated region
        $region37: #{_lambda_.6} parent=35 // pred_check
          %p235 = pneg %p103
        $region38: #{_lambda_.6} parent=35 // pred_check_branch
          %237 = sbr.rel (%p235) target = $region40
        $region39: #{_lambda_.6} parent=35 // pred_region
          %239 = dma.done [#allocation4], 3072
        $region40: #{_lambda_.6} parent=35 // pred_fallthru
          _
        %p240 = scmp.lt.s32.totalorder %s19, 1
        %s241 = scalar_select %p240, %s19, 1
        %s242 = smul.addr %s241, 2
        %s243 = smul.addr %s242, 4
        %s244 = scalar_lea.vmem %s0, %s243
        %p245 = pneg %p40
        %p246 = pneg %p37
        %p247 = pneg %p61
        %p248 = pneg %p58
        %p249 = pneg %p82
        %p250 = pneg %p79
        %p251 = pneg %p103
        %p252 = pneg %p100
        %p253 = pneg %p129
        %p254 = pneg %p126
        %p255 = scmp.lt.s32.totalorder %s19, 1
        %s256 = scalar_select %p255, %s19, 1
        %s257 = smul.addr %s256, 2
        %s258 = smul.addr %s257, 4
        %s259 = scalar_lea.vmem %s4, %s258
        %p260 = pneg %p155
        %p261 = pneg %p152
        %p262 = scmp.lt.s32.totalorder %s19, 1
        %s263 = scalar_select %p262, %s19, 1
        %s264 = scalar_lea.vmem %s5, %s263
        %p265 = pneg %p181
        %p266 = pneg %p178
        %p267 = scmp.lt.s32.totalorder %s19, 1
        %s268 = scalar_select %p267, %s19, 1
        %s269 = scalar_lea.vmem %s6, %s268
        %p270 = scmp.lt.s32.totalorder %s19, 1
        %s271 = scalar_select %p270, %s19, 1
        %s272 = smul.addr %s271, 2
        %s273 = smul.addr %s272, 4
        %s274 = scalar_lea.vmem %s0, %s273
        %p275 = scmp.lt.s32.totalorder %s19, 1
        %s276 = scalar_select %p275, %s19, 1
        %s277 = smul.addr %s276, 2
        %s278 = smul.addr %s277, 4
        %s279 = scalar_lea.vmem %s4, %s278
        %p280 = scmp.lt.s32.totalorder %s19, 1
        %s281 = scalar_select %p280, %s19, 1
        %s282 = scalar_lea.vmem %s5, %s281
        %p283 = scmp.lt.s32.totalorder %s19, 1
        %s284 = scalar_select %p283, %s19, 1
        %s285 = scalar_lea.vmem %s6, %s284
        %v286 = vld [vmem:[%s1] sm:$0x1]
        %v287 = vld [vmem:[%s2] sm:$0x1]
        %v288 = vld [vmem:[%s274] sm:$0xf]
        %v289 = vld [vmem:[%s274 + $0x4] sm:$0xf]
        %v290 = vunpack.c.l.bf16 %v288
        %v291 = vunpack.c.l.bf16 %v289
        %v293 = vperm.slane %v286, 0
        %v295 = vmul.f32 %v290, %v293
        %v296 = vmul.f32 %v291, %v293
        %v298 = vperm.slane %v287, 0
        %v300 = vadd.f32 %v295, %v298
        %v301 = vadd.f32 %v296, %v298
        %v302 = vmax.f32 %v300, 0.0
        %v303 = vmax.f32 %v301, 0.0
        %v304 = vpack.c.bf16 %v303, %v302
        %s305 = scalar_lea.vmem [#allocation3], 64
        %v306 = vld [vmem:[%s305] sm:$0xf]
        %v307 = vld [vmem:[%s305 + $0x4] sm:$0xf]
        %v308 = vld [vmem:[%s305 + $0x8] sm:$0xf]
        %v309 = vld [vmem:[%s305 + $0xc] sm:$0xf]
        %v310 = vld [vmem:[%s305 + $0x10] sm:$0xf]
        %v311 = vld [vmem:[%s305 + $0x14] sm:$0xf]
        %v312 = vld [vmem:[%s305 + $0x18] sm:$0xf]
        %v313 = vld [vmem:[%s305 + $0x1c] sm:$0xf]
        %v314 = vld [vmem:[%s305 + $0x20] sm:$0xf]
        %v315 = vld [vmem:[%s305 + $0x24] sm:$0xf]
        %v316 = vld [vmem:[%s305 + $0x28] sm:$0xf]
        %v317 = vld [vmem:[%s305 + $0x2c] sm:$0xf]
        %v318 = vld [vmem:[%s305 + $0x30] sm:$0xf]
        %v319 = vld [vmem:[%s305 + $0x34] sm:$0xf]
        %v320 = vld [vmem:[%s305 + $0x38] sm:$0xf]
        %v321 = vld [vmem:[%s305 + $0x3c] sm:$0xf]
        %v338 = vunpack.c.l.b16 %v306
        %v339 = vunpack.c.l.b16 %v307
        %v340 = vunpack.c.l.b16 %v308
        %v341 = vunpack.c.l.b16 %v309
        %v342 = vunpack.c.l.b16 %v310
        %v343 = vunpack.c.l.b16 %v311
        %v344 = vunpack.c.l.b16 %v312
        %v345 = vunpack.c.l.b16 %v313
        %v346 = vunpack.c.l.b16 %v314
        %v347 = vunpack.c.l.b16 %v315
        %v348 = vunpack.c.l.b16 %v316
        %v349 = vunpack.c.l.b16 %v317
        %v350 = vunpack.c.l.b16 %v318
        %v351 = vunpack.c.l.b16 %v319
        %v352 = vunpack.c.l.b16 %v320
        %v353 = vunpack.c.l.b16 %v321
        %v354 = vpack.c.b16 %v339, %v338
        %v355 = vpack.c.b16 %v341, %v340
        %v356 = vpack.c.b16 %v343, %v342
        %v357 = vpack.c.b16 %v345, %v344
        %v358 = vpack.c.b16 %v347, %v346
        %v359 = vpack.c.b16 %v349, %v348
        %v360 = vpack.c.b16 %v351, %v350
        %v361 = vpack.c.b16 %v353, %v352
        %370 = vmatpush.bf16.msra.mxu0 %v361
        %371 = vmatpush.bf16.msra.mxu0 %v360
        %372 = vmatpush.bf16.msra.mxu0 %v359
        %373 = vmatpush.bf16.msra.mxu0 %v358
        %374 = vmatpush.bf16.msra.mxu0 %v357
        %375 = vmatpush.bf16.msra.mxu0 %v356
        %376 = vmatpush.bf16.msra.mxu0 %v355
        %377 = vmatpush.bf16.msra.mxu0 %v354
        %378 = vmatmul.bf16.gmra.mxu0 %v304
        %v379 = vpop.f32.mrf.mxu0
        %v380 = vadd.f32 0.0, %v379
        %v381 = vpop.f32.mrf.mxu0
        %v382 = vadd.f32 0.0, %v381
        %383 = vdwg.mxu0
        %384 = vst [vmem:[#allocation2] sm:$0xff] %v380
        %385 = vst [vmem:[#allocation2 + $0x8] sm:$0xff] %v382
        %v386 = vld [vmem:[#allocation3] sm:$0xf]
        %v387 = vld [vmem:[#allocation3 + $0x4] sm:$0xf]
        %v388 = vld [vmem:[#allocation3 + $0x8] sm:$0xf]
        %v389 = vld [vmem:[#allocation3 + $0xc] sm:$0xf]
        %v390 = vld [vmem:[#allocation3 + $0x10] sm:$0xf]
        %v391 = vld [vmem:[#allocation3 + $0x14] sm:$0xf]
        %v392 = vld [vmem:[#allocation3 + $0x18] sm:$0xf]
        %v393 = vld [vmem:[#allocation3 + $0x1c] sm:$0xf]
        %v394 = vld [vmem:[#allocation3 + $0x20] sm:$0xf]
        %v395 = vld [vmem:[#allocation3 + $0x24] sm:$0xf]
        %v396 = vld [vmem:[#allocation3 + $0x28] sm:$0xf]
        %v397 = vld [vmem:[#allocation3 + $0x2c] sm:$0xf]
        %v398 = vld [vmem:[#allocation3 + $0x30] sm:$0xf]
        %v399 = vld [vmem:[#allocation3 + $0x34] sm:$0xf]
        %v400 = vld [vmem:[#allocation3 + $0x38] sm:$0xf]
        %v401 = vld [vmem:[#allocation3 + $0x3c] sm:$0xf]
        %v418 = vunpack.c.l.b16 %v386
        %v419 = vunpack.c.l.b16 %v387
        %v420 = vunpack.c.l.b16 %v388
        %v421 = vunpack.c.l.b16 %v389
        %v422 = vunpack.c.l.b16 %v390
        %v423 = vunpack.c.l.b16 %v391
        %v424 = vunpack.c.l.b16 %v392
        %v425 = vunpack.c.l.b16 %v393
        %v426 = vunpack.c.l.b16 %v394
        %v427 = vunpack.c.l.b16 %v395
        %v428 = vunpack.c.l.b16 %v396
        %v429 = vunpack.c.l.b16 %v397
        %v430 = vunpack.c.l.b16 %v398
        %v431 = vunpack.c.l.b16 %v399
        %v432 = vunpack.c.l.b16 %v400
        %v433 = vunpack.c.l.b16 %v401
        %v434 = vpack.c.b16 %v419, %v418
        %v435 = vpack.c.b16 %v421, %v420
        %v436 = vpack.c.b16 %v423, %v422
        %v437 = vpack.c.b16 %v425, %v424
        %v438 = vpack.c.b16 %v427, %v426
        %v439 = vpack.c.b16 %v429, %v428
        %v440 = vpack.c.b16 %v431, %v430
        %v441 = vpack.c.b16 %v433, %v432
        %450 = vmatpush.bf16.msra.mxu0 %v441
        %451 = vmatpush.bf16.msra.mxu0 %v440
        %452 = vmatpush.bf16.msra.mxu0 %v439
        %453 = vmatpush.bf16.msra.mxu0 %v438
        %454 = vmatpush.bf16.msra.mxu0 %v437
        %455 = vmatpush.bf16.msra.mxu0 %v436
        %456 = vmatpush.bf16.msra.mxu0 %v435
        %457 = vmatpush.bf16.msra.mxu0 %v434
        %458 = vmatmul.bf16.gmra.mxu0 %v304
        %v459 = vpop.f32.mrf.mxu0
        %v460 = vadd.f32 0.0, %v459
        %v461 = vpop.f32.mrf.mxu0
        %v462 = vadd.f32 0.0, %v461
        %463 = vdwg.mxu0
        %v464 = vld [vmem:[#allocation2 + $0x1] sm:$0xff]
        %v465 = vld [vmem:[#allocation2 + $0x9] sm:$0x7f]
        %v466 = vadd.f32 %v464, %v460
        %v467 = vadd.f32 %v465, %v462
        %468 = vst [vmem:[#allocation2 + $0x1] sm:$0xff] %v466
        %469 = vst [vmem:[#allocation2 + $0x9] sm:$0x7f] %v467
        %s470 = scalar_lea.vmem [#allocation3], 128
        %v471 = vld [vmem:[%s470] sm:$0xf]
        %v472 = vld [vmem:[%s470 + $0x4] sm:$0xf]
        %v473 = vld [vmem:[%s470 + $0x8] sm:$0xf]
        %v474 = vld [vmem:[%s470 + $0xc] sm:$0xf]
        %v475 = vld [vmem:[%s470 + $0x10] sm:$0xf]
        %v476 = vld [vmem:[%s470 + $0x14] sm:$0xf]
        %v477 = vld [vmem:[%s470 + $0x18] sm:$0xf]
        %v478 = vld [vmem:[%s470 + $0x1c] sm:$0xf]
        %v479 = vld [vmem:[%s470 + $0x20] sm:$0xf]
        %v480 = vld [vmem:[%s470 + $0x24] sm:$0xf]
        %v481 = vld [vmem:[%s470 + $0x28] sm:$0xf]
        %v482 = vld [vmem:[%s470 + $0x2c] sm:$0xf]
        %v483 = vld [vmem:[%s470 + $0x30] sm:$0xf]
        %v484 = vld [vmem:[%s470 + $0x34] sm:$0xf]
        %v485 = vld [vmem:[%s470 + $0x38] sm:$0xf]
        %v486 = vld [vmem:[%s470 + $0x3c] sm:$0xf]
        %v503 = vunpack.c.l.b16 %v471
        %v504 = vunpack.c.l.b16 %v472
        %v505 = vunpack.c.l.b16 %v473
        %v506 = vunpack.c.l.b16 %v474
        %v507 = vunpack.c.l.b16 %v475
        %v508 = vunpack.c.l.b16 %v476
        %v509 = vunpack.c.l.b16 %v477
        %v510 = vunpack.c.l.b16 %v478
        %v511 = vunpack.c.l.b16 %v479
        %v512 = vunpack.c.l.b16 %v480
        %v513 = vunpack.c.l.b16 %v481
        %v514 = vunpack.c.l.b16 %v482
        %v515 = vunpack.c.l.b16 %v483
        %v516 = vunpack.c.l.b16 %v484
        %v517 = vunpack.c.l.b16 %v485
        %v518 = vunpack.c.l.b16 %v486
        %v519 = vpack.c.b16 %v504, %v503
        %v520 = vpack.c.b16 %v506, %v505
        %v521 = vpack.c.b16 %v508, %v507
        %v522 = vpack.c.b16 %v510, %v509
        %v523 = vpack.c.b16 %v512, %v511
        %v524 = vpack.c.b16 %v514, %v513
        %v525 = vpack.c.b16 %v516, %v515
        %v526 = vpack.c.b16 %v518, %v517
        %535 = vmatpush.bf16.msra.mxu0 %v526
        %536 = vmatpush.bf16.msra.mxu0 %v525
        %537 = vmatpush.bf16.msra.mxu0 %v524
        %538 = vmatpush.bf16.msra.mxu0 %v523
        %539 = vmatpush.bf16.msra.mxu0 %v522
        %540 = vmatpush.bf16.msra.mxu0 %v521
        %541 = vmatpush.bf16.msra.mxu0 %v520
        %542 = vmatpush.bf16.msra.mxu0 %v519
        %543 = vmatmul.bf16.gmra.mxu0 %v304
        %v544 = vpop.f32.mrf.mxu0
        %v545 = vadd.f32 0.0, %v544
        %v546 = vpop.f32.mrf.mxu0
        %v547 = vadd.f32 0.0, %v546
        %548 = vdwg.mxu0
        %v549 = vld [vmem:[#allocation2] sm:$0xff]
        %v550 = vld [vmem:[#allocation2 + $0x8] sm:$0x7f]
        %vm553 = vcmask 1046528
        %v554 = vrot.slane %v545, 1
        %v555 = vrot.slane %v547, 1
        %v556 = vsel %vm553, %v554, %v555
        %v559 = vadd.f32 %v549, %v556
        %v560 = vadd.f32 %v550, %v555
        %561 = vst [vmem:[#allocation2] sm:$0xff] %v559
        %562 = vst [vmem:[#allocation2 + $0x8] sm:$0x7f] %v560
        %v563 = vld [vmem:[#allocation2] sm:$0xff]
        %v564 = vld [vmem:[#allocation2 + $0x8] sm:$0xff]
        %v565 = vpack.c.bf16 %v563, %v563
        %v566 = vpack.c.bf16 %v564, %v564
        %567 = vst [vmem:[%s279] sm:$0xf] %v565
        %568 = vst [vmem:[%s279 + $0x4] sm:$0xf] %v566
        %v569 = vadd.f32 %v563, %v564
        %v570 = vrot.slane %v569, 4
        %v571 = vadd.f32 %v569, %v570
        %v572 = vrot.slane %v571, 2
        %v573 = vadd.f32 %v571, %v572
        %v574 = vrot.slane %v573, 1
        %v575 = vadd.f32 %v573, %v574
        %v576 = vadd.f32 %v575, 0.0
        %v577 = vmul.f32 %v563, %v563
        %v578 = vmul.f32 %v564, %v564
        %v579 = vadd.f32 %v577, %v578
        %v580 = vrot.slane %v579, 4
        %v581 = vadd.f32 %v579, %v580
        %v582 = vrot.slane %v581, 2
        %v583 = vadd.f32 %v581, %v582
        %v584 = vrot.slane %v583, 1
        %v585 = vadd.f32 %v583, %v584
        %v586 = vadd.f32 %v585, 0.0
        %587 = vst [vmem:[%s282] sm:$0x1] %v576
        %588 = vst [vmem:[%s285] sm:$0x1] %v586
        %p589 = scmp.lt.s32.totalorder %s19, 1
        %s590 = scalar_select %p589, %s19, 1
        %s591 = smul.addr %s590, 2
        %s592 = smul.addr %s591, 4
        %s593 = scalar_lea.vmem %s4, %s592
        %p594 = scmp.lt.s32.totalorder %s19, 1
        %s595 = scalar_select %p594, %s19, 1
        %s596 = scalar_lea.vmem %s5, %s595
        %p597 = scmp.lt.s32.totalorder %s19, 1
        %s598 = scalar_select %p597, %s19, 1
        %s599 = scalar_lea.vmem %s6, %s598
        // Predicated region
        $region41: #{_lambda_.6} parent=35 // pred_check
          %p600 = pneg %p126
        $region42: #{_lambda_.6} parent=35 // pred_check_branch
          %602 = sbr.rel (%p600) target = $region44
        $region43: #{_lambda_.6} parent=35 // pred_region
          _
        $region44: #{_lambda_.6} parent=35 // pred_fallthru
          _
        // Predicated region
        $region45: #{_lambda_.6} parent=35 // pred_check
          %p603 = pneg %p152
        $region46: #{_lambda_.6} parent=35 // pred_check_branch
          %605 = sbr.rel (%p603) target = $region48
        $region47: #{_lambda_.6} parent=35 // pred_region
          _
        $region48: #{_lambda_.6} parent=35 // pred_fallthru
          _
        // Predicated region
        $region49: #{_lambda_.6} parent=35 // pred_check
          %p606 = pneg %p178
        $region50: #{_lambda_.6} parent=35 // pred_check_branch
          %608 = sbr.rel (%p606) target = $region52
        $region51: #{_lambda_.6} parent=35 // pred_region
          _
        $region52: #{_lambda_.6} parent=35 // pred_fallthru
          _
      $region36: #{_lambda_.6} parent=5 // pred_fallthru
        _
      %p609 = scmp.le.s32.totalorder 2, %s14
      // Predicated region
      $region53: #{_lambda_.6} parent=5 // pred_check
        %p610 = pneg %p609
      $region54: #{_lambda_.6} parent=5 // pred_check_branch
        %612 = sbr.rel (%p610) target = $region56
      $region55: #{_lambda_.6} parent=5 // pred_region
        %s613 = ssub.s32 %s14, 2
        // Predicated region
        $region57: #{_lambda_.6} parent=55 // pred_check
          %p614 = pneg %p132
        $region58: #{_lambda_.6} parent=55 // pred_check_branch
          %616 = sbr.rel (%p614) target = $region60
        $region59: #{_lambda_.6} parent=55 // pred_region
          %p617 = scmp.lt.s32.totalorder %s20, 1
          %s618 = scalar_select %p617, %s20, 1
          %s619 = smul.addr %s618, 2
          %s620 = smul.addr %s619, 4
          %s621 = scalar_lea.vmem %s4, %s620
        $region60: #{_lambda_.6} parent=55 // pred_fallthru
          _
        // Predicated region
        $region61: #{_lambda_.6} parent=55 // pred_check
          %p622 = pneg %p158
        $region62: #{_lambda_.6} parent=55 // pred_check_branch
          %624 = sbr.rel (%p622) target = $region64
        $region63: #{_lambda_.6} parent=55 // pred_region
          %p625 = scmp.lt.s32.totalorder %s20, 1
          %s626 = scalar_select %p625, %s20, 1
          %s627 = scalar_lea.vmem %s5, %s626
        $region64: #{_lambda_.6} parent=55 // pred_fallthru
          _
        // Predicated region
        $region65: #{_lambda_.6} parent=55 // pred_check
          %p628 = pneg %p184
        $region66: #{_lambda_.6} parent=55 // pred_check_branch
          %630 = sbr.rel (%p628) target = $region68
        $region67: #{_lambda_.6} parent=55 // pred_region
          %p631 = scmp.lt.s32.totalorder %s20, 1
          %s632 = scalar_select %p631, %s20, 1
          %s633 = scalar_lea.vmem %s6, %s632
        $region68: #{_lambda_.6} parent=55 // pred_fallthru
          _
      $region56: #{_lambda_.6} parent=5 // pred_fallthru
        _
    $region6: #{_lambda_.6} parent=1 // loop_footer
      %s18 = sadd.s32 1, %s14
    $region7: #{_lambda_.6} parent=1 // loop_footer_branch
      %13 = sbr.rel target = $region3
    $region8: #{_lambda_.6} parent=1 // loop_exit
      _
    %634 = vsyncpa [#allocation4], 1
    %s635 = scalar_lea.sflag [#allocation4], 1
    %636 = vsyncpa %s635, 1

// kernel: _lambda_.5
$region0: #{_lambda_.5}
  #allocation0 [shape = 'u32[]', space=smem, size = 0x4, offset = 0x4, fixed_abs, tag = 'smem constant byte address 0x4 - core index']
  #allocation1 [shape = 'u32[72,128]{1,0:T(1,128)}', space=vmem, size = 0x9000, scoped, tag = 'internal scratch']
  #allocation2 [shape = 'f32[1,16,128]{2,1,0:T(8,128)}', space=vmem, size = 0x2000, scoped, tag = 'scratch operand']
  %s0 = inlined_call_operand.vmem [shape: bf16[2,16,128], index: 0, kind: input, shape index: {}]
  %s1 = inlined_call_operand.vmem [shape: f32[1,128], index: 1, kind: input, shape index: {}]
  %s2 = inlined_call_operand.vmem [shape: f32[1,128], index: 2, kind: input, shape index: {}]
  %s3 = inlined_call_operand.hbm [shape: bf16[5,128,128], index: 3, kind: input, shape index: {}]
  %s4 = inlined_call_operand.vmem [shape: bf16[2,16,128], index: 4, kind: output, shape index: {0}]
  %s5 = inlined_call_operand.vmem [shape: f32[2,1,128], index: 5, kind: output, shape index: {1}]
  %s6 = inlined_call_operand.vmem [shape: f32[2,1,128], index: 6, kind: output, shape index: {2}]
  %7 = xla_tuple %s4, %s5, %s6
  %s8 = sld [smem:[#allocation0]]
  $region69: #{_lambda_.5} parent=0
    _
  %s10 = ssub.s32 1, %s8
  %s11 = scalar_select 0, %s10, %s8
  $region1: #{_lambda_.5} parent=0
    #allocation3 [shape = 'u8[163840]{0}', space=vmem, size = 0x28000, scoped, tag = 'input window, operand 3, single buffered']
    #allocation4 [shape = 's32[2]{0}', space=sflag, size = 0x8, scoped, tag = 'scoped memory for _lambda_.5']
    %12 = vsyncpa [#allocation4], 0
    loop: start=0, step=1, limit=4
    $region2: #{_lambda_.5} parent=1 // loop_pre_header
      _
    $region3: #{_lambda_.5} parent=1 // loop_header
      %s14 = sphi 0, %s18
      %p15 = scmp.ge.s32.totalorder %s14, 4
      %s24 = sphi 0, %s26
      %s27 = sphi 0, %s24
      %s28 = sphi 0, %s27
      %s44 = sphi 0, %s28
      %s48 = sphi 0, %s48
      %s50 = sphi 0, %s48
      %s51 = sphi 0, %s50
      %s65 = sphi 0, %s51
      %s69 = sphi 0, %s69
      %s71 = sphi 0, %s69
      %s72 = sphi 0, %s71
      %s86 = sphi 0, %s72
      %s90 = sphi 0, %s90
      %s92 = sphi 0, %s90
      %s93 = sphi 0, %s92
      %s107 = sphi 0, %s93
      %s113 = sphi 0, %s115
      %s116 = sphi 0, %s113
      %s117 = sphi 0, %s116
      %s133 = sphi 0, %s117
      %s139 = sphi 0, %s141
      %s142 = sphi 0, %s139
      %s143 = sphi 0, %s142
      %s159 = sphi 0, %s143
      %s165 = sphi 0, %s167
      %s168 = sphi 0, %s165
      %s169 = sphi 0, %s168
      %s185 = sphi 0, %s169
    $region4: #{_lambda_.5} parent=1 // loop_header_branch
      %17 = sbr.rel (%p15) target = $region8
    $region5: #{_lambda_.5} parent=1 // loop_body
      %s19 = ssub.s32 %s14, 1
      %s20 = ssub.s32 %s14, 2
      %s21 = sadd.s32 %s14, 1
      %s22 = ssub.s32 %s14, %s21
      %p23 = scmp.eq.s32.totalorder %s22, 0
      %s25 = sadd.s32 %s24, 1
      %s26 = scalar_select %p23, %s24, %s25
      %p29 = pneg %p23
      %p30 = scmp.eq.s32.totalorder %s14, 1
      %p31 = por %p29, %p30
      %p32 = scmp.ne.s32.totalorder %s24, %s27
      %p33 = scmp.eq.s32.totalorder %s14, 0
      %p34 = por %p32, %p33
      %p35 = scmp.ne.s32.totalorder %s24, %s27
      %p36 = scmp.eq.s32.totalorder %s19, 1
      %p37 = por %p35, %p36
      %p38 = scmp.ne.s32.totalorder %s27, %s28
      %p39 = scmp.eq.s32.totalorder %s19, 0
      %p40 = por %p38, %p39
      %p41 = scmp.ne.s32.totalorder %s27, %s28
      %p42 = scmp.eq.s32.totalorder %s20, 1
      %p43 = por %p41, %p42
      %p45 = scmp.ne.s32.totalorder %s28, %s44
      %p46 = scmp.eq.s32.totalorder %s20, 0
      %p47 = por %p45, %p46
      %s49 = sadd.s32 %s48, 1
      %p52 = scmp.eq.s32.totalorder %s14, 1
      %p53 = scmp.ne.s32.totalorder %s48, %s50
      %p54 = scmp.eq.s32.totalorder %s14, 0
      %p55 = por %p53, %p54
      %p56 = scmp.ne.s32.totalorder %s48, %s50
      %p57 = scmp.eq.s32.totalorder %s19, 1
      %p58 = por %p56, %p57
      %p59 = scmp.ne.s32.totalorder %s50, %s51
      %p60 = scmp.eq.s32.totalorder %s19, 0
      %p61 = por %p59, %p60
      %p62 = scmp.ne.s32.totalorder %s50, %s51
      %p63 = scmp.eq.s32.totalorder %s20, 1
      %p64 = por %p62, %p63
      %p66 = scmp.ne.s32.totalorder %s51, %s65
      %p67 = scmp.eq.s32.totalorder %s20, 0
      %p68 = por %p66, %p67
      %s70 = sadd.s32 %s69, 1
      %p73 = scmp.eq.s32.totalorder %s14, 1
      %p74 = scmp.ne.s32.totalorder %s69, %s71
      %p75 = scmp.eq.s32.totalorder %s14, 0
      %p76 = por %p74, %p75
      %p77 = scmp.ne.s32.totalorder %s69, %s71
      %p78 = scmp.eq.s32.totalorder %s19, 1
      %p79 = por %p77, %p78
      %p80 = scmp.ne.s32.totalorder %s71, %s72
      %p81 = scmp.eq.s32.totalorder %s19, 0
      %p82 = por %p80, %p81
      %p83 = scmp.ne.s32.totalorder %s71, %s72
      %p84 = scmp.eq.s32.totalorder %s20, 1
      %p85 = por %p83, %p84
      %p87 = scmp.ne.s32.totalorder %s72, %s86
      %p88 = scmp.eq.s32.totalorder %s20, 0
      %p89 = por %p87, %p88
      %s91 = sadd.s32 %s90, 1
      %p94 = scmp.eq.s32.totalorder %s14, 1
      %p95 = scmp.ne.s32.totalorder %s90, %s92
      %p96 = scmp.eq.s32.totalorder %s14, 0
      %p97 = por %p95, %p96
      %p98 = scmp.ne.s32.totalorder %s90, %s92
      %p99 = scmp.eq.s32.totalorder %s19, 1
      %p100 = por %p98, %p99
      %p101 = scmp.ne.s32.totalorder %s92, %s93
      %p102 = scmp.eq.s32.totalorder %s19, 0
      %p103 = por %p101, %p102
      %p104 = scmp.ne.s32.totalorder %s92, %s93
      %p105 = scmp.eq.s32.totalorder %s20, 1
      %p106 = por %p104, %p105
      %p108 = scmp.ne.s32.totalorder %s93, %s107
      %p109 = scmp.eq.s32.totalorder %s20, 0
      %p110 = por %p108, %p109
      %s111 = ssub.s32 %s14, %s21
      %p112 = scmp.eq.s32.totalorder %s111, 0
      %s114 = sadd.s32 %s113, 1
      %s115 = scalar_select %p112, %s113, %s114
      %p118 = pneg %p112
      %p119 = scmp.eq.s32.totalorder %s14, 1
      %p120 = por %p118, %p119
      %p121 = scmp.ne.s32.totalorder %s113, %s116
      %p122 = scmp.eq.s32.totalorder %s14, 0
      %p123 = por %p121, %p122
      %p124 = scmp.ne.s32.totalorder %s113, %s116
      %p125 = scmp.eq.s32.totalorder %s19, 1
      %p126 = por %p124, %p125
      %p127 = scmp.ne.s32.totalorder %s116, %s117
      %p128 = scmp.eq.s32.totalorder %s19, 0
      %p129 = por %p127, %p128
      %p130 = scmp.ne.s32.totalorder %s116, %s117
      %p131 = scmp.eq.s32.totalorder %s20, 1
      %p132 = por %p130, %p131
      %p134 = scmp.ne.s32.totalorder %s117, %s133
      %p135 = scmp.eq.s32.totalorder %s20, 0
      %p136 = por %p134, %p135
      %s137 = ssub.s32 %s14, %s21
      %p138 = scmp.eq.s32.totalorder %s137, 0
      %s140 = sadd.s32 %s139, 1
      %s141 = scalar_select %p138, %s139, %s140
      %p144 = pneg %p138
      %p145 = scmp.eq.s32.totalorder %s14, 1
      %p146 = por %p144, %p145
      %p147 = scmp.ne.s32.totalorder %s139, %s142
      %p148 = scmp.eq.s32.totalorder %s14, 0
      %p149 = por %p147, %p148
      %p150 = scmp.ne.s32.totalorder %s139, %s142
      %p151 = scmp.eq.s32.totalorder %s19, 1
      %p152 = por %p150, %p151
      %p153 = scmp.ne.s32.totalorder %s142, %s143
      %p154 = scmp.eq.s32.totalorder %s19, 0
      %p155 = por %p153, %p154
      %p156 = scmp.ne.s32.totalorder %s142, %s143
      %p157 = scmp.eq.s32.totalorder %s20, 1
      %p158 = por %p156, %p157
      %p160 = scmp.ne.s32.totalorder %s143, %s159
      %p161 = scmp.eq.s32.totalorder %s20, 0
      %p162 = por %p160, %p161
      %s163 = ssub.s32 %s14, %s21
      %p164 = scmp.eq.s32.totalorder %s163, 0
      %s166 = sadd.s32 %s165, 1
      %s167 = scalar_select %p164, %s165, %s166
      %p170 = pneg %p164
      %p171 = scmp.eq.s32.totalorder %s14, 1
      %p172 = por %p170, %p171
      %p173 = scmp.ne.s32.totalorder %s165, %s168
      %p174 = scmp.eq.s32.totalorder %s14, 0
      %p175 = por %p173, %p174
      %p176 = scmp.ne.s32.totalorder %s165, %s168
      %p177 = scmp.eq.s32.totalorder %s19, 1
      %p178 = por %p176, %p177
      %p179 = scmp.ne.s32.totalorder %s168, %s169
      %p180 = scmp.eq.s32.totalorder %s19, 0
      %p181 = por %p179, %p180
      %p182 = scmp.ne.s32.totalorder %s168, %s169
      %p183 = scmp.eq.s32.totalorder %s20, 1
      %p184 = por %p182, %p183
      %p186 = scmp.ne.s32.totalorder %s169, %s185
      %p187 = scmp.eq.s32.totalorder %s20, 0
      %p188 = por %p186, %p187
      %p189 = scmp.le.s32.totalorder 1, %s14
      %p190 = scmp.lt.s32.totalorder %s14, 3
      %p191 = pnand %p189, %p190
      %p192 = pneg %p191
      // Predicated region
      $region9: #{_lambda_.5} parent=5 // pred_check
        _
      $region10: #{_lambda_.5} parent=5 // pred_check_branch
        %194 = sbr.rel (%p191) target = $region12
      $region11: #{_lambda_.5} parent=5 // pred_region
        %s195 = ssub.s32 %s14, 1
        // Predicated region
        $region13: #{_lambda_.5} parent=11 // pred_check
          %p196 = pneg %p61
        $region14: #{_lambda_.5} parent=11 // pred_check_branch
          %198 = sbr.rel (%p196) target = $region16
        $region15: #{_lambda_.5} parent=11 // pred_region
          _
        $region16: #{_lambda_.5} parent=11 // pred_fallthru
          _
        // Predicated region
        $region17: #{_lambda_.5} parent=11 // pred_check
          %p199 = pneg %p82
        $region18: #{_lambda_.5} parent=11 // pred_check_branch
          %201 = sbr.rel (%p199) target = $region20
        $region19: #{_lambda_.5} parent=11 // pred_region
          _
        $region20: #{_lambda_.5} parent=11 // pred_fallthru
          _
        // Predicated region
        $region21: #{_lambda_.5} parent=11 // pred_check
          %p202 = pneg %p103
        $region22: #{_lambda_.5} parent=11 // pred_check_branch
          %204 = sbr.rel (%p202) target = $region24
        $region23: #{_lambda_.5} parent=11 // pred_region
          %206 = vsyncadd [#allocation4], 0
          %s207 = sshll.u32 %s3, 4
          %s208 = int_to_ptr.hbm [resolvable:$true] %s207
          %s209 = sshll.u32 [#allocation3], 4
          %s210 = int_to_ptr.vmem [resolvable:$true] %s209
          %215 = dma.hbm_to_vmem [thread:$0]  %s208, 5120, %s210, [#allocation4], 64, 64, 4
        $region24: #{_lambda_.5} parent=11 // pred_fallthru
          _
      $region12: #{_lambda_.5} parent=5 // pred_fallthru
        _
      %p216 = scmp.lt.s32.totalorder %s14, 2
      // Predicated region
      $region25: #{_lambda_.5} parent=5 // pred_check
        %p217 = pneg %p216
      $region26: #{_lambda_.5} parent=5 // pred_check_branch
        %219 = sbr.rel (%p217) target = $region28
      $region27: #{_lambda_.5} parent=5 // pred_region
        // Predicated region
        $region29: #{_lambda_.5} parent=27 // pred_check
          %p220 = pneg %p34
        $region30: #{_lambda_.5} parent=27 // pred_check_branch
          %222 = sbr.rel (%p220) target = $region32
        $region31: #{_lambda_.5} parent=27 // pred_region
          %p223 = scmp.lt.s32.totalorder %s14, 1
          %s224 = scalar_select %p223, %s14, 1
          %s225 = smul.addr %s224, 2
          %s226 = smul.addr %s225, 4
          %s227 = scalar_lea.vmem %s0, %s226
        $region32: #{_lambda_.5} parent=27 // pred_fallthru
          _
      $region28: #{_lambda_.5} parent=5 // pred_fallthru
        _
      %p228 = scmp.le.s32.totalorder 1, %s14
      %p229 = scmp.lt.s32.totalorder %s14, 3
      %p230 = pnand %p228, %p229
      %p231 = pneg %p230
      // Predicated region
      $region33: #{_lambda_.5} parent=5 // pred_check
        _
      $region34: #{_lambda_.5} parent=5 // pred_check_branch
        %233 = sbr.rel (%p230) target = $region36
      $region35: #{_lambda_.5} parent=5 // pred_region
        %s234 = ssub.s32 %s14, 1
        // Predicated region
        $region37: #{_lambda_.5} parent=35 // pred_check
          %p235 = pneg %p103
        $region38: #{_lambda_.5} parent=35 // pred_check_branch
          %237 = sbr.rel (%p235) target = $region40
        $region39: #{_lambda_.5} parent=35 // pred_region
          %239 = dma.done [#allocation4], 5120
        $region40: #{_lambda_.5} parent=35 // pred_fallthru
          _
        %p240 = scmp.lt.s32.totalorder %s19, 1
        %s241 = scalar_select %p240, %s19, 1
        %s242 = smul.addr %s241, 2
        %s243 = smul.addr %s242, 4
        %s244 = scalar_lea.vmem %s0, %s243
        %p245 = pneg %p40
        %p246 = pneg %p37
        %p247 = pneg %p61
        %p248 = pneg %p58
        %p249 = pneg %p82
        %p250 = pneg %p79
        %p251 = pneg %p103
        %p252 = pneg %p100
        %p253 = pneg %p129
        %p254 = pneg %p126
        %p255 = scmp.lt.s32.totalorder %s19, 1
        %s256 = scalar_select %p255, %s19, 1
        %s257 = smul.addr %s256, 2
        %s258 = smul.addr %s257, 4
        %s259 = scalar_lea.vmem %s4, %s258
        %p260 = pneg %p155
        %p261 = pneg %p152
        %p262 = scmp.lt.s32.totalorder %s19, 1
        %s263 = scalar_select %p262, %s19, 1
        %s264 = scalar_lea.vmem %s5, %s263
        %p265 = pneg %p181
        %p266 = pneg %p178
        %p267 = scmp.lt.s32.totalorder %s19, 1
        %s268 = scalar_select %p267, %s19, 1
        %s269 = scalar_lea.vmem %s6, %s268
        %p270 = scmp.lt.s32.totalorder %s19, 1
        %s271 = scalar_select %p270, %s19, 1
        %s272 = smul.addr %s271, 2
        %s273 = smul.addr %s272, 4
        %s274 = scalar_lea.vmem %s0, %s273
        %p275 = scmp.lt.s32.totalorder %s19, 1
        %s276 = scalar_select %p275, %s19, 1
        %s277 = smul.addr %s276, 2
        %s278 = smul.addr %s277, 4
        %s279 = scalar_lea.vmem %s4, %s278
        %p280 = scmp.lt.s32.totalorder %s19, 1
        %s281 = scalar_select %p280, %s19, 1
        %s282 = scalar_lea.vmem %s5, %s281
        %p283 = scmp.lt.s32.totalorder %s19, 1
        %s284 = scalar_select %p283, %s19, 1
        %s285 = scalar_lea.vmem %s6, %s284
        %v286 = vld [vmem:[%s1] sm:$0x1]
        %v287 = vld [vmem:[%s2] sm:$0x1]
        %v288 = vld [vmem:[%s274] sm:$0xf]
        %v289 = vld [vmem:[%s274 + $0x4] sm:$0xf]
        %v290 = vunpack.c.l.bf16 %v288
        %v291 = vunpack.c.l.bf16 %v289
        %v293 = vperm.slane %v286, 0
        %v295 = vmul.f32 %v290, %v293
        %v296 = vmul.f32 %v291, %v293
        %v298 = vperm.slane %v287, 0
        %v300 = vadd.f32 %v295, %v298
        %v301 = vadd.f32 %v296, %v298
        %v302 = vmax.f32 %v300, 0.0
        %v303 = vmax.f32 %v301, 0.0
        %v304 = vpack.c.bf16 %v303, %v302
        %s305 = scalar_lea.vmem [#allocation3], 128
        %v306 = vld [vmem:[%s305] sm:$0xf]
        %v307 = vld [vmem:[%s305 + $0x4] sm:$0xf]
        %v308 = vld [vmem:[%s305 + $0x8] sm:$0xf]
        %v309 = vld [vmem:[%s305 + $0xc] sm:$0xf]
        %v310 = vld [vmem:[%s305 + $0x10] sm:$0xf]
        %v311 = vld [vmem:[%s305 + $0x14] sm:$0xf]
        %v312 = vld [vmem:[%s305 + $0x18] sm:$0xf]
        %v313 = vld [vmem:[%s305 + $0x1c] sm:$0xf]
        %v314 = vld [vmem:[%s305 + $0x20] sm:$0xf]
        %v315 = vld [vmem:[%s305 + $0x24] sm:$0xf]
        %v316 = vld [vmem:[%s305 + $0x28] sm:$0xf]
        %v317 = vld [vmem:[%s305 + $0x2c] sm:$0xf]
        %v318 = vld [vmem:[%s305 + $0x30] sm:$0xf]
        %v319 = vld [vmem:[%s305 + $0x34] sm:$0xf]
        %v320 = vld [vmem:[%s305 + $0x38] sm:$0xf]
        %v321 = vld [vmem:[%s305 + $0x3c] sm:$0xf]
        %v338 = vunpack.c.l.b16 %v306
        %v339 = vunpack.c.l.b16 %v307
        %v340 = vunpack.c.l.b16 %v308
        %v341 = vunpack.c.l.b16 %v309
        %v342 = vunpack.c.l.b16 %v310
        %v343 = vunpack.c.l.b16 %v311
        %v344 = vunpack.c.l.b16 %v312
        %v345 = vunpack.c.l.b16 %v313
        %v346 = vunpack.c.l.b16 %v314
        %v347 = vunpack.c.l.b16 %v315
        %v348 = vunpack.c.l.b16 %v316
        %v349 = vunpack.c.l.b16 %v317
        %v350 = vunpack.c.l.b16 %v318
        %v351 = vunpack.c.l.b16 %v319
        %v352 = vunpack.c.l.b16 %v320
        %v353 = vunpack.c.l.b16 %v321
        %v354 = vpack.c.b16 %v339, %v338
        %v355 = vpack.c.b16 %v341, %v340
        %v356 = vpack.c.b16 %v343, %v342
        %v357 = vpack.c.b16 %v345, %v344
        %v358 = vpack.c.b16 %v347, %v346
        %v359 = vpack.c.b16 %v349, %v348
        %v360 = vpack.c.b16 %v351, %v350
        %v361 = vpack.c.b16 %v353, %v352
        %370 = vmatpush.bf16.msra.mxu0 %v361
        %371 = vmatpush.bf16.msra.mxu0 %v360
        %372 = vmatpush.bf16.msra.mxu0 %v359
        %373 = vmatpush.bf16.msra.mxu0 %v358
        %374 = vmatpush.bf16.msra.mxu0 %v357
        %375 = vmatpush.bf16.msra.mxu0 %v356
        %376 = vmatpush.bf16.msra.mxu0 %v355
        %377 = vmatpush.bf16.msra.mxu0 %v354
        %378 = vmatmul.bf16.gmra.mxu0 %v304
        %v379 = vpop.f32.mrf.mxu0
        %v380 = vadd.f32 0.0, %v379
        %v381 = vpop.f32.mrf.mxu0
        %v382 = vadd.f32 0.0, %v381
        %383 = vdwg.mxu0
        %384 = vst [vmem:[#allocation2] sm:$0xff] %v380
        %385 = vst [vmem:[#allocation2 + $0x8] sm:$0xff] %v382
        %v386 = vld [vmem:[#allocation3] sm:$0xf]
        %v387 = vld [vmem:[#allocation3 + $0x4] sm:$0xf]
        %v388 = vld [vmem:[#allocation3 + $0x8] sm:$0xf]
        %v389 = vld [vmem:[#allocation3 + $0xc] sm:$0xf]
        %v390 = vld [vmem:[#allocation3 + $0x10] sm:$0xf]
        %v391 = vld [vmem:[#allocation3 + $0x14] sm:$0xf]
        %v392 = vld [vmem:[#allocation3 + $0x18] sm:$0xf]
        %v393 = vld [vmem:[#allocation3 + $0x1c] sm:$0xf]
        %v394 = vld [vmem:[#allocation3 + $0x20] sm:$0xf]
        %v395 = vld [vmem:[#allocation3 + $0x24] sm:$0xf]
        %v396 = vld [vmem:[#allocation3 + $0x28] sm:$0xf]
        %v397 = vld [vmem:[#allocation3 + $0x2c] sm:$0xf]
        %v398 = vld [vmem:[#allocation3 + $0x30] sm:$0xf]
        %v399 = vld [vmem:[#allocation3 + $0x34] sm:$0xf]
        %v400 = vld [vmem:[#allocation3 + $0x38] sm:$0xf]
        %v401 = vld [vmem:[#allocation3 + $0x3c] sm:$0xf]
        %v418 = vunpack.c.l.b16 %v386
        %v419 = vunpack.c.l.b16 %v387
        %v420 = vunpack.c.l.b16 %v388
        %v421 = vunpack.c.l.b16 %v389
        %v422 = vunpack.c.l.b16 %v390
        %v423 = vunpack.c.l.b16 %v391
        %v424 = vunpack.c.l.b16 %v392
        %v425 = vunpack.c.l.b16 %v393
        %v426 = vunpack.c.l.b16 %v394
        %v427 = vunpack.c.l.b16 %v395
        %v428 = vunpack.c.l.b16 %v396
        %v429 = vunpack.c.l.b16 %v397
        %v430 = vunpack.c.l.b16 %v398
        %v431 = vunpack.c.l.b16 %v399
        %v432 = vunpack.c.l.b16 %v400
        %v433 = vunpack.c.l.b16 %v401
        %v434 = vpack.c.b16 %v419, %v418
        %v435 = vpack.c.b16 %v421, %v420
        %v436 = vpack.c.b16 %v423, %v422
        %v437 = vpack.c.b16 %v425, %v424
        %v438 = vpack.c.b16 %v427, %v426
        %v439 = vpack.c.b16 %v429, %v428
        %v440 = vpack.c.b16 %v431, %v430
        %v441 = vpack.c.b16 %v433, %v432
        %450 = vmatpush.bf16.msra.mxu0 %v441
        %451 = vmatpush.bf16.msra.mxu0 %v440
        %452 = vmatpush.bf16.msra.mxu0 %v439
        %453 = vmatpush.bf16.msra.mxu0 %v438
        %454 = vmatpush.bf16.msra.mxu0 %v437
        %455 = vmatpush.bf16.msra.mxu0 %v436
        %456 = vmatpush.bf16.msra.mxu0 %v435
        %457 = vmatpush.bf16.msra.mxu0 %v434
        %458 = vmatmul.bf16.gmra.mxu0 %v304
        %v459 = vpop.f32.mrf.mxu0
        %v460 = vadd.f32 0.0, %v459
        %v461 = vpop.f32.mrf.mxu0
        %v462 = vadd.f32 0.0, %v461
        %463 = vdwg.mxu0
        %v464 = vld [vmem:[#allocation2 + $0x2] sm:$0xff]
        %v465 = vld [vmem:[#allocation2 + $0xa] sm:$0x3f]
        %v466 = vadd.f32 %v464, %v460
        %v467 = vadd.f32 %v465, %v462
        %468 = vst [vmem:[#allocation2 + $0x2] sm:$0xff] %v466
        %469 = vst [vmem:[#allocation2 + $0xa] sm:$0x3f] %v467
        %s470 = scalar_lea.vmem [#allocation3], 64
        %v471 = vld [vmem:[%s470] sm:$0xf]
        %v472 = vld [vmem:[%s470 + $0x4] sm:$0xf]
        %v473 = vld [vmem:[%s470 + $0x8] sm:$0xf]
        %v474 = vld [vmem:[%s470 + $0xc] sm:$0xf]
        %v475 = vld [vmem:[%s470 + $0x10] sm:$0xf]
        %v476 = vld [vmem:[%s470 + $0x14] sm:$0xf]
        %v477 = vld [vmem:[%s470 + $0x18] sm:$0xf]
        %v478 = vld [vmem:[%s470 + $0x1c] sm:$0xf]
        %v479 = vld [vmem:[%s470 + $0x20] sm:$0xf]
        %v480 = vld [vmem:[%s470 + $0x24] sm:$0xf]
        %v481 = vld [vmem:[%s470 + $0x28] sm:$0xf]
        %v482 = vld [vmem:[%s470 + $0x2c] sm:$0xf]
        %v483 = vld [vmem:[%s470 + $0x30] sm:$0xf]
        %v484 = vld [vmem:[%s470 + $0x34] sm:$0xf]
        %v485 = vld [vmem:[%s470 + $0x38] sm:$0xf]
        %v486 = vld [vmem:[%s470 + $0x3c] sm:$0xf]
        %v503 = vunpack.c.l.b16 %v471
        %v504 = vunpack.c.l.b16 %v472
        %v505 = vunpack.c.l.b16 %v473
        %v506 = vunpack.c.l.b16 %v474
        %v507 = vunpack.c.l.b16 %v475
        %v508 = vunpack.c.l.b16 %v476
        %v509 = vunpack.c.l.b16 %v477
        %v510 = vunpack.c.l.b16 %v478
        %v511 = vunpack.c.l.b16 %v479
        %v512 = vunpack.c.l.b16 %v480
        %v513 = vunpack.c.l.b16 %v481
        %v514 = vunpack.c.l.b16 %v482
        %v515 = vunpack.c.l.b16 %v483
        %v516 = vunpack.c.l.b16 %v484
        %v517 = vunpack.c.l.b16 %v485
        %v518 = vunpack.c.l.b16 %v486
        %v519 = vpack.c.b16 %v504, %v503
        %v520 = vpack.c.b16 %v506, %v505
        %v521 = vpack.c.b16 %v508, %v507
        %v522 = vpack.c.b16 %v510, %v509
        %v523 = vpack.c.b16 %v512, %v511
        %v524 = vpack.c.b16 %v514, %v513
        %v525 = vpack.c.b16 %v516, %v515
        %v526 = vpack.c.b16 %v518, %v517
        %535 = vmatpush.bf16.msra.mxu0 %v526
        %536 = vmatpush.bf16.msra.mxu0 %v525
        %537 = vmatpush.bf16.msra.mxu0 %v524
        %538 = vmatpush.bf16.msra.mxu0 %v523
        %539 = vmatpush.bf16.msra.mxu0 %v522
        %540 = vmatpush.bf16.msra.mxu0 %v521
        %541 = vmatpush.bf16.msra.mxu0 %v520
        %542 = vmatpush.bf16.msra.mxu0 %v519
        %543 = vmatmul.bf16.gmra.mxu0 %v304
        %v544 = vpop.f32.mrf.mxu0
        %v545 = vadd.f32 0.0, %v544
        %v546 = vpop.f32.mrf.mxu0
        %v547 = vadd.f32 0.0, %v546
        %548 = vdwg.mxu0
        %v549 = vld [vmem:[#allocation2 + $0x1] sm:$0xff]
        %v550 = vld [vmem:[#allocation2 + $0x9] sm:$0x7f]
        %v551 = vadd.f32 %v549, %v545
        %v552 = vadd.f32 %v550, %v547
        %553 = vst [vmem:[#allocation2 + $0x1] sm:$0xff] %v551
        %554 = vst [vmem:[#allocation2 + $0x9] sm:$0x7f] %v552
        %s555 = scalar_lea.vmem [#allocation3], 192
        %v556 = vld [vmem:[%s555] sm:$0xf]
        %v557 = vld [vmem:[%s555 + $0x4] sm:$0xf]
        %v558 = vld [vmem:[%s555 + $0x8] sm:$0xf]
        %v559 = vld [vmem:[%s555 + $0xc] sm:$0xf]
        %v560 = vld [vmem:[%s555 + $0x10] sm:$0xf]
        %v561 = vld [vmem:[%s555 + $0x14] sm:$0xf]
        %v562 = vld [vmem:[%s555 + $0x18] sm:$0xf]
        %v563 = vld [vmem:[%s555 + $0x1c] sm:$0xf]
        %v564 = vld [vmem:[%s555 + $0x20] sm:$0xf]
        %v565 = vld [vmem:[%s555 + $0x24] sm:$0xf]
        %v566 = vld [vmem:[%s555 + $0x28] sm:$0xf]
        %v567 = vld [vmem:[%s555 + $0x2c] sm:$0xf]
        %v568 = vld [vmem:[%s555 + $0x30] sm:$0xf]
        %v569 = vld [vmem:[%s555 + $0x34] sm:$0xf]
        %v570 = vld [vmem:[%s555 + $0x38] sm:$0xf]
        %v571 = vld [vmem:[%s555 + $0x3c] sm:$0xf]
        %v588 = vunpack.c.l.b16 %v556
        %v589 = vunpack.c.l.b16 %v557
        %v590 = vunpack.c.l.b16 %v558
        %v591 = vunpack.c.l.b16 %v559
        %v592 = vunpack.c.l.b16 %v560
        %v593 = vunpack.c.l.b16 %v561
        %v594 = vunpack.c.l.b16 %v562
        %v595 = vunpack.c.l.b16 %v563
        %v596 = vunpack.c.l.b16 %v564
        %v597 = vunpack.c.l.b16 %v565
        %v598 = vunpack.c.l.b16 %v566
        %v599 = vunpack.c.l.b16 %v567
        %v600 = vunpack.c.l.b16 %v568
        %v601 = vunpack.c.l.b16 %v569
        %v602 = vunpack.c.l.b16 %v570
        %v603 = vunpack.c.l.b16 %v571
        %v604 = vpack.c.b16 %v589, %v588
        %v605 = vpack.c.b16 %v591, %v590
        %v606 = vpack.c.b16 %v593, %v592
        %v607 = vpack.c.b16 %v595, %v594
        %v608 = vpack.c.b16 %v597, %v596
        %v609 = vpack.c.b16 %v599, %v598
        %v610 = vpack.c.b16 %v601, %v600
        %v611 = vpack.c.b16 %v603, %v602
        %620 = vmatpush.bf16.msra.mxu0 %v611
        %621 = vmatpush.bf16.msra.mxu0 %v610
        %622 = vmatpush.bf16.msra.mxu0 %v609
        %623 = vmatpush.bf16.msra.mxu0 %v608
        %624 = vmatpush.bf16.msra.mxu0 %v607
        %625 = vmatpush.bf16.msra.mxu0 %v606
        %626 = vmatpush.bf16.msra.mxu0 %v605
        %627 = vmatpush.bf16.msra.mxu0 %v604
        %628 = vmatmul.bf16.gmra.mxu0 %v304
        %v629 = vpop.f32.mrf.mxu0
        %v630 = vadd.f32 0.0, %v629
        %v631 = vpop.f32.mrf.mxu0
        %v632 = vadd.f32 0.0, %v631
        %633 = vdwg.mxu0
        %v634 = vld [vmem:[#allocation2] sm:$0xff]
        %v635 = vld [vmem:[#allocation2 + $0x8] sm:$0x7f]
        %vm638 = vcmask 1046528
        %v639 = vrot.slane %v630, 1
        %v640 = vrot.slane %v632, 1
        %v641 = vsel %vm638, %v639, %v640
        %v644 = vadd.f32 %v634, %v641
        %v645 = vadd.f32 %v635, %v640
        %646 = vst [vmem:[#allocation2] sm:$0xff] %v644
        %647 = vst [vmem:[#allocation2 + $0x8] sm:$0x7f] %v645
        %s648 = scalar_lea.vmem [#allocation3], 256
        %v649 = vld [vmem:[%s648] sm:$0xf]
        %v650 = vld [vmem:[%s648 + $0x4] sm:$0xf]
        %v651 = vld [vmem:[%s648 + $0x8] sm:$0xf]
        %v652 = vld [vmem:[%s648 + $0xc] sm:$0xf]
        %v653 = vld [vmem:[%s648 + $0x10] sm:$0xf]
        %v654 = vld [vmem:[%s648 + $0x14] sm:$0xf]
        %v655 = vld [vmem:[%s648 + $0x18] sm:$0xf]
        %v656 = vld [vmem:[%s648 + $0x1c] sm:$0xf]
        %v657 = vld [vmem:[%s648 + $0x20] sm:$0xf]
        %v658 = vld [vmem:[%s648 + $0x24] sm:$0xf]
        %v659 = vld [vmem:[%s648 + $0x28] sm:$0xf]
        %v660 = vld [vmem:[%s648 + $0x2c] sm:$0xf]
        %v661 = vld [vmem:[%s648 + $0x30] sm:$0xf]
        %v662 = vld [vmem:[%s648 + $0x34] sm:$0xf]
        %v663 = vld [vmem:[%s648 + $0x38] sm:$0xf]
        %v664 = vld [vmem:[%s648 + $0x3c] sm:$0xf]
        %v681 = vunpack.c.l.b16 %v649
        %v682 = vunpack.c.l.b16 %v650
        %v683 = vunpack.c.l.b16 %v651
        %v684 = vunpack.c.l.b16 %v652
        %v685 = vunpack.c.l.b16 %v653
        %v686 = vunpack.c.l.b16 %v654
        %v687 = vunpack.c.l.b16 %v655
        %v688 = vunpack.c.l.b16 %v656
        %v689 = vunpack.c.l.b16 %v657
        %v690 = vunpack.c.l.b16 %v658
        %v691 = vunpack.c.l.b16 %v659
        %v692 = vunpack.c.l.b16 %v660
        %v693 = vunpack.c.l.b16 %v661
        %v694 = vunpack.c.l.b16 %v662
        %v695 = vunpack.c.l.b16 %v663
        %v696 = vunpack.c.l.b16 %v664
        %v697 = vpack.c.b16 %v682, %v681
        %v698 = vpack.c.b16 %v684, %v683
        %v699 = vpack.c.b16 %v686, %v685
        %v700 = vpack.c.b16 %v688, %v687
        %v701 = vpack.c.b16 %v690, %v689
        %v702 = vpack.c.b16 %v692, %v691
        %v703 = vpack.c.b16 %v694, %v693
        %v704 = vpack.c.b16 %v696, %v695
        %713 = vmatpush.bf16.msra.mxu0 %v704
        %714 = vmatpush.bf16.msra.mxu0 %v703
        %715 = vmatpush.bf16.msra.mxu0 %v702
        %716 = vmatpush.bf16.msra.mxu0 %v701
        %717 = vmatpush.bf16.msra.mxu0 %v700
        %718 = vmatpush.bf16.msra.mxu0 %v699
        %719 = vmatpush.bf16.msra.mxu0 %v698
        %720 = vmatpush.bf16.msra.mxu0 %v697
        %721 = vmatmul.bf16.gmra.mxu0 %v304
        %v722 = vpop.f32.mrf.mxu0
        %v723 = vadd.f32 0.0, %v722
        %v724 = vpop.f32.mrf.mxu0
        %v725 = vadd.f32 0.0, %v724
        %726 = vdwg.mxu0
        %v727 = vld [vmem:[#allocation2] sm:$0xff]
        %v728 = vld [vmem:[#allocation2 + $0x8] sm:$0x3f]
        %vm731 = vcmask 1045504
        %v732 = vrot.slane %v723, 2
        %v733 = vrot.slane %v725, 2
        %v734 = vsel %vm731, %v732, %v733
        %v737 = vadd.f32 %v727, %v734
        %v738 = vadd.f32 %v728, %v733
        %739 = vst [vmem:[#allocation2] sm:$0xff] %v737
        %740 = vst [vmem:[#allocation2 + $0x8] sm:$0x3f] %v738
        %v741 = vld [vmem:[#allocation2] sm:$0xff]
        %v742 = vld [vmem:[#allocation2 + $0x8] sm:$0xff]
        %v743 = vpack.c.bf16 %v741, %v741
        %v744 = vpack.c.bf16 %v742, %v742
        %745 = vst [vmem:[%s279] sm:$0xf] %v743
        %746 = vst [vmem:[%s279 + $0x4] sm:$0xf] %v744
        %v747 = vadd.f32 %v741, %v742
        %v748 = vrot.slane %v747, 4
        %v749 = vadd.f32 %v747, %v748
        %v750 = vrot.slane %v749, 2
        %v751 = vadd.f32 %v749, %v750
        %v752 = vrot.slane %v751, 1
        %v753 = vadd.f32 %v751, %v752
        %v754 = vadd.f32 %v753, 0.0
        %v755 = vmul.f32 %v741, %v741
        %v756 = vmul.f32 %v742, %v742
        %v757 = vadd.f32 %v755, %v756
        %v758 = vrot.slane %v757, 4
        %v759 = vadd.f32 %v757, %v758
        %v760 = vrot.slane %v759, 2
        %v761 = vadd.f32 %v759, %v760
        %v762 = vrot.slane %v761, 1
        %v763 = vadd.f32 %v761, %v762
        %v764 = vadd.f32 %v763, 0.0
        %765 = vst [vmem:[%s282] sm:$0x1] %v754
        %766 = vst [vmem:[%s285] sm:$0x1] %v764
        %p767 = scmp.lt.s32.totalorder %s19, 1
        %s768 = scalar_select %p767, %s19, 1
        %s769 = smul.addr %s768, 2
        %s770 = smul.addr %s769, 4
        %s771 = scalar_lea.vmem %s4, %s770
        %p772 = scmp.lt.s32.totalorder %s19, 1
        %s773 = scalar_select %p772, %s19, 1
        %s774 = scalar_lea.vmem %s5, %s773
        %p775 = scmp.lt.s32.totalorder %s19, 1
        %s776 = scalar_select %p775, %s19, 1
        %s777 = scalar_lea.vmem %s6, %s776
        // Predicated region
        $region41: #{_lambda_.5} parent=35 // pred_check
          %p778 = pneg %p126
        $region42: #{_lambda_.5} parent=35 // pred_check_branch
          %780 = sbr.rel (%p778) target = $region44
        $region43: #{_lambda_.5} parent=35 // pred_region
          _
        $region44: #{_lambda_.5} parent=35 // pred_fallthru
          _
        // Predicated region
        $region45: #{_lambda_.5} parent=35 // pred_check
          %p781 = pneg %p152
        $region46: #{_lambda_.5} parent=35 // pred_check_branch
          %783 = sbr.rel (%p781) target = $region48
        $region47: #{_lambda_.5} parent=35 // pred_region
          _
        $region48: #{_lambda_.5} parent=35 // pred_fallthru
          _
        // Predicated region
        $region49: #{_lambda_.5} parent=35 // pred_check
          %p784 = pneg %p178
        $region50: #{_lambda_.5} parent=35 // pred_check_branch
          %786 = sbr.rel (%p784) target = $region52
        $region51: #{_lambda_.5} parent=35 // pred_region
          _
        $region52: #{_lambda_.5} parent=35 // pred_fallthru
          _
      $region36: #{_lambda_.5} parent=5 // pred_fallthru
        _
      %p787 = scmp.le.s32.totalorder 2, %s14
      // Predicated region
      $region53: #{_lambda_.5} parent=5 // pred_check
        %p788 = pneg %p787
      $region54: #{_lambda_.5} parent=5 // pred_check_branch
        %790 = sbr.rel (%p788) target = $region56
      $region55: #{_lambda_.5} parent=5 // pred_region
        %s791 = ssub.s32 %s14, 2
        // Predicated region
        $region57: #{_lambda_.5} parent=55 // pred_check
          %p792 = pneg %p132
        $region58: #{_lambda_.5} parent=55 // pred_check_branch
          %794 = sbr.rel (%p792) target = $region60
        $region59: #{_lambda_.5} parent=55 // pred_region
          %p795 = scmp.lt.s32.totalorder %s20, 1
          %s796 = scalar_select %p795, %s20, 1
          %s797 = smul.addr %s796, 2
          %s798 = smul.addr %s797, 4
          %s799 = scalar_lea.vmem %s4, %s798
        $region60: #{_lambda_.5} parent=55 // pred_fallthru
          _
        // Predicated region
        $region61: #{_lambda_.5} parent=55 // pred_check
          %p800 = pneg %p158
        $region62: #{_lambda_.5} parent=55 // pred_check_branch
          %802 = sbr.rel (%p800) target = $region64
        $region63: #{_lambda_.5} parent=55 // pred_region
          %p803 = scmp.lt.s32.totalorder %s20, 1
          %s804 = scalar_select %p803, %s20, 1
          %s805 = scalar_lea.vmem %s5, %s804
        $region64: #{_lambda_.5} parent=55 // pred_fallthru
          _
        // Predicated region
        $region65: #{_lambda_.5} parent=55 // pred_check
          %p806 = pneg %p184
        $region66: #{_lambda_.5} parent=55 // pred_check_branch
          %808 = sbr.rel (%p806) target = $region68
        $region67: #{_lambda_.5} parent=55 // pred_region
          %p809 = scmp.lt.s32.totalorder %s20, 1
          %s810 = scalar_select %p809, %s20, 1
          %s811 = scalar_lea.vmem %s6, %s810
        $region68: #{_lambda_.5} parent=55 // pred_fallthru
          _
      $region56: #{_lambda_.5} parent=5 // pred_fallthru
        _
    $region6: #{_lambda_.5} parent=1 // loop_footer
      %s18 = sadd.s32 1, %s14
    $region7: #{_lambda_.5} parent=1 // loop_footer_branch
      %13 = sbr.rel target = $region3
    $region8: #{_lambda_.5} parent=1 // loop_exit
      _
    %812 = vsyncpa [#allocation4], 1
    %s813 = scalar_lea.sflag [#allocation4], 1
    %814 = vsyncpa %s813, 1

// kernel: _lambda_.4
$region0: #{_lambda_.4}
  #allocation0 [shape = 'u32[]', space=smem, size = 0x4, offset = 0x4, fixed_abs, tag = 'smem constant byte address 0x4 - core index']
  #allocation1 [shape = 'u32[72,128]{1,0:T(1,128)}', space=vmem, size = 0x9000, scoped, tag = 'internal scratch']
  #allocation2 [shape = 'f32[1,16,128]{2,1,0:T(8,128)}', space=vmem, size = 0x2000, scoped, tag = 'scratch operand']
  %s0 = inlined_call_operand.vmem [shape: bf16[2,16,128], index: 0, kind: input, shape index: {}]
  %s1 = inlined_call_operand.hbm [shape: bf16[8,128,128], index: 1, kind: input, shape index: {}]
  %s2 = inlined_call_operand.vmem [shape: bf16[128,128], index: 2, kind: input, shape index: {}]
  %s3 = inlined_call_operand.vmem [shape: bf16[2,16,128], index: 3, kind: output, shape index: {0}]
  %s4 = inlined_call_operand.vmem [shape: f32[2,1,128], index: 4, kind: output, shape index: {1}]
  %s5 = inlined_call_operand.vmem [shape: f32[2,1,128], index: 5, kind: output, shape index: {2}]
  %s6 = inlined_call_operand.vmem [shape: bf16[2,16,128], index: 6, kind: output, shape index: {3}]
  %s7 = inlined_call_operand.vmem [shape: f32[2,1,128], index: 7, kind: output, shape index: {4}]
  %s8 = inlined_call_operand.vmem [shape: f32[2,1,128], index: 8, kind: output, shape index: {5}]
  %9 = xla_tuple %s3, %s4, %s5, %s6, %s7, %s8
  %s10 = sld [smem:[#allocation0]]
  $region89: #{_lambda_.4} parent=0
    _
  %s12 = ssub.s32 1, %s10
  %s13 = scalar_select 0, %s12, %s10
  $region1: #{_lambda_.4} parent=0
    #allocation3 [shape = 'u8[262144]{0}', space=vmem, size = 0x40000, scoped, tag = 'input window, operand 1, single buffered']
    #allocation4 [shape = 's32[2]{0}', space=sflag, size = 0x8, scoped, tag = 'scoped memory for _lambda_.4']
    %14 = vsyncpa [#allocation4], 0
    loop: start=0, step=1, limit=4
    $region2: #{_lambda_.4} parent=1 // loop_pre_header
      _
    $region3: #{_lambda_.4} parent=1 // loop_header
      %s16 = sphi 0, %s20
      %p17 = scmp.ge.s32.totalorder %s16, 4
      %s26 = sphi 0, %s28
      %s29 = sphi 0, %s26
      %s30 = sphi 0, %s29
      %s46 = sphi 0, %s30
      %s50 = sphi 0, %s50
      %s52 = sphi 0, %s50
      %s53 = sphi 0, %s52
      %s67 = sphi 0, %s53
      %s71 = sphi 0, %s71
      %s73 = sphi 0, %s71
      %s74 = sphi 0, %s73
      %s88 = sphi 0, %s74
      %s94 = sphi 0, %s96
      %s97 = sphi 0, %s94
      %s98 = sphi 0, %s97
      %s114 = sphi 0, %s98
      %s120 = sphi 0, %s122
      %s123 = sphi 0, %s120
      %s124 = sphi 0, %s123
      %s140 = sphi 0, %s124
      %s146 = sphi 0, %s148
      %s149 = sphi 0, %s146
      %s150 = sphi 0, %s149
      %s166 = sphi 0, %s150
      %s172 = sphi 0, %s174
      %s175 = sphi 0, %s172
      %s176 = sphi 0, %s175
      %s192 = sphi 0, %s176
      %s198 = sphi 0, %s200
      %s201 = sphi 0, %s198
      %s202 = sphi 0, %s201
      %s218 = sphi 0, %s202
      %s224 = sphi 0, %s226
      %s227 = sphi 0, %s224
      %s228 = sphi 0, %s227
      %s244 = sphi 0, %s228
    $region4: #{_lambda_.4} parent=1 // loop_header_branch
      %19 = sbr.rel (%p17) target = $region8
    $region5: #{_lambda_.4} parent=1 // loop_body
      %s21 = ssub.s32 %s16, 1
      %s22 = ssub.s32 %s16, 2
      %s23 = sadd.s32 %s16, 1
      %s24 = ssub.s32 %s16, %s23
      %p25 = scmp.eq.s32.totalorder %s24, 0
      %s27 = sadd.s32 %s26, 1
      %s28 = scalar_select %p25, %s26, %s27
      %p31 = pneg %p25
      %p32 = scmp.eq.s32.totalorder %s16, 1
      %p33 = por %p31, %p32
      %p34 = scmp.ne.s32.totalorder %s26, %s29
      %p35 = scmp.eq.s32.totalorder %s16, 0
      %p36 = por %p34, %p35
      %p37 = scmp.ne.s32.totalorder %s26, %s29
      %p38 = scmp.eq.s32.totalorder %s21, 1
      %p39 = por %p37, %p38
      %p40 = scmp.ne.s32.totalorder %s29, %s30
      %p41 = scmp.eq.s32.totalorder %s21, 0
      %p42 = por %p40, %p41
      %p43 = scmp.ne.s32.totalorder %s29, %s30
      %p44 = scmp.eq.s32.totalorder %s22, 1
      %p45 = por %p43, %p44
      %p47 = scmp.ne.s32.totalorder %s30, %s46
      %p48 = scmp.eq.s32.totalorder %s22, 0
      %p49 = por %p47, %p48
      %s51 = sadd.s32 %s50, 1
      %p54 = scmp.eq.s32.totalorder %s16, 1
      %p55 = scmp.ne.s32.totalorder %s50, %s52
      %p56 = scmp.eq.s32.totalorder %s16, 0
      %p57 = por %p55, %p56
      %p58 = scmp.ne.s32.totalorder %s50, %s52
      %p59 = scmp.eq.s32.totalorder %s21, 1
      %p60 = por %p58, %p59
      %p61 = scmp.ne.s32.totalorder %s52, %s53
      %p62 = scmp.eq.s32.totalorder %s21, 0
      %p63 = por %p61, %p62
      %p64 = scmp.ne.s32.totalorder %s52, %s53
      %p65 = scmp.eq.s32.totalorder %s22, 1
      %p66 = por %p64, %p65
      %p68 = scmp.ne.s32.totalorder %s53, %s67
      %p69 = scmp.eq.s32.totalorder %s22, 0
      %p70 = por %p68, %p69
      %s72 = sadd.s32 %s71, 1
      %p75 = scmp.eq.s32.totalorder %s16, 1
      %p76 = scmp.ne.s32.totalorder %s71, %s73
      %p77 = scmp.eq.s32.totalorder %s16, 0
      %p78 = por %p76, %p77
      %p79 = scmp.ne.s32.totalorder %s71, %s73
      %p80 = scmp.eq.s32.totalorder %s21, 1
      %p81 = por %p79, %p80
      %p82 = scmp.ne.s32.totalorder %s73, %s74
      %p83 = scmp.eq.s32.totalorder %s21, 0
      %p84 = por %p82, %p83
      %p85 = scmp.ne.s32.totalorder %s73, %s74
      %p86 = scmp.eq.s32.totalorder %s22, 1
      %p87 = por %p85, %p86
      %p89 = scmp.ne.s32.totalorder %s74, %s88
      %p90 = scmp.eq.s32.totalorder %s22, 0
      %p91 = por %p89, %p90
      %s92 = ssub.s32 %s16, %s23
      %p93 = scmp.eq.s32.totalorder %s92, 0
      %s95 = sadd.s32 %s94, 1
      %s96 = scalar_select %p93, %s94, %s95
      %p99 = pneg %p93
      %p100 = scmp.eq.s32.totalorder %s16, 1
      %p101 = por %p99, %p100
      %p102 = scmp.ne.s32.totalorder %s94, %s97
      %p103 = scmp.eq.s32.totalorder %s16, 0
      %p104 = por %p102, %p103
      %p105 = scmp.ne.s32.totalorder %s94, %s97
      %p106 = scmp.eq.s32.totalorder %s21, 1
      %p107 = por %p105, %p106
      %p108 = scmp.ne.s32.totalorder %s97, %s98
      %p109 = scmp.eq.s32.totalorder %s21, 0
      %p110 = por %p108, %p109
      %p111 = scmp.ne.s32.totalorder %s97, %s98
      %p112 = scmp.eq.s32.totalorder %s22, 1
      %p113 = por %p111, %p112
      %p115 = scmp.ne.s32.totalorder %s98, %s114
      %p116 = scmp.eq.s32.totalorder %s22, 0
      %p117 = por %p115, %p116
      %s118 = ssub.s32 %s16, %s23
      %p119 = scmp.eq.s32.totalorder %s118, 0
      %s121 = sadd.s32 %s120, 1
      %s122 = scalar_select %p119, %s120, %s121
      %p125 = pneg %p119
      %p126 = scmp.eq.s32.totalorder %s16, 1
      %p127 = por %p125, %p126
      %p128 = scmp.ne.s32.totalorder %s120, %s123
      %p129 = scmp.eq.s32.totalorder %s16, 0
      %p130 = por %p128, %p129
      %p131 = scmp.ne.s32.totalorder %s120, %s123
      %p132 = scmp.eq.s32.totalorder %s21, 1
      %p133 = por %p131, %p132
      %p134 = scmp.ne.s32.totalorder %s123, %s124
      %p135 = scmp.eq.s32.totalorder %s21, 0
      %p136 = por %p134, %p135
      %p137 = scmp.ne.s32.totalorder %s123, %s124
      %p138 = scmp.eq.s32.totalorder %s22, 1
      %p139 = por %p137, %p138
      %p141 = scmp.ne.s32.totalorder %s124, %s140
      %p142 = scmp.eq.s32.totalorder %s22, 0
      %p143 = por %p141, %p142
      %s144 = ssub.s32 %s16, %s23
      %p145 = scmp.eq.s32.totalorder %s144, 0
      %s147 = sadd.s32 %s146, 1
      %s148 = scalar_select %p145, %s146, %s147
      %p151 = pneg %p145
      %p152 = scmp.eq.s32.totalorder %s16, 1
      %p153 = por %p151, %p152
      %p154 = scmp.ne.s32.totalorder %s146, %s149
      %p155 = scmp.eq.s32.totalorder %s16, 0
      %p156 = por %p154, %p155
      %p157 = scmp.ne.s32.totalorder %s146, %s149
      %p158 = scmp.eq.s32.totalorder %s21, 1
      %p159 = por %p157, %p158
      %p160 = scmp.ne.s32.totalorder %s149, %s150
      %p161 = scmp.eq.s32.totalorder %s21, 0
      %p162 = por %p160, %p161
      %p163 = scmp.ne.s32.totalorder %s149, %s150
      %p164 = scmp.eq.s32.totalorder %s22, 1
      %p165 = por %p163, %p164
      %p167 = scmp.ne.s32.totalorder %s150, %s166
      %p168 = scmp.eq.s32.totalorder %s22, 0
      %p169 = por %p167, %p168
      %s170 = ssub.s32 %s16, %s23
      %p171 = scmp.eq.s32.totalorder %s170, 0
      %s173 = sadd.s32 %s172, 1
      %s174 = scalar_select %p171, %s172, %s173
      %p177 = pneg %p171
      %p178 = scmp.eq.s32.totalorder %s16, 1
      %p179 = por %p177, %p178
      %p180 = scmp.ne.s32.totalorder %s172, %s175
      %p181 = scmp.eq.s32.totalorder %s16, 0
      %p182 = por %p180, %p181
      %p183 = scmp.ne.s32.totalorder %s172, %s175
      %p184 = scmp.eq.s32.totalorder %s21, 1
      %p185 = por %p183, %p184
      %p186 = scmp.ne.s32.totalorder %s175, %s176
      %p187 = scmp.eq.s32.totalorder %s21, 0
      %p188 = por %p186, %p187
      %p189 = scmp.ne.s32.totalorder %s175, %s176
      %p190 = scmp.eq.s32.totalorder %s22, 1
      %p191 = por %p189, %p190
      %p193 = scmp.ne.s32.totalorder %s176, %s192
      %p194 = scmp.eq.s32.totalorder %s22, 0
      %p195 = por %p193, %p194
      %s196 = ssub.s32 %s16, %s23
      %p197 = scmp.eq.s32.totalorder %s196, 0
      %s199 = sadd.s32 %s198, 1
      %s200 = scalar_select %p197, %s198, %s199
      %p203 = pneg %p197
      %p204 = scmp.eq.s32.totalorder %s16, 1
      %p205 = por %p203, %p204
      %p206 = scmp.ne.s32.totalorder %s198, %s201
      %p207 = scmp.eq.s32.totalorder %s16, 0
      %p208 = por %p206, %p207
      %p209 = scmp.ne.s32.totalorder %s198, %s201
      %p210 = scmp.eq.s32.totalorder %s21, 1
      %p211 = por %p209, %p210
      %p212 = scmp.ne.s32.totalorder %s201, %s202
      %p213 = scmp.eq.s32.totalorder %s21, 0
      %p214 = por %p212, %p213
      %p215 = scmp.ne.s32.totalorder %s201, %s202
      %p216 = scmp.eq.s32.totalorder %s22, 1
      %p217 = por %p215, %p216
      %p219 = scmp.ne.s32.totalorder %s202, %s218
      %p220 = scmp.eq.s32.totalorder %s22, 0
      %p221 = por %p219, %p220
      %s222 = ssub.s32 %s16, %s23
      %p223 = scmp.eq.s32.totalorder %s222, 0
      %s225 = sadd.s32 %s224, 1
      %s226 = scalar_select %p223, %s224, %s225
      %p229 = pneg %p223
      %p230 = scmp.eq.s32.totalorder %s16, 1
      %p231 = por %p229, %p230
      %p232 = scmp.ne.s32.totalorder %s224, %s227
      %p233 = scmp.eq.s32.totalorder %s16, 0
      %p234 = por %p232, %p233
      %p235 = scmp.ne.s32.totalorder %s224, %s227
      %p236 = scmp.eq.s32.totalorder %s21, 1
      %p237 = por %p235, %p236
      %p238 = scmp.ne.s32.totalorder %s227, %s228
      %p239 = scmp.eq.s32.totalorder %s21, 0
      %p240 = por %p238, %p239
      %p241 = scmp.ne.s32.totalorder %s227, %s228
      %p242 = scmp.eq.s32.totalorder %s22, 1
      %p243 = por %p241, %p242
      %p245 = scmp.ne.s32.totalorder %s228, %s244
      %p246 = scmp.eq.s32.totalorder %s22, 0
      %p247 = por %p245, %p246
      %p248 = scmp.le.s32.totalorder 1, %s16
      %p249 = scmp.lt.s32.totalorder %s16, 3
      %p250 = pnand %p248, %p249
      %p251 = pneg %p250
      // Predicated region
      $region9: #{_lambda_.4} parent=5 // pred_check
        _
      $region10: #{_lambda_.4} parent=5 // pred_check_branch
        %253 = sbr.rel (%p250) target = $region12
      $region11: #{_lambda_.4} parent=5 // pred_region
        %s254 = ssub.s32 %s16, 1
        // Predicated region
        $region13: #{_lambda_.4} parent=11 // pred_check
          %p255 = pneg %p63
        $region14: #{_lambda_.4} parent=11 // pred_check_branch
          %257 = sbr.rel (%p255) target = $region16
        $region15: #{_lambda_.4} parent=11 // pred_region
          %259 = vsyncadd [#allocation4], 0
          %s260 = sshll.u32 %s1, 4
          %s261 = int_to_ptr.hbm [resolvable:$true] %s260
          %s262 = sshll.u32 [#allocation3], 4
          %s263 = int_to_ptr.vmem [resolvable:$true] %s262
          %268 = dma.hbm_to_vmem [thread:$0]  %s261, 8192, %s263, [#allocation4], 64, 64, 4
        $region16: #{_lambda_.4} parent=11 // pred_fallthru
          _
        // Predicated region
        $region17: #{_lambda_.4} parent=11 // pred_check
          %p269 = pneg %p84
        $region18: #{_lambda_.4} parent=11 // pred_check_branch
          %271 = sbr.rel (%p269) target = $region20
        $region19: #{_lambda_.4} parent=11 // pred_region
          _
        $region20: #{_lambda_.4} parent=11 // pred_fallthru
          _
      $region12: #{_lambda_.4} parent=5 // pred_fallthru
        _
      %p272 = scmp.lt.s32.totalorder %s16, 2
      // Predicated region
      $region21: #{_lambda_.4} parent=5 // pred_check
        %p273 = pneg %p272
      $region22: #{_lambda_.4} parent=5 // pred_check_branch
        %275 = sbr.rel (%p273) target = $region24
      $region23: #{_lambda_.4} parent=5 // pred_region
        // Predicated region
        $region25: #{_lambda_.4} parent=23 // pred_check
          %p276 = pneg %p36
        $region26: #{_lambda_.4} parent=23 // pred_check_branch
          %278 = sbr.rel (%p276) target = $region28
        $region27: #{_lambda_.4} parent=23 // pred_region
          %p279 = scmp.lt.s32.totalorder %s16, 1
          %s280 = scalar_select %p279, %s16, 1
          %s281 = smul.addr %s280, 2
          %s282 = smul.addr %s281, 4
          %s283 = scalar_lea.vmem %s0, %s282
        $region28: #{_lambda_.4} parent=23 // pred_fallthru
          _
      $region24: #{_lambda_.4} parent=5 // pred_fallthru
        _
      %p284 = scmp.le.s32.totalorder 1, %s16
      %p285 = scmp.lt.s32.totalorder %s16, 3
      %p286 = pnand %p284, %p285
      %p287 = pneg %p286
      // Predicated region
      $region29: #{_lambda_.4} parent=5 // pred_check
        _
      $region30: #{_lambda_.4} parent=5 // pred_check_branch
        %289 = sbr.rel (%p286) target = $region32
      $region31: #{_lambda_.4} parent=5 // pred_region
        %s290 = ssub.s32 %s16, 1
        // Predicated region
        $region33: #{_lambda_.4} parent=31 // pred_check
          %p291 = pneg %p63
        $region34: #{_lambda_.4} parent=31 // pred_check_branch
          %293 = sbr.rel (%p291) target = $region36
        $region35: #{_lambda_.4} parent=31 // pred_region
          %295 = dma.done [#allocation4], 8192
        $region36: #{_lambda_.4} parent=31 // pred_fallthru
          _
        %p296 = scmp.lt.s32.totalorder %s21, 1
        %s297 = scalar_select %p296, %s21, 1
        %s298 = smul.addr %s297, 2
        %s299 = smul.addr %s298, 4
        %s300 = scalar_lea.vmem %s0, %s299
        %p301 = pneg %p42
        %p302 = pneg %p39
        %p303 = pneg %p63
        %p304 = pneg %p60
        %p305 = pneg %p84
        %p306 = pneg %p81
        %p307 = pneg %p110
        %p308 = pneg %p107
        %p309 = scmp.lt.s32.totalorder %s21, 1
        %s310 = scalar_select %p309, %s21, 1
        %s311 = smul.addr %s310, 2
        %s312 = smul.addr %s311, 4
        %s313 = scalar_lea.vmem %s3, %s312
        %p314 = pneg %p136
        %p315 = pneg %p133
        %p316 = scmp.lt.s32.totalorder %s21, 1
        %s317 = scalar_select %p316, %s21, 1
        %s318 = scalar_lea.vmem %s4, %s317
        %p319 = pneg %p162
        %p320 = pneg %p159
        %p321 = scmp.lt.s32.totalorder %s21, 1
        %s322 = scalar_select %p321, %s21, 1
        %s323 = scalar_lea.vmem %s5, %s322
        %p324 = pneg %p188
        %p325 = pneg %p185
        %p326 = scmp.lt.s32.totalorder %s21, 1
        %s327 = scalar_select %p326, %s21, 1
        %s328 = smul.addr %s327, 2
        %s329 = smul.addr %s328, 4
        %s330 = scalar_lea.vmem %s6, %s329
        %p331 = pneg %p214
        %p332 = pneg %p211
        %p333 = scmp.lt.s32.totalorder %s21, 1
        %s334 = scalar_select %p333, %s21, 1
        %s335 = scalar_lea.vmem %s7, %s334
        %p336 = pneg %p240
        %p337 = pneg %p237
        %p338 = scmp.lt.s32.totalorder %s21, 1
        %s339 = scalar_select %p338, %s21, 1
        %s340 = scalar_lea.vmem %s8, %s339
        %p341 = scmp.lt.s32.totalorder %s21, 1
        %s342 = scalar_select %p341, %s21, 1
        %s343 = smul.addr %s342, 2
        %s344 = smul.addr %s343, 4
        %s345 = scalar_lea.vmem %s0, %s344
        %p346 = scmp.lt.s32.totalorder %s21, 1
        %s347 = scalar_select %p346, %s21, 1
        %s348 = smul.addr %s347, 2
        %s349 = smul.addr %s348, 4
        %s350 = scalar_lea.vmem %s3, %s349
        %p351 = scmp.lt.s32.totalorder %s21, 1
        %s352 = scalar_select %p351, %s21, 1
        %s353 = scalar_lea.vmem %s4, %s352
        %p354 = scmp.lt.s32.totalorder %s21, 1
        %s355 = scalar_select %p354, %s21, 1
        %s356 = scalar_lea.vmem %s5, %s355
        %p357 = scmp.lt.s32.totalorder %s21, 1
        %s358 = scalar_select %p357, %s21, 1
        %s359 = smul.addr %s358, 2
        %s360 = smul.addr %s359, 4
        %s361 = scalar_lea.vmem %s6, %s360
        %p362 = scmp.lt.s32.totalorder %s21, 1
        %s363 = scalar_select %p362, %s21, 1
        %s364 = scalar_lea.vmem %s7, %s363
        %p365 = scmp.lt.s32.totalorder %s21, 1
        %s366 = scalar_select %p365, %s21, 1
        %s367 = scalar_lea.vmem %s8, %s366
        %v368 = vld [vmem:[%s2] sm:$0xf]
        %v369 = vld [vmem:[%s2 + $0x4] sm:$0xf]
        %v370 = vld [vmem:[%s2 + $0x8] sm:$0xf]
        %v371 = vld [vmem:[%s2 + $0xc] sm:$0xf]
        %v372 = vld [vmem:[%s2 + $0x10] sm:$0xf]
        %v373 = vld [vmem:[%s2 + $0x14] sm:$0xf]
        %v374 = vld [vmem:[%s2 + $0x18] sm:$0xf]
        %v375 = vld [vmem:[%s2 + $0x1c] sm:$0xf]
        %v376 = vld [vmem:[%s2 + $0x20] sm:$0xf]
        %v377 = vld [vmem:[%s2 + $0x24] sm:$0xf]
        %v378 = vld [vmem:[%s2 + $0x28] sm:$0xf]
        %v379 = vld [vmem:[%s2 + $0x2c] sm:$0xf]
        %v380 = vld [vmem:[%s2 + $0x30] sm:$0xf]
        %v381 = vld [vmem:[%s2 + $0x34] sm:$0xf]
        %v382 = vld [vmem:[%s2 + $0x38] sm:$0xf]
        %v383 = vld [vmem:[%s2 + $0x3c] sm:$0xf]
        %v384 = vld [vmem:[%s345] sm:$0xf]
        %v385 = vld [vmem:[%s345 + $0x4] sm:$0xf]
        %s386 = scalar_lea.vmem [#allocation3], 192
        %v387 = vld [vmem:[%s386] sm:$0xf]
        %v388 = vld [vmem:[%s386 + $0x4] sm:$0xf]
        %v389 = vld [vmem:[%s386 + $0x8] sm:$0xf]
        %v390 = vld [vmem:[%s386 + $0xc] sm:$0xf]
        %v391 = vld [vmem:[%s386 + $0x10] sm:$0xf]
        %v392 = vld [vmem:[%s386 + $0x14] sm:$0xf]
        %v393 = vld [vmem:[%s386 + $0x18] sm:$0xf]
        %v394 = vld [vmem:[%s386 + $0x1c] sm:$0xf]
        %v395 = vld [vmem:[%s386 + $0x20] sm:$0xf]
        %v396 = vld [vmem:[%s386 + $0x24] sm:$0xf]
        %v397 = vld [vmem:[%s386 + $0x28] sm:$0xf]
        %v398 = vld [vmem:[%s386 + $0x2c] sm:$0xf]
        %v399 = vld [vmem:[%s386 + $0x30] sm:$0xf]
        %v400 = vld [vmem:[%s386 + $0x34] sm:$0xf]
        %v401 = vld [vmem:[%s386 + $0x38] sm:$0xf]
        %v402 = vld [vmem:[%s386 + $0x3c] sm:$0xf]
        %v405 = vunpack.c.l.b16 %v384
        %v406 = vunpack.c.l.b16 %v385
        %v407 = vpack.c.b16 %v406, %v405
        %v425 = vunpack.c.l.b16 %v387
        %v426 = vunpack.c.l.b16 %v388
        %v427 = vunpack.c.l.b16 %v389
        %v428 = vunpack.c.l.b16 %v390
        %v429 = vunpack.c.l.b16 %v391
        %v430 = vunpack.c.l.b16 %v392
        %v431 = vunpack.c.l.b16 %v393
        %v432 = vunpack.c.l.b16 %v394
        %v433 = vunpack.c.l.b16 %v395
        %v434 = vunpack.c.l.b16 %v396
        %v435 = vunpack.c.l.b16 %v397
        %v436 = vunpack.c.l.b16 %v398
        %v437 = vunpack.c.l.b16 %v399
        %v438 = vunpack.c.l.b16 %v400
        %v439 = vunpack.c.l.b16 %v401
        %v440 = vunpack.c.l.b16 %v402
        %v441 = vpack.c.b16 %v426, %v425
        %v442 = vpack.c.b16 %v428, %v427
        %v443 = vpack.c.b16 %v430, %v429
        %v444 = vpack.c.b16 %v432, %v431
        %v445 = vpack.c.b16 %v434, %v433
        %v446 = vpack.c.b16 %v436, %v435
        %v447 = vpack.c.b16 %v438, %v437
        %v448 = vpack.c.b16 %v440, %v439
        %457 = vmatpush.bf16.msra.mxu0 %v448
        %458 = vmatpush.bf16.msra.mxu0 %v447
        %459 = vmatpush.bf16.msra.mxu0 %v446
        %460 = vmatpush.bf16.msra.mxu0 %v445
        %461 = vmatpush.bf16.msra.mxu0 %v444
        %462 = vmatpush.bf16.msra.mxu0 %v443
        %463 = vmatpush.bf16.msra.mxu0 %v442
        %464 = vmatpush.bf16.msra.mxu0 %v441
        %465 = vmatmul.bf16.gmra.mxu0 %v407
        %v466 = vpop.f32.mrf.mxu0
        %v467 = vadd.f32 0.0, %v466
        %v468 = vpop.f32.mrf.mxu0
        %v469 = vadd.f32 0.0, %v468
        %470 = vdwg.mxu0
        %471 = vst [vmem:[#allocation2] sm:$0xff] %v467
        %472 = vst [vmem:[#allocation2 + $0x8] sm:$0xff] %v469
        %v473 = vld [vmem:[#allocation3] sm:$0xf]
        %v474 = vld [vmem:[#allocation3 + $0x4] sm:$0xf]
        %v475 = vld [vmem:[#allocation3 + $0x8] sm:$0xf]
        %v476 = vld [vmem:[#allocation3 + $0xc] sm:$0xf]
        %v477 = vld [vmem:[#allocation3 + $0x10] sm:$0xf]
        %v478 = vld [vmem:[#allocation3 + $0x14] sm:$0xf]
        %v479 = vld [vmem:[#allocation3 + $0x18] sm:$0xf]
        %v480 = vld [vmem:[#allocation3 + $0x1c] sm:$0xf]
        %v481 = vld [vmem:[#allocation3 + $0x20] sm:$0xf]
        %v482 = vld [vmem:[#allocation3 + $0x24] sm:$0xf]
        %v483 = vld [vmem:[#allocation3 + $0x28] sm:$0xf]
        %v484 = vld [vmem:[#allocation3 + $0x2c] sm:$0xf]
        %v485 = vld [vmem:[#allocation3 + $0x30] sm:$0xf]
        %v486 = vld [vmem:[#allocation3 + $0x34] sm:$0xf]
        %v487 = vld [vmem:[#allocation3 + $0x38] sm:$0xf]
        %v488 = vld [vmem:[#allocation3 + $0x3c] sm:$0xf]
        %v505 = vunpack.c.l.b16 %v473
        %v506 = vunpack.c.l.b16 %v474
        %v507 = vunpack.c.l.b16 %v475
        %v508 = vunpack.c.l.b16 %v476
        %v509 = vunpack.c.l.b16 %v477
        %v510 = vunpack.c.l.b16 %v478
        %v511 = vunpack.c.l.b16 %v479
        %v512 = vunpack.c.l.b16 %v480
        %v513 = vunpack.c.l.b16 %v481
        %v514 = vunpack.c.l.b16 %v482
        %v515 = vunpack.c.l.b16 %v483
        %v516 = vunpack.c.l.b16 %v484
        %v517 = vunpack.c.l.b16 %v485
        %v518 = vunpack.c.l.b16 %v486
        %v519 = vunpack.c.l.b16 %v487
        %v520 = vunpack.c.l.b16 %v488
        %v521 = vpack.c.b16 %v506, %v505
        %v522 = vpack.c.b16 %v508, %v507
        %v523 = vpack.c.b16 %v510, %v509
        %v524 = vpack.c.b16 %v512, %v511
        %v525 = vpack.c.b16 %v514, %v513
        %v526 = vpack.c.b16 %v516, %v515
        %v527 = vpack.c.b16 %v518, %v517
        %v528 = vpack.c.b16 %v520, %v519
        %537 = vmatpush.bf16.msra.mxu0 %v528
        %538 = vmatpush.bf16.msra.mxu0 %v527
        %539 = vmatpush.bf16.msra.mxu0 %v526
        %540 = vmatpush.bf16.msra.mxu0 %v525
        %541 = vmatpush.bf16.msra.mxu0 %v524
        %542 = vmatpush.bf16.msra.mxu0 %v523
        %543 = vmatpush.bf16.msra.mxu0 %v522
        %544 = vmatpush.bf16.msra.mxu0 %v521
        %545 = vmatmul.bf16.gmra.mxu0 %v407
        %v546 = vpop.f32.mrf.mxu0
        %v547 = vadd.f32 0.0, %v546
        %v548 = vpop.f32.mrf.mxu0
        %v549 = vadd.f32 0.0, %v548
        %550 = vdwg.mxu0
        %v551 = vld [vmem:[#allocation2 + $0x3] sm:$0xff]
        %v552 = vld [vmem:[#allocation2 + $0xb] sm:$0x1f]
        %v553 = vadd.f32 %v551, %v547
        %v554 = vadd.f32 %v552, %v549
        %555 = vst [vmem:[#allocation2 + $0x3] sm:$0xff] %v553
        %556 = vst [vmem:[#allocation2 + $0xb] sm:$0x1f] %v554
        %s557 = scalar_lea.vmem [#allocation3], 64
        %v558 = vld [vmem:[%s557] sm:$0xf]
        %v559 = vld [vmem:[%s557 + $0x4] sm:$0xf]
        %v560 = vld [vmem:[%s557 + $0x8] sm:$0xf]
        %v561 = vld [vmem:[%s557 + $0xc] sm:$0xf]
        %v562 = vld [vmem:[%s557 + $0x10] sm:$0xf]
        %v563 = vld [vmem:[%s557 + $0x14] sm:$0xf]
        %v564 = vld [vmem:[%s557 + $0x18] sm:$0xf]
        %v565 = vld [vmem:[%s557 + $0x1c] sm:$0xf]
        %v566 = vld [vmem:[%s557 + $0x20] sm:$0xf]
        %v567 = vld [vmem:[%s557 + $0x24] sm:$0xf]
        %v568 = vld [vmem:[%s557 + $0x28] sm:$0xf]
        %v569 = vld [vmem:[%s557 + $0x2c] sm:$0xf]
        %v570 = vld [vmem:[%s557 + $0x30] sm:$0xf]
        %v571 = vld [vmem:[%s557 + $0x34] sm:$0xf]
        %v572 = vld [vmem:[%s557 + $0x38] sm:$0xf]
        %v573 = vld [vmem:[%s557 + $0x3c] sm:$0xf]
        %v590 = vunpack.c.l.b16 %v558
        %v591 = vunpack.c.l.b16 %v559
        %v592 = vunpack.c.l.b16 %v560
        %v593 = vunpack.c.l.b16 %v561
        %v594 = vunpack.c.l.b16 %v562
        %v595 = vunpack.c.l.b16 %v563
        %v596 = vunpack.c.l.b16 %v564
        %v597 = vunpack.c.l.b16 %v565
        %v598 = vunpack.c.l.b16 %v566
        %v599 = vunpack.c.l.b16 %v567
        %v600 = vunpack.c.l.b16 %v568
        %v601 = vunpack.c.l.b16 %v569
        %v602 = vunpack.c.l.b16 %v570
        %v603 = vunpack.c.l.b16 %v571
        %v604 = vunpack.c.l.b16 %v572
        %v605 = vunpack.c.l.b16 %v573
        %v606 = vpack.c.b16 %v591, %v590
        %v607 = vpack.c.b16 %v593, %v592
        %v608 = vpack.c.b16 %v595, %v594
        %v609 = vpack.c.b16 %v597, %v596
        %v610 = vpack.c.b16 %v599, %v598
        %v611 = vpack.c.b16 %v601, %v600
        %v612 = vpack.c.b16 %v603, %v602
        %v613 = vpack.c.b16 %v605, %v604
        %622 = vmatpush.bf16.msra.mxu0 %v613
        %623 = vmatpush.bf16.msra.mxu0 %v612
        %624 = vmatpush.bf16.msra.mxu0 %v611
        %625 = vmatpush.bf16.msra.mxu0 %v610
        %626 = vmatpush.bf16.msra.mxu0 %v609
        %627 = vmatpush.bf16.msra.mxu0 %v608
        %628 = vmatpush.bf16.msra.mxu0 %v607
        %629 = vmatpush.bf16.msra.mxu0 %v606
        %630 = vmatmul.bf16.gmra.mxu0 %v407
        %v631 = vpop.f32.mrf.mxu0
        %v632 = vadd.f32 0.0, %v631
        %v633 = vpop.f32.mrf.mxu0
        %v634 = vadd.f32 0.0, %v633
        %635 = vdwg.mxu0
        %v636 = vld [vmem:[#allocation2 + $0x2] sm:$0xff]
        %v637 = vld [vmem:[#allocation2 + $0xa] sm:$0x3f]
        %v638 = vadd.f32 %v636, %v632
        %v639 = vadd.f32 %v637, %v634
        %640 = vst [vmem:[#allocation2 + $0x2] sm:$0xff] %v638
        %641 = vst [vmem:[#allocation2 + $0xa] sm:$0x3f] %v639
        %s642 = scalar_lea.vmem [#allocation3], 128
        %v643 = vld [vmem:[%s642] sm:$0xf]
        %v644 = vld [vmem:[%s642 + $0x4] sm:$0xf]
        %v645 = vld [vmem:[%s642 + $0x8] sm:$0xf]
        %v646 = vld [vmem:[%s642 + $0xc] sm:$0xf]
        %v647 = vld [vmem:[%s642 + $0x10] sm:$0xf]
        %v648 = vld [vmem:[%s642 + $0x14] sm:$0xf]
        %v649 = vld [vmem:[%s642 + $0x18] sm:$0xf]
        %v650 = vld [vmem:[%s642 + $0x1c] sm:$0xf]
        %v651 = vld [vmem:[%s642 + $0x20] sm:$0xf]
        %v652 = vld [vmem:[%s642 + $0x24] sm:$0xf]
        %v653 = vld [vmem:[%s642 + $0x28] sm:$0xf]
        %v654 = vld [vmem:[%s642 + $0x2c] sm:$0xf]
        %v655 = vld [vmem:[%s642 + $0x30] sm:$0xf]
        %v656 = vld [vmem:[%s642 + $0x34] sm:$0xf]
        %v657 = vld [vmem:[%s642 + $0x38] sm:$0xf]
        %v658 = vld [vmem:[%s642 + $0x3c] sm:$0xf]
        %v675 = vunpack.c.l.b16 %v643
        %v676 = vunpack.c.l.b16 %v644
        %v677 = vunpack.c.l.b16 %v645
        %v678 = vunpack.c.l.b16 %v646
        %v679 = vunpack.c.l.b16 %v647
        %v680 = vunpack.c.l.b16 %v648
        %v681 = vunpack.c.l.b16 %v649
        %v682 = vunpack.c.l.b16 %v650
        %v683 = vunpack.c.l.b16 %v651
        %v684 = vunpack.c.l.b16 %v652
        %v685 = vunpack.c.l.b16 %v653
        %v686 = vunpack.c.l.b16 %v654
        %v687 = vunpack.c.l.b16 %v655
        %v688 = vunpack.c.l.b16 %v656
        %v689 = vunpack.c.l.b16 %v657
        %v690 = vunpack.c.l.b16 %v658
        %v691 = vpack.c.b16 %v676, %v675
        %v692 = vpack.c.b16 %v678, %v677
        %v693 = vpack.c.b16 %v680, %v679
        %v694 = vpack.c.b16 %v682, %v681
        %v695 = vpack.c.b16 %v684, %v683
        %v696 = vpack.c.b16 %v686, %v685
        %v697 = vpack.c.b16 %v688, %v687
        %v698 = vpack.c.b16 %v690, %v689
        %707 = vmatpush.bf16.msra.mxu0 %v698
        %708 = vmatpush.bf16.msra.mxu0 %v697
        %709 = vmatpush.bf16.msra.mxu0 %v696
        %710 = vmatpush.bf16.msra.mxu0 %v695
        %711 = vmatpush.bf16.msra.mxu0 %v694
        %712 = vmatpush.bf16.msra.mxu0 %v693
        %713 = vmatpush.bf16.msra.mxu0 %v692
        %714 = vmatpush.bf16.msra.mxu0 %v691
        %715 = vmatmul.bf16.gmra.mxu0 %v407
        %v716 = vpop.f32.mrf.mxu0
        %v717 = vadd.f32 0.0, %v716
        %v718 = vpop.f32.mrf.mxu0
        %v719 = vadd.f32 0.0, %v718
        %720 = vdwg.mxu0
        %v721 = vld [vmem:[#allocation2 + $0x1] sm:$0xff]
        %v722 = vld [vmem:[#allocation2 + $0x9] sm:$0x7f]
        %v723 = vadd.f32 %v721, %v717
        %v724 = vadd.f32 %v722, %v719
        %725 = vst [vmem:[#allocation2 + $0x1] sm:$0xff] %v723
        %726 = vst [vmem:[#allocation2 + $0x9] sm:$0x7f] %v724
        %s727 = scalar_lea.vmem [#allocation3], 256
        %v728 = vld [vmem:[%s727] sm:$0xf]
        %v729 = vld [vmem:[%s727 + $0x4] sm:$0xf]
        %v730 = vld [vmem:[%s727 + $0x8] sm:$0xf]
        %v731 = vld [vmem:[%s727 + $0xc] sm:$0xf]
        %v732 = vld [vmem:[%s727 + $0x10] sm:$0xf]
        %v733 = vld [vmem:[%s727 + $0x14] sm:$0xf]
        %v734 = vld [vmem:[%s727 + $0x18] sm:$0xf]
        %v735 = vld [vmem:[%s727 + $0x1c] sm:$0xf]
        %v736 = vld [vmem:[%s727 + $0x20] sm:$0xf]
        %v737 = vld [vmem:[%s727 + $0x24] sm:$0xf]
        %v738 = vld [vmem:[%s727 + $0x28] sm:$0xf]
        %v739 = vld [vmem:[%s727 + $0x2c] sm:$0xf]
        %v740 = vld [vmem:[%s727 + $0x30] sm:$0xf]
        %v741 = vld [vmem:[%s727 + $0x34] sm:$0xf]
        %v742 = vld [vmem:[%s727 + $0x38] sm:$0xf]
        %v743 = vld [vmem:[%s727 + $0x3c] sm:$0xf]
        %v760 = vunpack.c.l.b16 %v728
        %v761 = vunpack.c.l.b16 %v729
        %v762 = vunpack.c.l.b16 %v730
        %v763 = vunpack.c.l.b16 %v731
        %v764 = vunpack.c.l.b16 %v732
        %v765 = vunpack.c.l.b16 %v733
        %v766 = vunpack.c.l.b16 %v734
        %v767 = vunpack.c.l.b16 %v735
        %v768 = vunpack.c.l.b16 %v736
        %v769 = vunpack.c.l.b16 %v737
        %v770 = vunpack.c.l.b16 %v738
        %v771 = vunpack.c.l.b16 %v739
        %v772 = vunpack.c.l.b16 %v740
        %v773 = vunpack.c.l.b16 %v741
        %v774 = vunpack.c.l.b16 %v742
        %v775 = vunpack.c.l.b16 %v743
        %v776 = vpack.c.b16 %v761, %v760
        %v777 = vpack.c.b16 %v763, %v762
        %v778 = vpack.c.b16 %v765, %v764
        %v779 = vpack.c.b16 %v767, %v766
        %v780 = vpack.c.b16 %v769, %v768
        %v781 = vpack.c.b16 %v771, %v770
        %v782 = vpack.c.b16 %v773, %v772
        %v783 = vpack.c.b16 %v775, %v774
        %792 = vmatpush.bf16.msra.mxu0 %v783
        %793 = vmatpush.bf16.msra.mxu0 %v782
        %794 = vmatpush.bf16.msra.mxu0 %v781
        %795 = vmatpush.bf16.msra.mxu0 %v780
        %796 = vmatpush.bf16.msra.mxu0 %v779
        %797 = vmatpush.bf16.msra.mxu0 %v778
        %798 = vmatpush.bf16.msra.mxu0 %v777
        %799 = vmatpush.bf16.msra.mxu0 %v776
        %800 = vmatmul.bf16.gmra.mxu0 %v407
        %v801 = vpop.f32.mrf.mxu0
        %v802 = vadd.f32 0.0, %v801
        %v803 = vpop.f32.mrf.mxu0
        %v804 = vadd.f32 0.0, %v803
        %805 = vdwg.mxu0
        %v806 = vld [vmem:[#allocation2] sm:$0xff]
        %v807 = vld [vmem:[#allocation2 + $0x8] sm:$0x7f]
        %vm810 = vcmask 1046528
        %v811 = vrot.slane %v802, 1
        %v812 = vrot.slane %v804, 1
        %v813 = vsel %vm810, %v811, %v812
        %v816 = vadd.f32 %v806, %v813
        %v817 = vadd.f32 %v807, %v812
        %818 = vst [vmem:[#allocation2] sm:$0xff] %v816
        %819 = vst [vmem:[#allocation2 + $0x8] sm:$0x7f] %v817
        %s820 = scalar_lea.vmem [#allocation3], 320
        %v821 = vld [vmem:[%s820] sm:$0xf]
        %v822 = vld [vmem:[%s820 + $0x4] sm:$0xf]
        %v823 = vld [vmem:[%s820 + $0x8] sm:$0xf]
        %v824 = vld [vmem:[%s820 + $0xc] sm:$0xf]
        %v825 = vld [vmem:[%s820 + $0x10] sm:$0xf]
        %v826 = vld [vmem:[%s820 + $0x14] sm:$0xf]
        %v827 = vld [vmem:[%s820 + $0x18] sm:$0xf]
        %v828 = vld [vmem:[%s820 + $0x1c] sm:$0xf]
        %v829 = vld [vmem:[%s820 + $0x20] sm:$0xf]
        %v830 = vld [vmem:[%s820 + $0x24] sm:$0xf]
        %v831 = vld [vmem:[%s820 + $0x28] sm:$0xf]
        %v832 = vld [vmem:[%s820 + $0x2c] sm:$0xf]
        %v833 = vld [vmem:[%s820 + $0x30] sm:$0xf]
        %v834 = vld [vmem:[%s820 + $0x34] sm:$0xf]
        %v835 = vld [vmem:[%s820 + $0x38] sm:$0xf]
        %v836 = vld [vmem:[%s820 + $0x3c] sm:$0xf]
        %v853 = vunpack.c.l.b16 %v821
        %v854 = vunpack.c.l.b16 %v822
        %v855 = vunpack.c.l.b16 %v823
        %v856 = vunpack.c.l.b16 %v824
        %v857 = vunpack.c.l.b16 %v825
        %v858 = vunpack.c.l.b16 %v826
        %v859 = vunpack.c.l.b16 %v827
        %v860 = vunpack.c.l.b16 %v828
        %v861 = vunpack.c.l.b16 %v829
        %v862 = vunpack.c.l.b16 %v830
        %v863 = vunpack.c.l.b16 %v831
        %v864 = vunpack.c.l.b16 %v832
        %v865 = vunpack.c.l.b16 %v833
        %v866 = vunpack.c.l.b16 %v834
        %v867 = vunpack.c.l.b16 %v835
        %v868 = vunpack.c.l.b16 %v836
        %v869 = vpack.c.b16 %v854, %v853
        %v870 = vpack.c.b16 %v856, %v855
        %v871 = vpack.c.b16 %v858, %v857
        %v872 = vpack.c.b16 %v860, %v859
        %v873 = vpack.c.b16 %v862, %v861
        %v874 = vpack.c.b16 %v864, %v863
        %v875 = vpack.c.b16 %v866, %v865
        %v876 = vpack.c.b16 %v868, %v867
        %885 = vmatpush.bf16.msra.mxu0 %v876
        %886 = vmatpush.bf16.msra.mxu0 %v875
        %887 = vmatpush.bf16.msra.mxu0 %v874
        %888 = vmatpush.bf16.msra.mxu0 %v873
        %889 = vmatpush.bf16.msra.mxu0 %v872
        %890 = vmatpush.bf16.msra.mxu0 %v871
        %891 = vmatpush.bf16.msra.mxu0 %v870
        %892 = vmatpush.bf16.msra.mxu0 %v869
        %893 = vmatmul.bf16.gmra.mxu0 %v407
        %v894 = vpop.f32.mrf.mxu0
        %v895 = vadd.f32 0.0, %v894
        %v896 = vpop.f32.mrf.mxu0
        %v897 = vadd.f32 0.0, %v896
        %898 = vdwg.mxu0
        %v899 = vld [vmem:[#allocation2] sm:$0xff]
        %v900 = vld [vmem:[#allocation2 + $0x8] sm:$0x3f]
        %vm903 = vcmask 1045504
        %v904 = vrot.slane %v895, 2
        %v905 = vrot.slane %v897, 2
        %v906 = vsel %vm903, %v904, %v905
        %v909 = vadd.f32 %v899, %v906
        %v910 = vadd.f32 %v900, %v905
        %911 = vst [vmem:[#allocation2] sm:$0xff] %v909
        %912 = vst [vmem:[#allocation2 + $0x8] sm:$0x3f] %v910
        %s913 = scalar_lea.vmem [#allocation3], 384
        %v914 = vld [vmem:[%s913] sm:$0xf]
        %v915 = vld [vmem:[%s913 + $0x4] sm:$0xf]
        %v916 = vld [vmem:[%s913 + $0x8] sm:$0xf]
        %v917 = vld [vmem:[%s913 + $0xc] sm:$0xf]
        %v918 = vld [vmem:[%s913 + $0x10] sm:$0xf]
        %v919 = vld [vmem:[%s913 + $0x14] sm:$0xf]
        %v920 = vld [vmem:[%s913 + $0x18] sm:$0xf]
        %v921 = vld [vmem:[%s913 + $0x1c] sm:$0xf]
        %v922 = vld [vmem:[%s913 + $0x20] sm:$0xf]
        %v923 = vld [vmem:[%s913 + $0x24] sm:$0xf]
        %v924 = vld [vmem:[%s913 + $0x28] sm:$0xf]
        %v925 = vld [vmem:[%s913 + $0x2c] sm:$0xf]
        %v926 = vld [vmem:[%s913 + $0x30] sm:$0xf]
        %v927 = vld [vmem:[%s913 + $0x34] sm:$0xf]
        %v928 = vld [vmem:[%s913 + $0x38] sm:$0xf]
        %v929 = vld [vmem:[%s913 + $0x3c] sm:$0xf]
        %v946 = vunpack.c.l.b16 %v914
        %v947 = vunpack.c.l.b16 %v915
        %v948 = vunpack.c.l.b16 %v916
        %v949 = vunpack.c.l.b16 %v917
        %v950 = vunpack.c.l.b16 %v918
        %v951 = vunpack.c.l.b16 %v919
        %v952 = vunpack.c.l.b16 %v920
        %v953 = vunpack.c.l.b16 %v921
        %v954 = vunpack.c.l.b16 %v922
        %v955 = vunpack.c.l.b16 %v923
        %v956 = vunpack.c.l.b16 %v924
        %v957 = vunpack.c.l.b16 %v925
        %v958 = vunpack.c.l.b16 %v926
        %v959 = vunpack.c.l.b16 %v927
        %v960 = vunpack.c.l.b16 %v928
        %v961 = vunpack.c.l.b16 %v929
        %v962 = vpack.c.b16 %v947, %v946
        %v963 = vpack.c.b16 %v949, %v948
        %v964 = vpack.c.b16 %v951, %v950
        %v965 = vpack.c.b16 %v953, %v952
        %v966 = vpack.c.b16 %v955, %v954
        %v967 = vpack.c.b16 %v957, %v956
        %v968 = vpack.c.b16 %v959, %v958
        %v969 = vpack.c.b16 %v961, %v960
        %978 = vmatpush.bf16.msra.mxu0 %v969
        %979 = vmatpush.bf16.msra.mxu0 %v968
        %980 = vmatpush.bf16.msra.mxu0 %v967
        %981 = vmatpush.bf16.msra.mxu0 %v966
        %982 = vmatpush.bf16.msra.mxu0 %v965
        %983 = vmatpush.bf16.msra.mxu0 %v964
        %984 = vmatpush.bf16.msra.mxu0 %v963
        %985 = vmatpush.bf16.msra.mxu0 %v962
        %986 = vmatmul.bf16.gmra.mxu0 %v407
        %v987 = vpop.f32.mrf.mxu0
        %v988 = vadd.f32 0.0, %v987
        %v989 = vpop.f32.mrf.mxu0
        %v990 = vadd.f32 0.0, %v989
        %991 = vdwg.mxu0
        %v992 = vld [vmem:[#allocation2] sm:$0xff]
        %v993 = vld [vmem:[#allocation2 + $0x8] sm:$0x1f]
        %vm996 = vcmask 1044480
        %v997 = vrot.slane %v988, 3
        %v998 = vrot.slane %v990, 3
        %v999 = vsel %vm996, %v997, %v998
        %v1002 = vadd.f32 %v992, %v999
        %v1003 = vadd.f32 %v993, %v998
        %1004 = vst [vmem:[#allocation2] sm:$0xff] %v1002
        %1005 = vst [vmem:[#allocation2 + $0x8] sm:$0x1f] %v1003
        %s1006 = scalar_lea.vmem [#allocation3], 448
        %v1007 = vld [vmem:[%s1006] sm:$0xf]
        %v1008 = vld [vmem:[%s1006 + $0x4] sm:$0xf]
        %v1009 = vld [vmem:[%s1006 + $0x8] sm:$0xf]
        %v1010 = vld [vmem:[%s1006 + $0xc] sm:$0xf]
        %v1011 = vld [vmem:[%s1006 + $0x10] sm:$0xf]
        %v1012 = vld [vmem:[%s1006 + $0x14] sm:$0xf]
        %v1013 = vld [vmem:[%s1006 + $0x18] sm:$0xf]
        %v1014 = vld [vmem:[%s1006 + $0x1c] sm:$0xf]
        %v1015 = vld [vmem:[%s1006 + $0x20] sm:$0xf]
        %v1016 = vld [vmem:[%s1006 + $0x24] sm:$0xf]
        %v1017 = vld [vmem:[%s1006 + $0x28] sm:$0xf]
        %v1018 = vld [vmem:[%s1006 + $0x2c] sm:$0xf]
        %v1019 = vld [vmem:[%s1006 + $0x30] sm:$0xf]
        %v1020 = vld [vmem:[%s1006 + $0x34] sm:$0xf]
        %v1021 = vld [vmem:[%s1006 + $0x38] sm:$0xf]
        %v1022 = vld [vmem:[%s1006 + $0x3c] sm:$0xf]
        %v1039 = vunpack.c.l.b16 %v1007
        %v1040 = vunpack.c.l.b16 %v1008
        %v1041 = vunpack.c.l.b16 %v1009
        %v1042 = vunpack.c.l.b16 %v1010
        %v1043 = vunpack.c.l.b16 %v1011
        %v1044 = vunpack.c.l.b16 %v1012
        %v1045 = vunpack.c.l.b16 %v1013
        %v1046 = vunpack.c.l.b16 %v1014
        %v1047 = vunpack.c.l.b16 %v1015
        %v1048 = vunpack.c.l.b16 %v1016
        %v1049 = vunpack.c.l.b16 %v1017
        %v1050 = vunpack.c.l.b16 %v1018
        %v1051 = vunpack.c.l.b16 %v1019
        %v1052 = vunpack.c.l.b16 %v1020
        %v1053 = vunpack.c.l.b16 %v1021
        %v1054 = vunpack.c.l.b16 %v1022
        %v1055 = vpack.c.b16 %v1040, %v1039
        %v1056 = vpack.c.b16 %v1042, %v1041
        %v1057 = vpack.c.b16 %v1044, %v1043
        %v1058 = vpack.c.b16 %v1046, %v1045
        %v1059 = vpack.c.b16 %v1048, %v1047
        %v1060 = vpack.c.b16 %v1050, %v1049
        %v1061 = vpack.c.b16 %v1052, %v1051
        %v1062 = vpack.c.b16 %v1054, %v1053
        %1071 = vmatpush.bf16.msra.mxu0 %v1062
        %1072 = vmatpush.bf16.msra.mxu0 %v1061
        %1073 = vmatpush.bf16.msra.mxu0 %v1060
        %1074 = vmatpush.bf16.msra.mxu0 %v1059
        %1075 = vmatpush.bf16.msra.mxu0 %v1058
        %1076 = vmatpush.bf16.msra.mxu0 %v1057
        %1077 = vmatpush.bf16.msra.mxu0 %v1056
        %1078 = vmatpush.bf16.msra.mxu0 %v1055
        %1079 = vmatmul.bf16.gmra.mxu0 %v407
        %v1080 = vpop.f32.mrf.mxu0
        %v1081 = vadd.f32 0.0, %v1080
        %v1082 = vpop.f32.mrf.mxu0
        %v1083 = vadd.f32 0.0, %v1082
        %1084 = vdwg.mxu0
        %v1085 = vld [vmem:[#allocation2] sm:$0xff]
        %v1086 = vld [vmem:[#allocation2 + $0x8] sm:$0xf]
        %vm1089 = vcmask 1043456
        %v1090 = vrot.slane %v1081, 4
        %v1091 = vrot.slane %v1083, 4
        %v1092 = vsel %vm1089, %v1090, %v1091
        %v1095 = vadd.f32 %v1085, %v1092
        %v1096 = vadd.f32 %v1086, %v1091
        %1097 = vst [vmem:[#allocation2] sm:$0xff] %v1095
        %1098 = vst [vmem:[#allocation2 + $0x8] sm:$0xf] %v1096
        %v1099 = vld [vmem:[#allocation2] sm:$0xff]
        %v1100 = vld [vmem:[#allocation2 + $0x8] sm:$0xff]
        %v1101 = vpack.c.bf16 %v1099, %v1099
        %v1102 = vpack.c.bf16 %v1100, %v1100
        %1103 = vst [vmem:[%s350] sm:$0xf] %v1101
        %1104 = vst [vmem:[%s350 + $0x4] sm:$0xf] %v1102
        %v1105 = vadd.f32 %v1099, %v1100
        %v1106 = vrot.slane %v1105, 4
        %v1107 = vadd.f32 %v1105, %v1106
        %v1108 = vrot.slane %v1107, 2
        %v1109 = vadd.f32 %v1107, %v1108
        %v1110 = vrot.slane %v1109, 1
        %v1111 = vadd.f32 %v1109, %v1110
        %v1112 = vadd.f32 %v1111, 0.0
        %v1113 = vmul.f32 %v1099, %v1099
        %v1114 = vmul.f32 %v1100, %v1100
        %v1115 = vadd.f32 %v1113, %v1114
        %v1116 = vrot.slane %v1115, 4
        %v1117 = vadd.f32 %v1115, %v1116
        %v1118 = vrot.slane %v1117, 2
        %v1119 = vadd.f32 %v1117, %v1118
        %v1120 = vrot.slane %v1119, 1
        %v1121 = vadd.f32 %v1119, %v1120
        %v1122 = vadd.f32 %v1121, 0.0
        %v1139 = vunpack.c.l.b16 %v368
        %v1140 = vunpack.c.l.b16 %v369
        %v1141 = vunpack.c.l.b16 %v370
        %v1142 = vunpack.c.l.b16 %v371
        %v1143 = vunpack.c.l.b16 %v372
        %v1144 = vunpack.c.l.b16 %v373
        %v1145 = vunpack.c.l.b16 %v374
        %v1146 = vunpack.c.l.b16 %v375
        %v1147 = vunpack.c.l.b16 %v376
        %v1148 = vunpack.c.l.b16 %v377
        %v1149 = vunpack.c.l.b16 %v378
        %v1150 = vunpack.c.l.b16 %v379
        %v1151 = vunpack.c.l.b16 %v380
        %v1152 = vunpack.c.l.b16 %v381
        %v1153 = vunpack.c.l.b16 %v382
        %v1154 = vunpack.c.l.b16 %v383
        %v1155 = vpack.c.b16 %v1140, %v1139
        %v1156 = vpack.c.b16 %v1142, %v1141
        %v1157 = vpack.c.b16 %v1144, %v1143
        %v1158 = vpack.c.b16 %v1146, %v1145
        %v1159 = vpack.c.b16 %v1148, %v1147
        %v1160 = vpack.c.b16 %v1150, %v1149
        %v1161 = vpack.c.b16 %v1152, %v1151
        %v1162 = vpack.c.b16 %v1154, %v1153
        %1171 = vmatpush.bf16.msra.mxu0 %v1162
        %1172 = vmatpush.bf16.msra.mxu0 %v1161
        %1173 = vmatpush.bf16.msra.mxu0 %v1160
        %1174 = vmatpush.bf16.msra.mxu0 %v1159
        %1175 = vmatpush.bf16.msra.mxu0 %v1158
        %1176 = vmatpush.bf16.msra.mxu0 %v1157
        %1177 = vmatpush.bf16.msra.mxu0 %v1156
        %1178 = vmatpush.bf16.msra.mxu0 %v1155
        %1179 = vmatmul.bf16.gmra.mxu0 %v407
        %v1180 = vpop.f32.mrf.mxu0
        %v1181 = vadd.f32 0.0, %v1180
        %v1182 = vpop.f32.mrf.mxu0
        %v1183 = vadd.f32 0.0, %v1182
        %1184 = vdwg.mxu0
        %v1185 = vpack.c.bf16 %v1181, %v1181
        %v1186 = vpack.c.bf16 %v1183, %v1183
        %1187 = vst [vmem:[%s361] sm:$0xf] %v1185
        %1188 = vst [vmem:[%s361 + $0x4] sm:$0xf] %v1186
        %v1189 = vadd.f32 %v1181, %v1183
        %v1190 = vrot.slane %v1189, 4
        %v1191 = vadd.f32 %v1189, %v1190
        %v1192 = vrot.slane %v1191, 2
        %v1193 = vadd.f32 %v1191, %v1192
        %v1194 = vrot.slane %v1193, 1
        %v1195 = vadd.f32 %v1193, %v1194
        %v1196 = vadd.f32 %v1195, 0.0
        %v1197 = vmul.f32 %v1181, %v1181
        %v1198 = vmul.f32 %v1183, %v1183
        %v1199 = vadd.f32 %v1197, %v1198
        %v1200 = vrot.slane %v1199, 4
        %v1201 = vadd.f32 %v1199, %v1200
        %v1202 = vrot.slane %v1201, 2
        %v1203 = vadd.f32 %v1201, %v1202
        %v1204 = vrot.slane %v1203, 1
        %v1205 = vadd.f32 %v1203, %v1204
        %v1206 = vadd.f32 %v1205, 0.0
        %1207 = vst [vmem:[%s353] sm:$0x1] %v1112
        %1208 = vst [vmem:[%s356] sm:$0x1] %v1122
        %1209 = vst [vmem:[%s364] sm:$0x1] %v1196
        %1210 = vst [vmem:[%s367] sm:$0x1] %v1206
        %p1211 = scmp.lt.s32.totalorder %s21, 1
        %s1212 = scalar_select %p1211, %s21, 1
        %s1213 = smul.addr %s1212, 2
        %s1214 = smul.addr %s1213, 4
        %s1215 = scalar_lea.vmem %s3, %s1214
        %p1216 = scmp.lt.s32.totalorder %s21, 1
        %s1217 = scalar_select %p1216, %s21, 1
        %s1218 = scalar_lea.vmem %s4, %s1217
        %p1219 = scmp.lt.s32.totalorder %s21, 1
        %s1220 = scalar_select %p1219, %s21, 1
        %s1221 = scalar_lea.vmem %s5, %s1220
        %p1222 = scmp.lt.s32.totalorder %s21, 1
        %s1223 = scalar_select %p1222, %s21, 1
        %s1224 = smul.addr %s1223, 2
        %s1225 = smul.addr %s1224, 4
        %s1226 = scalar_lea.vmem %s6, %s1225
        %p1227 = scmp.lt.s32.totalorder %s21, 1
        %s1228 = scalar_select %p1227, %s21, 1
        %s1229 = scalar_lea.vmem %s7, %s1228
        %p1230 = scmp.lt.s32.totalorder %s21, 1
        %s1231 = scalar_select %p1230, %s21, 1
        %s1232 = scalar_lea.vmem %s8, %s1231
        // Predicated region
        $region37: #{_lambda_.4} parent=31 // pred_check
          %p1233 = pneg %p107
        $region38: #{_lambda_.4} parent=31 // pred_check_branch
          %1235 = sbr.rel (%p1233) target = $region40
        $region39: #{_lambda_.4} parent=31 // pred_region
          _
        $region40: #{_lambda_.4} parent=31 // pred_fallthru
          _
        // Predicated region
        $region41: #{_lambda_.4} parent=31 // pred_check
          %p1236 = pneg %p133
        $region42: #{_lambda_.4} parent=31 // pred_check_branch
          %1238 = sbr.rel (%p1236) target = $region44
        $region43: #{_lambda_.4} parent=31 // pred_region
          _
        $region44: #{_lambda_.4} parent=31 // pred_fallthru
          _
        // Predicated region
        $region45: #{_lambda_.4} parent=31 // pred_check
          %p1239 = pneg %p159
        $region46: #{_lambda_.4} parent=31 // pred_check_branch
          %1241 = sbr.rel (%p1239) target = $region48
        $region47: #{_lambda_.4} parent=31 // pred_region
          _
        $region48: #{_lambda_.4} parent=31 // pred_fallthru
          _
        // Predicated region
        $region49: #{_lambda_.4} parent=31 // pred_check
          %p1242 = pneg %p185
        $region50: #{_lambda_.4} parent=31 // pred_check_branch
          %1244 = sbr.rel (%p1242) target = $region52
        $region51: #{_lambda_.4} parent=31 // pred_region
          _
        $region52: #{_lambda_.4} parent=31 // pred_fallthru
          _
        // Predicated region
        $region53: #{_lambda_.4} parent=31 // pred_check
          %p1245 = pneg %p211
        $region54: #{_lambda_.4} parent=31 // pred_check_branch
          %1247 = sbr.rel (%p1245) target = $region56
        $region55: #{_lambda_.4} parent=31 // pred_region
          _
        $region56: #{_lambda_.4} parent=31 // pred_fallthru
          _
        // Predicated region
        $region57: #{_lambda_.4} parent=31 // pred_check
          %p1248 = pneg %p237
        $region58: #{_lambda_.4} parent=31 // pred_check_branch
          %1250 = sbr.rel (%p1248) target = $region60
        $region59: #{_lambda_.4} parent=31 // pred_region
          _
        $region60: #{_lambda_.4} parent=31 // pred_fallthru
          _
      $region32: #{_lambda_.4} parent=5 // pred_fallthru
        _
      %p1251 = scmp.le.s32.totalorder 2, %s16
      // Predicated region
      $region61: #{_lambda_.4} parent=5 // pred_check
        %p1252 = pneg %p1251
      $region62: #{_lambda_.4} parent=5 // pred_check_branch
        %1254 = sbr.rel (%p1252) target = $region64
      $region63: #{_lambda_.4} parent=5 // pred_region
        %s1255 = ssub.s32 %s16, 2
        // Predicated region
        $region65: #{_lambda_.4} parent=63 // pred_check
          %p1256 = pneg %p113
        $region66: #{_lambda_.4} parent=63 // pred_check_branch
          %1258 = sbr.rel (%p1256) target = $region68
        $region67: #{_lambda_.4} parent=63 // pred_region
          %p1259 = scmp.lt.s32.totalorder %s22, 1
          %s1260 = scalar_select %p1259, %s22, 1
          %s1261 = smul.addr %s1260, 2
          %s1262 = smul.addr %s1261, 4
          %s1263 = scalar_lea.vmem %s3, %s1262
        $region68: #{_lambda_.4} parent=63 // pred_fallthru
          _
        // Predicated region
        $region69: #{_lambda_.4} parent=63 // pred_check
          %p1264 = pneg %p139
        $region70: #{_lambda_.4} parent=63 // pred_check_branch
          %1266 = sbr.rel (%p1264) target = $region72
        $region71: #{_lambda_.4} parent=63 // pred_region
          %p1267 = scmp.lt.s32.totalorder %s22, 1
          %s1268 = scalar_select %p1267, %s22, 1
          %s1269 = scalar_lea.vmem %s4, %s1268
        $region72: #{_lambda_.4} parent=63 // pred_fallthru
          _
        // Predicated region
        $region73: #{_lambda_.4} parent=63 // pred_check
          %p1270 = pneg %p165
        $region74: #{_lambda_.4} parent=63 // pred_check_branch
          %1272 = sbr.rel (%p1270) target = $region76
        $region75: #{_lambda_.4} parent=63 // pred_region
          %p1273 = scmp.lt.s32.totalorder %s22, 1
          %s1274 = scalar_select %p1273, %s22, 1
          %s1275 = scalar_lea.vmem %s5, %s1274
        $region76: #{_lambda_.4} parent=63 // pred_fallthru
          _
        // Predicated region
        $region77: #{_lambda_.4} parent=63 // pred_check
          %p1276 = pneg %p191
        $region78: #{_lambda_.4} parent=63 // pred_check_branch
          %1278 = sbr.rel (%p1276) target = $region80
        $region79: #{_lambda_.4} parent=63 // pred_region
          %p1279 = scmp.lt.s32.totalorder %s22, 1
          %s1280 = scalar_select %p1279, %s22, 1
          %s1281 = smul.addr %s1280, 2
          %s1282 = smul.addr %s1281, 4
          %s1283 = scalar_lea.vmem %s6, %s1282
        $region80: #{_lambda_.4} parent=63 // pred_fallthru
          _
        // Predicated region
        $region81: #{_lambda_.4} parent=63 // pred_check
          %p1284 = pneg %p217
        $region82: #{_lambda_.4} parent=63 // pred_check_branch
          %1286 = sbr.rel (%p1284) target = $region84
        $region83: #{_lambda_.4} parent=63 // pred_region
          %p1287 = scmp.lt.s32.totalorder %s22, 1
          %s1288 = scalar_select %p1287, %s22, 1
          %s1289 = scalar_lea.vmem %s7, %s1288
        $region84: #{_lambda_.4} parent=63 // pred_fallthru
          _
        // Predicated region
        $region85: #{_lambda_.4} parent=63 // pred_check
          %p1290 = pneg %p243
        $region86: #{_lambda_.4} parent=63 // pred_check_branch
          %1292 = sbr.rel (%p1290) target = $region88
        $region87: #{_lambda_.4} parent=63 // pred_region
          %p1293 = scmp.lt.s32.totalorder %s22, 1
          %s1294 = scalar_select %p1293, %s22, 1
          %s1295 = scalar_lea.vmem %s8, %s1294
        $region88: #{_lambda_.4} parent=63 // pred_fallthru
          _
      $region64: #{_lambda_.4} parent=5 // pred_fallthru
        _
    $region6: #{_lambda_.4} parent=1 // loop_footer
      %s20 = sadd.s32 1, %s16
    $region7: #{_lambda_.4} parent=1 // loop_footer_branch
      %15 = sbr.rel target = $region3
    $region8: #{_lambda_.4} parent=1 // loop_exit
      _
    %1296 = vsyncpa [#allocation4], 1
    %s1297 = scalar_lea.sflag [#allocation4], 1
    %1298 = vsyncpa %s1297, 1

</llo_original>
